<compile_context>
chip_gen: v7x
topology: tpu7x:2x2x1
jax: 0.10.0
libtpu: 0.0.40
codegen_flags: <defaults>
</compile_context>

<pallas_src>
import jax
import jax.numpy as jnp
from jax import lax
from jax.experimental import pallas as pl
from jax.experimental.pallas import tpu as pltpu

MAX_BOARD_SIZE = 9.0
LANE_CHUNK = 512                      # lanes processed per inner-loop chunk
BATCH_TILE = 4 * LANE_CHUNK           # 2048 lanes per grid step (per review)


def _mlp_kernel(col_ref, val_ref, size_ref,
                w1_ref, b1_ref, w2_ref, b2_ref, w3_ref, b3_ref, w4_ref, b4_ref,
                out_ref):
    # Small resident parameters; load once per grid step.
    w1 = w1_ref[...]                               # (128, 3)  f32
    w1c, w1v, w1s = w1[:, 0:1], w1[:, 1:2], w1[:, 2:3]
    b1 = b1_ref[...]                               # (128, 1)  f32
    w2 = w2_ref[...]                               # (64, 128) bf16 (MXU operand)
    b2 = b2_ref[...]                               # (64, 1)   f32
    w3 = w3_ref[...]                               # (32, 64)  bf16 (MXU operand)
    b3 = b3_ref[...]                               # (32, 1)   f32
    w4 = w4_ref[...]                               # (32, 1)   f32
    b4 = b4_ref[...]                               # (1, 1)    f32

    n_chunks = out_ref.shape[0]                    # static: chunks per batch tile

    def chunk(c, carry):
        # (1, LANE_CHUNK) feature rows for this 512-lane chunk; cast in-kernel.
        col = col_ref[c].astype(jnp.float32)
        val = val_ref[c].astype(jnp.float32)
        size = size_ref[c].astype(jnp.float32)

        # One reciprocal instead of two divides.  board_size == 1 -> inf/NaN,
        # matching the PyTorch module's behaviour.
        inv = 1.0 / (size - 1.0)
        col_n = col * inv
        val_n = (val - 1.0) * inv
        size_n = size * (1.0 / MAX_BOARD_SIZE)

        # Linear(3 -> 128): VPU broadcast-FMA (K=3 would waste the MXU).
        # f32 accumulation, then a single bf16 cast after the ReLU so only the
        # bf16 copy stays live into the first matmul.
        h = w1c * col_n + w1v * val_n + w1s * size_n + b1          # (128, LC) f32
        h = jnp.maximum(h, 0.0).astype(jnp.bfloat16)

        # Linear(128 -> 64) / Linear(64 -> 32): bf16 MXU operands, f32 acc.
        h = jnp.dot(w2, h, preferred_element_type=jnp.float32) + b2   # (64, LC)
        h = jnp.maximum(h, 0.0).astype(jnp.bfloat16)
        h = jnp.dot(w3, h, preferred_element_type=jnp.float32) + b3   # (32, LC)
        h = jnp.maximum(h, 0.0)

        # Linear(32 -> 1): weighted 32-sublane reduction (no M=1 matmul), then
        # sigmoid = exp (EUP) + approximate reciprocal (EUP slot, nearly free).
        z = jnp.sum(h * w4, axis=0, keepdims=True) + b4               # (1, LC)
        out_ref[c] = pl.reciprocal(1.0 + jnp.exp(-z), approx=True)
        return carry

    # Unrolled loop over 512-lane chunks: bounds live ranges to one chunk while
    # still amortizing the per-grid-step overhead over the whole 2048-lane tile.
    lax.fori_loop(0, n_chunks, chunk, 0, unroll=True)


def init_params(key):
    """Deterministic init matching the nn.Linear layouts of the PyTorch module.

    Weights use PyTorch layout: w (out_features, in_features), b (out_features,).
    """
    ks = jax.random.split(key, 8)

    def lin(kw, kb, fan_in, fan_out):
        bound = 1.0 / jnp.sqrt(fan_in)
        w = jax.random.uniform(kw, (fan_out, fan_in), jnp.float32, -bound, bound)
        b = jax.random.uniform(kb, (fan_out,), jnp.float32, -bound, bound)
        return w, b

    w1, b1 = lin(ks[0], ks[1], 3, 128)
    w2, b2 = lin(ks[2], ks[3], 128, 64)
    w3, b3 = lin(ks[4], ks[5], 64, 32)
    w4, b4 = lin(ks[6], ks[7], 32, 1)
    return (w1, b1, w2, b2, w3, b3, w4, b4)


def col_constraint_forward(col, value, board, board_size, params,
                           *, batch_tile=BATCH_TILE):
    """col, value, board_size: (B,) int/float arrays. `board` is unused (as in PyTorch)."""
    del board  # not used by the PyTorch forward either

    w1, b1, w2, b2, w3, b3, w4, b4 = params
    B = col.shape[0]
    if B == 0:
        return jnp.zeros((0,), jnp.float32)

    assert batch_tile % LANE_CHUNK == 0
    chunks_per_tile = batch_tile // LANE_CHUNK
    n_tiles = pl.cdiv(B, batch_tile)          # for v7x balance, prefer even n_tiles at large B
    Bp = n_tiles * batch_tile
    n_chunks_total = Bp // LANE_CHUNK

    def prep(x):
        # (B,) -> zero-padded (n_chunks_total, 1, LANE_CHUNK).  No cast / no
        # feature packing on the host: the kernel casts and normalizes.
        # Zero padding in the tail lanes gives finite garbage that is sliced off.
        x = x.reshape(-1)
        if Bp != B:
            x = jnp.pad(x, (0, Bp - B))
        return x.reshape(n_chunks_total, 1, LANE_CHUNK)

    col_p, val_p, size_p = prep(col), prep(value), prep(board_size)

    # Parameters in the transposed-compute layout (batch on lanes).
    w1t = jnp.asarray(w1, jnp.float32)                    # (128, 3)  VPU FMA, f32
    b1t = jnp.asarray(b1, jnp.float32).reshape(128, 1)
    w2t = jnp.asarray(w2, jnp.bfloat16)                   # (64, 128) MXU operand
    b2t = jnp.asarray(b2, jnp.float32).reshape(64, 1)
    w3t = jnp.asarray(w3, jnp.bfloat16)                   # (32, 64)  MXU operand
    b3t = jnp.asarray(b3, jnp.float32).reshape(32, 1)
    w4t = jnp.asarray(w4, jnp.float32).reshape(32, 1)     # (32, 1)   VPU reduction
    b4t = jnp.asarray(b4, jnp.float32).reshape(1, 1)

    feat_spec = pl.BlockSpec((chunks_per_tile, 1, LANE_CHUNK), lambda i: (i, 0, 0))
    const = lambda i: (0, 0)   # resident weight/bias blocks (no re-DMA per step)

    out = pl.pallas_call(
        _mlp_kernel,
        out_shape=jax.ShapeDtypeStruct((n_chunks_total, 1, LANE_CHUNK), jnp.float32),
        grid=(n_tiles,),
        in_specs=[
            feat_spec,                           # col
            feat_spec,                           # value
            feat_spec,                           # board_size
            pl.BlockSpec((128, 3), const),       # w1
            pl.BlockSpec((128, 1), const),       # b1
            pl.BlockSpec((64, 128), const),      # w2 (bf16)
            pl.BlockSpec((64, 1), const),        # b2
            pl.BlockSpec((32, 64), const),       # w3 (bf16)
            pl.BlockSpec((32, 1), const),        # b3
            pl.BlockSpec((32, 1), const),        # w4
            pl.BlockSpec((1, 1), const),         # b4
        ],
        out_specs=feat_spec,
        # TODO(synk): on v7x, if the trace shows only one TensorCore busy, switch
        # this to pltpu.CORE_PARALLEL (or an explicit pl.core_map split) so the
        # batch-tile axis is sharded across both cores.
        compiler_params=pltpu.CompilerParams(
            dimension_semantics=("parallel",)),
    )(col_p, val_p, size_p, w1t, b1t, w2t, b2t, w3t, b3t, w4t, b4t)

    # Lane-dense padded slab -> (B,)  (matches torch .squeeze()).
    return out.reshape(Bp)[:B].squeeze()


def _reference_forward(col, value, board_size, params):
    """Pure-JAX f32 reference of the PyTorch forward."""
    w1, b1, w2, b2, w3, b3, w4, b4 = params
    bs = board_size.astype(jnp.float32)
    col_n = col.astype(jnp.float32) / (bs - 1.0)
    val_n = (value.astype(jnp.float32) - 1.0) / (bs - 1.0)
    size_n = bs / MAX_BOARD_SIZE
    feats = jnp.stack([col_n, val_n, size_n], axis=1)           # (B, 3)
    h = jnp.maximum(feats @ w1.T + b1, 0.0)
    h = jnp.maximum(h @ w2.T + b2, 0.0)
    h = jnp.maximum(h @ w3.T + b3, 0.0)
    return jax.nn.sigmoid(h @ w4.T + b4).squeeze()


if __name__ == "__main__":
    key = jax.random.PRNGKey(0)
    k_col, k_val, k_board, _ = jax.random.split(key, 4)

    B = 8
    board_n = 9  # classic sudoku board size
    col = jax.random.randint(k_col, (B,), 0, board_n, dtype=jnp.int32)
    value = jax.random.randint(k_val, (B,), 1, board_n + 1, dtype=jnp.int32)
    board = jax.random.randint(k_board, (B, board_n, board_n), 0, board_n + 1,
                               dtype=jnp.int32)  # unused by forward, kept for API parity
    board_size = jnp.full((B,), board_n, dtype=jnp.int32)

    params = init_params(jax.random.PRNGKey(42))

    out = col_constraint_forward(col, value, board, board_size, params)
    out = jax.block_until_ready(out)

    ref = _reference_forward(col, value, board_size, params)
    assert out.shape == (B,), out.shape
    # Loose-ish tolerance: kernel uses bf16 MXU operands (f32 accumulation) and
    # an EUP approximate reciprocal in the sigmoid.
    assert jnp.allclose(out, ref, atol=2e-2, rtol=0.0), (out, ref)

    print("KERNEL_OK")
</pallas_src>

<mosaic_0001>
module attributes {stable_mosaic.version = 11 : i64} {
  func.func @_mlp_kernel(%arg0: i32, %arg1: memref<4x1x512xi32, #tpu.memory_space<vmem>>, %arg2: memref<4x1x512xi32, #tpu.memory_space<vmem>>, %arg3: memref<4x1x512xi32, #tpu.memory_space<vmem>>, %arg4: memref<128x3xf32, #tpu.memory_space<vmem>>, %arg5: memref<128x1xf32, #tpu.memory_space<vmem>>, %arg6: memref<64x128xbf16, #tpu.memory_space<vmem>>, %arg7: memref<64x1xf32, #tpu.memory_space<vmem>>, %arg8: memref<32x64xbf16, #tpu.memory_space<vmem>>, %arg9: memref<32x1xf32, #tpu.memory_space<vmem>>, %arg10: memref<32x1xf32, #tpu.memory_space<vmem>>, %arg11: memref<1x1xf32, #tpu.memory_space<vmem>>, %arg12: memref<4x1x512xf32, #tpu.memory_space<vmem>>) attributes {dimension_semantics = [#tpu.dimension_semantics<parallel>], iteration_bounds = array<i64: 1>, scalar_prefetch = 0 : i64, scratch_operands = 0 : i64, tpu.core_type = #tpu.core_type<tc>, window_params = [{transform_indices = @transform_0, window_bounds = array<i64: 4, 1, 512>}, {transform_indices = @transform_1, window_bounds = array<i64: 4, 1, 512>}, {transform_indices = @transform_2, window_bounds = array<i64: 4, 1, 512>}, {pipeline_mode = #tpu.pipeline_mode<synchronous>, transform_indices = @transform_3, window_bounds = array<i64: 128, 3>}, {pipeline_mode = #tpu.pipeline_mode<synchronous>, transform_indices = @transform_4, window_bounds = array<i64: 128, 1>}, {pipeline_mode = #tpu.pipeline_mode<synchronous>, transform_indices = @transform_5, window_bounds = array<i64: 64, 128>}, {pipeline_mode = #tpu.pipeline_mode<synchronous>, transform_indices = @transform_6, window_bounds = array<i64: 64, 1>}, {pipeline_mode = #tpu.pipeline_mode<synchronous>, transform_indices = @transform_7, window_bounds = array<i64: 32, 64>}, {pipeline_mode = #tpu.pipeline_mode<synchronous>, transform_indices = @transform_8, window_bounds = array<i64: 32, 1>}, {pipeline_mode = #tpu.pipeline_mode<synchronous>, transform_indices = @transform_9, window_bounds = array<i64: 32, 1>}, {pipeline_mode = #tpu.pipeline_mode<synchronous>, transform_indices = @transform_10, window_bounds = array<i64: 1, 1>}, {transform_indices = @transform_11, window_bounds = array<i64: 4, 1, 512>}]} {
    %c0 = arith.constant 0 : index
    %c0_0 = arith.constant 0 : index
    %0 = vector.load %arg4[%c0, %c0_0] : memref<128x3xf32, #tpu.memory_space<vmem>>, vector<128x3xf32>
    %1 = vector.extract_strided_slice %0 {offsets = [0, 0], sizes = [128, 1], strides = [1, 1]} : vector<128x3xf32> to vector<128x1xf32>
    %2 = vector.extract_strided_slice %0 {offsets = [0, 1], sizes = [128, 1], strides = [1, 1]} : vector<128x3xf32> to vector<128x1xf32>
    %3 = vector.extract_strided_slice %0 {offsets = [0, 2], sizes = [128, 1], strides = [1, 1]} : vector<128x3xf32> to vector<128x1xf32>
    %c0_1 = arith.constant 0 : index
    %c0_2 = arith.constant 0 : index
    %4 = vector.load %arg5[%c0_1, %c0_2] : memref<128x1xf32, #tpu.memory_space<vmem>>, vector<128x1xf32>
    %c0_3 = arith.constant 0 : index
    %c0_4 = arith.constant 0 : index
    %5 = vector.load %arg6[%c0_3, %c0_4] : memref<64x128xbf16, #tpu.memory_space<vmem>>, vector<64x128xbf16>
    %c0_5 = arith.constant 0 : index
    %c0_6 = arith.constant 0 : index
    %6 = vector.load %arg7[%c0_5, %c0_6] : memref<64x1xf32, #tpu.memory_space<vmem>>, vector<64x1xf32>
    %c0_7 = arith.constant 0 : index
    %c0_8 = arith.constant 0 : index
    %7 = vector.load %arg8[%c0_7, %c0_8] : memref<32x64xbf16, #tpu.memory_space<vmem>>, vector<32x64xbf16>
    %c0_9 = arith.constant 0 : index
    %c0_10 = arith.constant 0 : index
    %8 = vector.load %arg9[%c0_9, %c0_10] : memref<32x1xf32, #tpu.memory_space<vmem>>, vector<32x1xf32>
    %c0_11 = arith.constant 0 : index
    %c0_12 = arith.constant 0 : index
    %9 = vector.load %arg10[%c0_11, %c0_12] : memref<32x1xf32, #tpu.memory_space<vmem>>, vector<32x1xf32>
    %c0_13 = arith.constant 0 : index
    %c0_14 = arith.constant 0 : index
    %10 = vector.load %arg11[%c0_13, %c0_14] : memref<1x1xf32, #tpu.memory_space<vmem>>, vector<1x1xf32>
    %c0_i32 = arith.constant 0 : i32
    %11 = arith.index_cast %c0_i32 : i32 to index
    %c0_15 = arith.constant 0 : index
    %c0_16 = arith.constant 0 : index
    %12 = vector.load %arg1[%11, %c0_15, %c0_16] : memref<4x1x512xi32, #tpu.memory_space<vmem>>, vector<1x1x512xi32>
    %13 = vector.shape_cast %12 : vector<1x1x512xi32> to vector<1x512xi32>
    %14 = arith.sitofp %13 : vector<1x512xi32> to vector<1x512xf32>
    %15 = arith.index_cast %c0_i32 : i32 to index
    %c0_17 = arith.constant 0 : index
    %c0_18 = arith.constant 0 : index
    %16 = vector.load %arg2[%15, %c0_17, %c0_18] : memref<4x1x512xi32, #tpu.memory_space<vmem>>, vector<1x1x512xi32>
    %17 = vector.shape_cast %16 : vector<1x1x512xi32> to vector<1x512xi32>
    %18 = arith.sitofp %17 : vector<1x512xi32> to vector<1x512xf32>
    %19 = arith.index_cast %c0_i32 : i32 to index
    %c0_19 = arith.constant 0 : index
    %c0_20 = arith.constant 0 : index
    %20 = vector.load %arg3[%19, %c0_19, %c0_20] : memref<4x1x512xi32, #tpu.memory_space<vmem>>, vector<1x1x512xi32>
    %21 = vector.shape_cast %20 : vector<1x1x512xi32> to vector<1x512xi32>
    %22 = arith.sitofp %21 : vector<1x512xi32> to vector<1x512xf32>
    %cst = arith.constant 1.000000e+00 : f32
    %23 = vector.broadcast %cst : f32 to vector<1x512xf32>
    %24 = arith.subf %22, %23 : vector<1x512xf32>
    %cst_21 = arith.constant 1.000000e+00 : f32
    %25 = vector.broadcast %cst_21 : f32 to vector<1x512xf32>
    %26 = arith.divf %25, %24 : vector<1x512xf32>
    %27 = arith.mulf %14, %26 : vector<1x512xf32>
    %cst_22 = arith.constant 1.000000e+00 : f32
    %28 = vector.broadcast %cst_22 : f32 to vector<1x512xf32>
    %29 = arith.subf %18, %28 : vector<1x512xf32>
    %30 = arith.mulf %29, %26 : vector<1x512xf32>
    %cst_23 = arith.constant 0.111111112 : f32
    %31 = vector.broadcast %cst_23 : f32 to vector<1x512xf32>
    %32 = arith.mulf %22, %31 : vector<1x512xf32>
    %33 = vector.broadcast %1 : vector<128x1xf32> to vector<128x512xf32>
    %34 = vector.broadcast %27 : vector<1x512xf32> to vector<128x512xf32>
    %35 = arith.mulf %33, %34 : vector<128x512xf32>
    %36 = vector.broadcast %2 : vector<128x1xf32> to vector<128x512xf32>
    %37 = vector.broadcast %30 : vector<1x512xf32> to vector<128x512xf32>
    %38 = arith.mulf %36, %37 : vector<128x512xf32>
    %39 = arith.addf %35, %38 : vector<128x512xf32>
    %40 = vector.broadcast %3 : vector<128x1xf32> to vector<128x512xf32>
    %41 = vector.broadcast %32 : vector<1x512xf32> to vector<128x512xf32>
    %42 = arith.mulf %40, %41 : vector<128x512xf32>
    %43 = arith.addf %39, %42 : vector<128x512xf32>
    %44 = vector.broadcast %4 : vector<128x1xf32> to vector<128x512xf32>
    %45 = arith.addf %43, %44 : vector<128x512xf32>
    %cst_24 = arith.constant 0.000000e+00 : f32
    %46 = vector.broadcast %cst_24 : f32 to vector<128x512xf32>
    %47 = arith.maximumf %45, %46 : vector<128x512xf32>
    %48 = arith.truncf %47 : vector<128x512xf32> to vector<128x512xbf16>
    %cst_25 = arith.constant dense<0.000000e+00> : vector<64x512xf32>
    %49 = tpu.matmul %5, %48, %cst_25 {dimension_numbers = #tpu.dot_dimension_numbers<[1], [0], [0], [1], [0, 0, 1, 1], [], []>} : vector<64x128xbf16>, vector<128x512xbf16>, vector<64x512xf32> -> vector<64x512xf32>
    %50 = vector.broadcast %6 : vector<64x1xf32> to vector<64x512xf32>
    %51 = arith.addf %49, %50 : vector<64x512xf32>
    %cst_26 = arith.constant 0.000000e+00 : f32
    %52 = vector.broadcast %cst_26 : f32 to vector<64x512xf32>
    %53 = arith.maximumf %51, %52 : vector<64x512xf32>
    %54 = arith.truncf %53 : vector<64x512xf32> to vector<64x512xbf16>
    %cst_27 = arith.constant dense<0.000000e+00> : vector<32x512xf32>
    %55 = tpu.matmul %7, %54, %cst_27 {dimension_numbers = #tpu.dot_dimension_numbers<[1], [0], [0], [1], [0, 0, 1, 1], [], []>} : vector<32x64xbf16>, vector<64x512xbf16>, vector<32x512xf32> -> vector<32x512xf32>
    %56 = vector.broadcast %8 : vector<32x1xf32> to vector<32x512xf32>
    %57 = arith.addf %55, %56 : vector<32x512xf32>
    %cst_28 = arith.constant 0.000000e+00 : f32
    %58 = vector.broadcast %cst_28 : f32 to vector<32x512xf32>
    %59 = arith.maximumf %57, %58 : vector<32x512xf32>
    %60 = vector.broadcast %9 : vector<32x1xf32> to vector<32x512xf32>
    %61 = arith.mulf %59, %60 : vector<32x512xf32>
    %cst_29 = arith.constant dense<0.000000e+00> : vector<512xf32>
    %62 = vector.multi_reduction <add>, %61, %cst_29 [0] : vector<32x512xf32> to vector<512xf32>
    %63 = vector.shape_cast %62 : vector<512xf32> to vector<1x512xf32>
    %64 = vector.broadcast %10 : vector<1x1xf32> to vector<1x512xf32>
    %65 = arith.addf %63, %64 : vector<1x512xf32>
    %cst_30 = arith.constant 0.000000e+00 : f32
    %66 = vector.broadcast %cst_30 : f32 to vector<1x512xf32>
    %67 = arith.subf %66, %65 : vector<1x512xf32>
    %68 = math.exp %67 : vector<1x512xf32>
    %cst_31 = arith.constant 1.000000e+00 : f32
    %69 = vector.broadcast %cst_31 : f32 to vector<1x512xf32>
    %70 = arith.addf %69, %68 : vector<1x512xf32>
    %71 = tpu.reciprocal %70 {approx = true} : vector<1x512xf32> -> vector<1x512xf32>
    %72 = arith.index_cast %c0_i32 : i32 to index
    %c0_32 = arith.constant 0 : index
    %c0_33 = arith.constant 0 : index
    %73 = vector.load %arg12[%72, %c0_32, %c0_33] : memref<4x1x512xf32, #tpu.memory_space<vmem>>, vector<1x1x512xf32>
    %74 = vector.shape_cast %73 : vector<1x1x512xf32> to vector<1x512xf32>
    %75 = vector.shape_cast %71 : vector<1x512xf32> to vector<1x1x512xf32>
    tpu.vector_store %arg12[%72, %c0_32, %c0_33], %75 {strides = array<i32>} : memref<4x1x512xf32, #tpu.memory_space<vmem>>, vector<1x1x512xf32>,
    %c1_i32 = arith.constant 1 : i32
    %76 = arith.index_cast %c1_i32 : i32 to index
    %c0_34 = arith.constant 0 : index
    %c0_35 = arith.constant 0 : index
    %77 = vector.load %arg1[%76, %c0_34, %c0_35] : memref<4x1x512xi32, #tpu.memory_space<vmem>>, vector<1x1x512xi32>
    %78 = vector.shape_cast %77 : vector<1x1x512xi32> to vector<1x512xi32>
    %79 = arith.sitofp %78 : vector<1x512xi32> to vector<1x512xf32>
    %80 = arith.index_cast %c1_i32 : i32 to index
    %c0_36 = arith.constant 0 : index
    %c0_37 = arith.constant 0 : index
    %81 = vector.load %arg2[%80, %c0_36, %c0_37] : memref<4x1x512xi32, #tpu.memory_space<vmem>>, vector<1x1x512xi32>
    %82 = vector.shape_cast %81 : vector<1x1x512xi32> to vector<1x512xi32>
    %83 = arith.sitofp %82 : vector<1x512xi32> to vector<1x512xf32>
    %84 = arith.index_cast %c1_i32 : i32 to index
    %c0_38 = arith.constant 0 : index
    %c0_39 = arith.constant 0 : index
    %85 = vector.load %arg3[%84, %c0_38, %c0_39] : memref<4x1x512xi32, #tpu.memory_space<vmem>>, vector<1x1x512xi32>
    %86 = vector.shape_cast %85 : vector<1x1x512xi32> to vector<1x512xi32>
    %87 = arith.sitofp %86 : vector<1x512xi32> to vector<1x512xf32>
    %cst_40 = arith.constant 1.000000e+00 : f32
    %88 = vector.broadcast %cst_40 : f32 to vector<1x512xf32>
    %89 = arith.subf %87, %88 : vector<1x512xf32>
    %cst_41 = arith.constant 1.000000e+00 : f32
    %90 = vector.broadcast %cst_41 : f32 to vector<1x512xf32>
    %91 = arith.divf %90, %89 : vector<1x512xf32>
    %92 = arith.mulf %79, %91 : vector<1x512xf32>
    %cst_42 = arith.constant 1.000000e+00 : f32
    %93 = vector.broadcast %cst_42 : f32 to vector<1x512xf32>
    %94 = arith.subf %83, %93 : vector<1x512xf32>
    %95 = arith.mulf %94, %91 : vector<1x512xf32>
    %cst_43 = arith.constant 0.111111112 : f32
    %96 = vector.broadcast %cst_43 : f32 to vector<1x512xf32>
    %97 = arith.mulf %87, %96 : vector<1x512xf32>
    %98 = vector.broadcast %1 : vector<128x1xf32> to vector<128x512xf32>
    %99 = vector.broadcast %92 : vector<1x512xf32> to vector<128x512xf32>
    %100 = arith.mulf %98, %99 : vector<128x512xf32>
    %101 = vector.broadcast %2 : vector<128x1xf32> to vector<128x512xf32>
    %102 = vector.broadcast %95 : vector<1x512xf32> to vector<128x512xf32>
    %103 = arith.mulf %101, %102 : vector<128x512xf32>
    %104 = arith.addf %100, %103 : vector<128x512xf32>
    %105 = vector.broadcast %3 : vector<128x1xf32> to vector<128x512xf32>
    %106 = vector.broadcast %97 : vector<1x512xf32> to vector<128x512xf32>
    %107 = arith.mulf %105, %106 : vector<128x512xf32>
    %108 = arith.addf %104, %107 : vector<128x512xf32>
    %109 = vector.broadcast %4 : vector<128x1xf32> to vector<128x512xf32>
    %110 = arith.addf %108, %109 : vector<128x512xf32>
    %cst_44 = arith.constant 0.000000e+00 : f32
    %111 = vector.broadcast %cst_44 : f32 to vector<128x512xf32>
    %112 = arith.maximumf %110, %111 : vector<128x512xf32>
    %113 = arith.truncf %112 : vector<128x512xf32> to vector<128x512xbf16>
    %cst_45 = arith.constant dense<0.000000e+00> : vector<64x512xf32>
    %114 = tpu.matmul %5, %113, %cst_45 {dimension_numbers = #tpu.dot_dimension_numbers<[1], [0], [0], [1], [0, 0, 1, 1], [], []>} : vector<64x128xbf16>, vector<128x512xbf16>, vector<64x512xf32> -> vector<64x512xf32>
    %115 = vector.broadcast %6 : vector<64x1xf32> to vector<64x512xf32>
    %116 = arith.addf %114, %115 : vector<64x512xf32>
    %cst_46 = arith.constant 0.000000e+00 : f32
    %117 = vector.broadcast %cst_46 : f32 to vector<64x512xf32>
    %118 = arith.maximumf %116, %117 : vector<64x512xf32>
    %119 = arith.truncf %118 : vector<64x512xf32> to vector<64x512xbf16>
    %cst_47 = arith.constant dense<0.000000e+00> : vector<32x512xf32>
    %120 = tpu.matmul %7, %119, %cst_47 {dimension_numbers = #tpu.dot_dimension_numbers<[1], [0], [0], [1], [0, 0, 1, 1], [], []>} : vector<32x64xbf16>, vector<64x512xbf16>, vector<32x512xf32> -> vector<32x512xf32>
    %121 = vector.broadcast %8 : vector<32x1xf32> to vector<32x512xf32>
    %122 = arith.addf %120, %121 : vector<32x512xf32>
    %cst_48 = arith.constant 0.000000e+00 : f32
    %123 = vector.broadcast %cst_48 : f32 to vector<32x512xf32>
    %124 = arith.maximumf %122, %123 : vector<32x512xf32>
    %125 = vector.broadcast %9 : vector<32x1xf32> to vector<32x512xf32>
    %126 = arith.mulf %124, %125 : vector<32x512xf32>
    %cst_49 = arith.constant dense<0.000000e+00> : vector<512xf32>
    %127 = vector.multi_reduction <add>, %126, %cst_49 [0] : vector<32x512xf32> to vector<512xf32>
    %128 = vector.shape_cast %127 : vector<512xf32> to vector<1x512xf32>
    %129 = vector.broadcast %10 : vector<1x1xf32> to vector<1x512xf32>
    %130 = arith.addf %128, %129 : vector<1x512xf32>
    %cst_50 = arith.constant 0.000000e+00 : f32
    %131 = vector.broadcast %cst_50 : f32 to vector<1x512xf32>
    %132 = arith.subf %131, %130 : vector<1x512xf32>
    %133 = math.exp %132 : vector<1x512xf32>
    %cst_51 = arith.constant 1.000000e+00 : f32
    %134 = vector.broadcast %cst_51 : f32 to vector<1x512xf32>
    %135 = arith.addf %134, %133 : vector<1x512xf32>
    %136 = tpu.reciprocal %135 {approx = true} : vector<1x512xf32> -> vector<1x512xf32>
    %137 = arith.index_cast %c1_i32 : i32 to index
    %c0_52 = arith.constant 0 : index
    %c0_53 = arith.constant 0 : index
    %138 = vector.load %arg12[%137, %c0_52, %c0_53] : memref<4x1x512xf32, #tpu.memory_space<vmem>>, vector<1x1x512xf32>
    %139 = vector.shape_cast %138 : vector<1x1x512xf32> to vector<1x512xf32>
    %140 = vector.shape_cast %136 : vector<1x512xf32> to vector<1x1x512xf32>
    tpu.vector_store %arg12[%137, %c0_52, %c0_53], %140 {strides = array<i32>} : memref<4x1x512xf32, #tpu.memory_space<vmem>>, vector<1x1x512xf32>,
    %c2_i32 = arith.constant 2 : i32
    %141 = arith.index_cast %c2_i32 : i32 to index
    %c0_54 = arith.constant 0 : index
    %c0_55 = arith.constant 0 : index
    %142 = vector.load %arg1[%141, %c0_54, %c0_55] : memref<4x1x512xi32, #tpu.memory_space<vmem>>, vector<1x1x512xi32>
    %143 = vector.shape_cast %142 : vector<1x1x512xi32> to vector<1x512xi32>
    %144 = arith.sitofp %143 : vector<1x512xi32> to vector<1x512xf32>
    %145 = arith.index_cast %c2_i32 : i32 to index
    %c0_56 = arith.constant 0 : index
    %c0_57 = arith.constant 0 : index
    %146 = vector.load %arg2[%145, %c0_56, %c0_57] : memref<4x1x512xi32, #tpu.memory_space<vmem>>, vector<1x1x512xi32>
    %147 = vector.shape_cast %146 : vector<1x1x512xi32> to vector<1x512xi32>
    %148 = arith.sitofp %147 : vector<1x512xi32> to vector<1x512xf32>
    %149 = arith.index_cast %c2_i32 : i32 to index
    %c0_58 = arith.constant 0 : index
    %c0_59 = arith.constant 0 : index
    %150 = vector.load %arg3[%149, %c0_58, %c0_59] : memref<4x1x512xi32, #tpu.memory_space<vmem>>, vector<1x1x512xi32>
    %151 = vector.shape_cast %150 : vector<1x1x512xi32> to vector<1x512xi32>
    %152 = arith.sitofp %151 : vector<1x512xi32> to vector<1x512xf32>
    %cst_60 = arith.constant 1.000000e+00 : f32
    %153 = vector.broadcast %cst_60 : f32 to vector<1x512xf32>
    %154 = arith.subf %152, %153 : vector<1x512xf32>
    %cst_61 = arith.constant 1.000000e+00 : f32
    %155 = vector.broadcast %cst_61 : f32 to vector<1x512xf32>
    %156 = arith.divf %155, %154 : vector<1x512xf32>
    %157 = arith.mulf %144, %156 : vector<1x512xf32>
    %cst_62 = arith.constant 1.000000e+00 : f32
    %158 = vector.broadcast %cst_62 : f32 to vector<1x512xf32>
    %159 = arith.subf %148, %158 : vector<1x512xf32>
    %160 = arith.mulf %159, %156 : vector<1x512xf32>
    %cst_63 = arith.constant 0.111111112 : f32
    %161 = vector.broadcast %cst_63 : f32 to vector<1x512xf32>
    %162 = arith.mulf %152, %161 : vector<1x512xf32>
    %163 = vector.broadcast %1 : vector<128x1xf32> to vector<128x512xf32>
    %164 = vector.broadcast %157 : vector<1x512xf32> to vector<128x512xf32>
    %165 = arith.mulf %163, %164 : vector<128x512xf32>
    %166 = vector.broadcast %2 : vector<128x1xf32> to vector<128x512xf32>
    %167 = vector.broadcast %160 : vector<1x512xf32> to vector<128x512xf32>
    %168 = arith.mulf %166, %167 : vector<128x512xf32>
    %169 = arith.addf %165, %168 : vector<128x512xf32>
    %170 = vector.broadcast %3 : vector<128x1xf32> to vector<128x512xf32>
    %171 = vector.broadcast %162 : vector<1x512xf32> to vector<128x512xf32>
    %172 = arith.mulf %170, %171 : vector<128x512xf32>
    %173 = arith.addf %169, %172 : vector<128x512xf32>
    %174 = vector.broadcast %4 : vector<128x1xf32> to vector<128x512xf32>
    %175 = arith.addf %173, %174 : vector<128x512xf32>
    %cst_64 = arith.constant 0.000000e+00 : f32
    %176 = vector.broadcast %cst_64 : f32 to vector<128x512xf32>
    %177 = arith.maximumf %175, %176 : vector<128x512xf32>
    %178 = arith.truncf %177 : vector<128x512xf32> to vector<128x512xbf16>
    %cst_65 = arith.constant dense<0.000000e+00> : vector<64x512xf32>
    %179 = tpu.matmul %5, %178, %cst_65 {dimension_numbers = #tpu.dot_dimension_numbers<[1], [0], [0], [1], [0, 0, 1, 1], [], []>} : vector<64x128xbf16>, vector<128x512xbf16>, vector<64x512xf32> -> vector<64x512xf32>
    %180 = vector.broadcast %6 : vector<64x1xf32> to vector<64x512xf32>
    %181 = arith.addf %179, %180 : vector<64x512xf32>
    %cst_66 = arith.constant 0.000000e+00 : f32
    %182 = vector.broadcast %cst_66 : f32 to vector<64x512xf32>
    %183 = arith.maximumf %181, %182 : vector<64x512xf32>
    %184 = arith.truncf %183 : vector<64x512xf32> to vector<64x512xbf16>
    %cst_67 = arith.constant dense<0.000000e+00> : vector<32x512xf32>
    %185 = tpu.matmul %7, %184, %cst_67 {dimension_numbers = #tpu.dot_dimension_numbers<[1], [0], [0], [1], [0, 0, 1, 1], [], []>} : vector<32x64xbf16>, vector<64x512xbf16>, vector<32x512xf32> -> vector<32x512xf32>
    %186 = vector.broadcast %8 : vector<32x1xf32> to vector<32x512xf32>
    %187 = arith.addf %185, %186 : vector<32x512xf32>
    %cst_68 = arith.constant 0.000000e+00 : f32
    %188 = vector.broadcast %cst_68 : f32 to vector<32x512xf32>
    %189 = arith.maximumf %187, %188 : vector<32x512xf32>
    %190 = vector.broadcast %9 : vector<32x1xf32> to vector<32x512xf32>
    %191 = arith.mulf %189, %190 : vector<32x512xf32>
    %cst_69 = arith.constant dense<0.000000e+00> : vector<512xf32>
    %192 = vector.multi_reduction <add>, %191, %cst_69 [0] : vector<32x512xf32> to vector<512xf32>
    %193 = vector.shape_cast %192 : vector<512xf32> to vector<1x512xf32>
    %194 = vector.broadcast %10 : vector<1x1xf32> to vector<1x512xf32>
    %195 = arith.addf %193, %194 : vector<1x512xf32>
    %cst_70 = arith.constant 0.000000e+00 : f32
    %196 = vector.broadcast %cst_70 : f32 to vector<1x512xf32>
    %197 = arith.subf %196, %195 : vector<1x512xf32>
    %198 = math.exp %197 : vector<1x512xf32>
    %cst_71 = arith.constant 1.000000e+00 : f32
    %199 = vector.broadcast %cst_71 : f32 to vector<1x512xf32>
    %200 = arith.addf %199, %198 : vector<1x512xf32>
    %201 = tpu.reciprocal %200 {approx = true} : vector<1x512xf32> -> vector<1x512xf32>
    %202 = arith.index_cast %c2_i32 : i32 to index
    %c0_72 = arith.constant 0 : index
    %c0_73 = arith.constant 0 : index
    %203 = vector.load %arg12[%202, %c0_72, %c0_73] : memref<4x1x512xf32, #tpu.memory_space<vmem>>, vector<1x1x512xf32>
    %204 = vector.shape_cast %203 : vector<1x1x512xf32> to vector<1x512xf32>
    %205 = vector.shape_cast %201 : vector<1x512xf32> to vector<1x1x512xf32>
    tpu.vector_store %arg12[%202, %c0_72, %c0_73], %205 {strides = array<i32>} : memref<4x1x512xf32, #tpu.memory_space<vmem>>, vector<1x1x512xf32>,
    %c3_i32 = arith.constant 3 : i32
    %206 = arith.index_cast %c3_i32 : i32 to index
    %c0_74 = arith.constant 0 : index
    %c0_75 = arith.constant 0 : index
    %207 = vector.load %arg1[%206, %c0_74, %c0_75] : memref<4x1x512xi32, #tpu.memory_space<vmem>>, vector<1x1x512xi32>
    %208 = vector.shape_cast %207 : vector<1x1x512xi32> to vector<1x512xi32>
    %209 = arith.sitofp %208 : vector<1x512xi32> to vector<1x512xf32>
    %210 = arith.index_cast %c3_i32 : i32 to index
    %c0_76 = arith.constant 0 : index
    %c0_77 = arith.constant 0 : index
    %211 = vector.load %arg2[%210, %c0_76, %c0_77] : memref<4x1x512xi32, #tpu.memory_space<vmem>>, vector<1x1x512xi32>
    %212 = vector.shape_cast %211 : vector<1x1x512xi32> to vector<1x512xi32>
    %213 = arith.sitofp %212 : vector<1x512xi32> to vector<1x512xf32>
    %214 = arith.index_cast %c3_i32 : i32 to index
    %c0_78 = arith.constant 0 : index
    %c0_79 = arith.constant 0 : index
    %215 = vector.load %arg3[%214, %c0_78, %c0_79] : memref<4x1x512xi32, #tpu.memory_space<vmem>>, vector<1x1x512xi32>
    %216 = vector.shape_cast %215 : vector<1x1x512xi32> to vector<1x512xi32>
    %217 = arith.sitofp %216 : vector<1x512xi32> to vector<1x512xf32>
    %cst_80 = arith.constant 1.000000e+00 : f32
    %218 = vector.broadcast %cst_80 : f32 to vector<1x512xf32>
    %219 = arith.subf %217, %218 : vector<1x512xf32>
    %cst_81 = arith.constant 1.000000e+00 : f32
    %220 = vector.broadcast %cst_81 : f32 to vector<1x512xf32>
    %221 = arith.divf %220, %219 : vector<1x512xf32>
    %222 = arith.mulf %209, %221 : vector<1x512xf32>
    %cst_82 = arith.constant 1.000000e+00 : f32
    %223 = vector.broadcast %cst_82 : f32 to vector<1x512xf32>
    %224 = arith.subf %213, %223 : vector<1x512xf32>
    %225 = arith.mulf %224, %221 : vector<1x512xf32>
    %cst_83 = arith.constant 0.111111112 : f32
    %226 = vector.broadcast %cst_83 : f32 to vector<1x512xf32>
    %227 = arith.mulf %217, %226 : vector<1x512xf32>
    %228 = vector.broadcast %1 : vector<128x1xf32> to vector<128x512xf32>
    %229 = vector.broadcast %222 : vector<1x512xf32> to vector<128x512xf32>
    %230 = arith.mulf %228, %229 : vector<128x512xf32>
    %231 = vector.broadcast %2 : vector<128x1xf32> to vector<128x512xf32>
    %232 = vector.broadcast %225 : vector<1x512xf32> to vector<128x512xf32>
    %233 = arith.mulf %231, %232 : vector<128x512xf32>
    %234 = arith.addf %230, %233 : vector<128x512xf32>
    %235 = vector.broadcast %3 : vector<128x1xf32> to vector<128x512xf32>
    %236 = vector.broadcast %227 : vector<1x512xf32> to vector<128x512xf32>
    %237 = arith.mulf %235, %236 : vector<128x512xf32>
    %238 = arith.addf %234, %237 : vector<128x512xf32>
    %239 = vector.broadcast %4 : vector<128x1xf32> to vector<128x512xf32>
    %240 = arith.addf %238, %239 : vector<128x512xf32>
    %cst_84 = arith.constant 0.000000e+00 : f32
    %241 = vector.broadcast %cst_84 : f32 to vector<128x512xf32>
    %242 = arith.maximumf %240, %241 : vector<128x512xf32>
    %243 = arith.truncf %242 : vector<128x512xf32> to vector<128x512xbf16>
    %cst_85 = arith.constant dense<0.000000e+00> : vector<64x512xf32>
    %244 = tpu.matmul %5, %243, %cst_85 {dimension_numbers = #tpu.dot_dimension_numbers<[1], [0], [0], [1], [0, 0, 1, 1], [], []>} : vector<64x128xbf16>, vector<128x512xbf16>, vector<64x512xf32> -> vector<64x512xf32>
    %245 = vector.broadcast %6 : vector<64x1xf32> to vector<64x512xf32>
    %246 = arith.addf %244, %245 : vector<64x512xf32>
    %cst_86 = arith.constant 0.000000e+00 : f32
    %247 = vector.broadcast %cst_86 : f32 to vector<64x512xf32>
    %248 = arith.maximumf %246, %247 : vector<64x512xf32>
    %249 = arith.truncf %248 : vector<64x512xf32> to vector<64x512xbf16>
    %cst_87 = arith.constant dense<0.000000e+00> : vector<32x512xf32>
    %250 = tpu.matmul %7, %249, %cst_87 {dimension_numbers = #tpu.dot_dimension_numbers<[1], [0], [0], [1], [0, 0, 1, 1], [], []>} : vector<32x64xbf16>, vector<64x512xbf16>, vector<32x512xf32> -> vector<32x512xf32>
    %251 = vector.broadcast %8 : vector<32x1xf32> to vector<32x512xf32>
    %252 = arith.addf %250, %251 : vector<32x512xf32>
    %cst_88 = arith.constant 0.000000e+00 : f32
    %253 = vector.broadcast %cst_88 : f32 to vector<32x512xf32>
    %254 = arith.maximumf %252, %253 : vector<32x512xf32>
    %255 = vector.broadcast %9 : vector<32x1xf32> to vector<32x512xf32>
    %256 = arith.mulf %254, %255 : vector<32x512xf32>
    %cst_89 = arith.constant dense<0.000000e+00> : vector<512xf32>
    %257 = vector.multi_reduction <add>, %256, %cst_89 [0] : vector<32x512xf32> to vector<512xf32>
    %258 = vector.shape_cast %257 : vector<512xf32> to vector<1x512xf32>
    %259 = vector.broadcast %10 : vector<1x1xf32> to vector<1x512xf32>
    %260 = arith.addf %258, %259 : vector<1x512xf32>
    %cst_90 = arith.constant 0.000000e+00 : f32
    %261 = vector.broadcast %cst_90 : f32 to vector<1x512xf32>
    %262 = arith.subf %261, %260 : vector<1x512xf32>
    %263 = math.exp %262 : vector<1x512xf32>
    %cst_91 = arith.constant 1.000000e+00 : f32
    %264 = vector.broadcast %cst_91 : f32 to vector<1x512xf32>
    %265 = arith.addf %264, %263 : vector<1x512xf32>
    %266 = tpu.reciprocal %265 {approx = true} : vector<1x512xf32> -> vector<1x512xf32>
    %267 = arith.index_cast %c3_i32 : i32 to index
    %c0_92 = arith.constant 0 : index
    %c0_93 = arith.constant 0 : index
    %268 = vector.load %arg12[%267, %c0_92, %c0_93] : memref<4x1x512xf32, #tpu.memory_space<vmem>>, vector<1x1x512xf32>
    %269 = vector.shape_cast %268 : vector<1x1x512xf32> to vector<1x512xf32>
    %270 = vector.shape_cast %266 : vector<1x512xf32> to vector<1x1x512xf32>
    tpu.vector_store %arg12[%267, %c0_92, %c0_93], %270 {strides = array<i32>} : memref<4x1x512xf32, #tpu.memory_space<vmem>>, vector<1x1x512xf32>,
    %c4_i32 = arith.constant 4 : i32
    return
  }
  func.func @transform_0(%arg0: i32) -> (i32, i32, i32) {
    %c0_i32 = arith.constant 0 : i32
    %c0_i32_0 = arith.constant 0 : i32
    %c0_i32_1 = arith.constant 0 : i32
    return %arg0, %c0_i32, %c0_i32_0 : i32, i32, i32
  }
  func.func @transform_1(%arg0: i32) -> (i32, i32, i32) {
    %c0_i32 = arith.constant 0 : i32
    %c0_i32_0 = arith.constant 0 : i32
    %c0_i32_1 = arith.constant 0 : i32
    return %arg0, %c0_i32, %c0_i32_0 : i32, i32, i32
  }
  func.func @transform_2(%arg0: i32) -> (i32, i32, i32) {
    %c0_i32 = arith.constant 0 : i32
    %c0_i32_0 = arith.constant 0 : i32
    %c0_i32_1 = arith.constant 0 : i32
    return %arg0, %c0_i32, %c0_i32_0 : i32, i32, i32
  }
  func.func @transform_3(%arg0: i32) -> (i32, i32) {
    %c0_i32 = arith.constant 0 : i32
    %c0_i32_0 = arith.constant 0 : i32
    %c0_i32_1 = arith.constant 0 : i32
    return %c0_i32, %c0_i32_0 : i32, i32
  }
  func.func @transform_4(%arg0: i32) -> (i32, i32) {
    %c0_i32 = arith.constant 0 : i32
    %c0_i32_0 = arith.constant 0 : i32
    %c0_i32_1 = arith.constant 0 : i32
    return %c0_i32, %c0_i32_0 : i32, i32
  }
  func.func @transform_5(%arg0: i32) -> (i32, i32) {
    %c0_i32 = arith.constant 0 : i32
    %c0_i32_0 = arith.constant 0 : i32
    %c0_i32_1 = arith.constant 0 : i32
    return %c0_i32, %c0_i32_0 : i32, i32
  }
  func.func @transform_6(%arg0: i32) -> (i32, i32) {
    %c0_i32 = arith.constant 0 : i32
    %c0_i32_0 = arith.constant 0 : i32
    %c0_i32_1 = arith.constant 0 : i32
    return %c0_i32, %c0_i32_0 : i32, i32
  }
  func.func @transform_7(%arg0: i32) -> (i32, i32) {
    %c0_i32 = arith.constant 0 : i32
    %c0_i32_0 = arith.constant 0 : i32
    %c0_i32_1 = arith.constant 0 : i32
    return %c0_i32, %c0_i32_0 : i32, i32
  }
  func.func @transform_8(%arg0: i32) -> (i32, i32) {
    %c0_i32 = arith.constant 0 : i32
    %c0_i32_0 = arith.constant 0 : i32
    %c0_i32_1 = arith.constant 0 : i32
    return %c0_i32, %c0_i32_0 : i32, i32
  }
  func.func @transform_9(%arg0: i32) -> (i32, i32) {
    %c0_i32 = arith.constant 0 : i32
    %c0_i32_0 = arith.constant 0 : i32
    %c0_i32_1 = arith.constant 0 : i32
    return %c0_i32, %c0_i32_0 : i32, i32
  }
  func.func @transform_10(%arg0: i32) -> (i32, i32) {
    %c0_i32 = arith.constant 0 : i32
    %c0_i32_0 = arith.constant 0 : i32
    %c0_i32_1 = arith.constant 0 : i32
    return %c0_i32, %c0_i32_0 : i32, i32
  }
  func.func @transform_11(%arg0: i32) -> (i32, i32, i32) {
    %c0_i32 = arith.constant 0 : i32
    %c0_i32_0 = arith.constant 0 : i32
    %c0_i32_1 = arith.constant 0 : i32
    return %arg0, %c0_i32, %c0_i32_0 : i32, i32, i32
  }
}

</mosaic_0001>

<llo_original>
// kernel: tpu_custom_call.1
$region0: #{tpu_custom_call.1}
  #allocation0 [shape = 'u32[]', space=smem, size = 0x4, offset = 0x4, fixed_abs, tag = 'smem constant byte address 0x4 - core index']
  #allocation1 [shape = 'u32[144,128]{1,0:T(1,128)}', space=vmem, size = 0x12000, scoped, tag = 'internal scratch']
  #allocation2 [shape = 'f32[1,1]{1,0:T(1,128)S(1)}', space=vmem, size = 0x200, scoped, tag = 'scoped memory for tpu_custom_call.1']
  %s0 = inlined_call_operand.vmem [shape: s32[4,1,512], index: 0, kind: input, shape index: {}]
  %s1 = inlined_call_operand.vmem [shape: s32[4,1,512], index: 1, kind: input, shape index: {}]
  %s2 = inlined_call_operand.vmem [shape: s32[4,1,512], index: 2, kind: input, shape index: {}]
  %s3 = inlined_call_operand.vmem [shape: f32[128,3], index: 3, kind: input, shape index: {}]
  %s4 = inlined_call_operand.vmem [shape: f32[128,1], index: 4, kind: input, shape index: {}]
  %s5 = inlined_call_operand.vmem [shape: bf16[64,128], index: 5, kind: input, shape index: {}]
  %s6 = inlined_call_operand.vmem [shape: f32[64,1], index: 6, kind: input, shape index: {}]
  %s7 = inlined_call_operand.vmem [shape: bf16[32,64], index: 7, kind: input, shape index: {}]
  %s8 = inlined_call_operand.vmem [shape: f32[32,1], index: 8, kind: input, shape index: {}]
  %s9 = inlined_call_operand.vmem [shape: f32[32,1], index: 9, kind: input, shape index: {}]
  %s10 = inlined_call_operand.<no memory space> [shape: f32[1,1], index: 10, kind: input, shape index: {}]
  %s11 = inlined_call_operand.hbm [shape: f32[4,1,512], index: 11, kind: output, shape index: {}]
  %s12 = sld [smem:[#allocation0]]
  $region54: #{tpu_custom_call.1} parent=0
    _
  %s14 = ssub.s32 1, %s12
  %s15 = scalar_select 0, %s14, %s12
  %v16 = vstv %s10
  %17 = vst [vmem:[#allocation2] sm:$0x1] %v16
  $region1: #{tpu_custom_call.1} parent=0
    #allocation3 [shape = 'u8[8192]{0}', space=vmem, size = 0x2000, scoped, tag = 'output window, operand 0, single buffered']
    #allocation4 [shape = 's32[1]{0}', space=sflag, size = 0x4, scoped, tag = 'scoped memory for tpu_custom_call.1']
    %18 = vsyncpa [#allocation4], 0
    // Predicated region
    $region2: #{tpu_custom_call.1} parent=1 // pred_check
      _
    $region3: #{tpu_custom_call.1} parent=1 // pred_check_branch
      %20 = sbr.rel (0) target = $region5
    $region4: #{tpu_custom_call.1} parent=1 // pred_region
      _
    $region5: #{tpu_custom_call.1} parent=1 // pred_fallthru
      _
    // Predicated region
    $region6: #{tpu_custom_call.1} parent=1 // pred_check
      _
    $region7: #{tpu_custom_call.1} parent=1 // pred_check_branch
      %22 = sbr.rel (0) target = $region9
    $region8: #{tpu_custom_call.1} parent=1 // pred_region
      _
    $region9: #{tpu_custom_call.1} parent=1 // pred_fallthru
      _
    // Predicated region
    $region10: #{tpu_custom_call.1} parent=1 // pred_check
      _
    $region11: #{tpu_custom_call.1} parent=1 // pred_check_branch
      %24 = sbr.rel (0) target = $region13
    $region12: #{tpu_custom_call.1} parent=1 // pred_region
      _
    $region13: #{tpu_custom_call.1} parent=1 // pred_fallthru
      _
    // Predicated region
    $region14: #{tpu_custom_call.1} parent=1 // pred_check
      _
    $region15: #{tpu_custom_call.1} parent=1 // pred_check_branch
      %26 = sbr.rel (0) target = $region17
    $region16: #{tpu_custom_call.1} parent=1 // pred_region
      _
    $region17: #{tpu_custom_call.1} parent=1 // pred_fallthru
      _
    // Predicated region
    $region18: #{tpu_custom_call.1} parent=1 // pred_check
      _
    $region19: #{tpu_custom_call.1} parent=1 // pred_check_branch
      %28 = sbr.rel (0) target = $region21
    $region20: #{tpu_custom_call.1} parent=1 // pred_region
      _
    $region21: #{tpu_custom_call.1} parent=1 // pred_fallthru
      _
    // Predicated region
    $region22: #{tpu_custom_call.1} parent=1 // pred_check
      _
    $region23: #{tpu_custom_call.1} parent=1 // pred_check_branch
      %30 = sbr.rel (0) target = $region25
    $region24: #{tpu_custom_call.1} parent=1 // pred_region
      _
    $region25: #{tpu_custom_call.1} parent=1 // pred_fallthru
      _
    // Predicated region
    $region26: #{tpu_custom_call.1} parent=1 // pred_check
      _
    $region27: #{tpu_custom_call.1} parent=1 // pred_check_branch
      %32 = sbr.rel (0) target = $region29
    $region28: #{tpu_custom_call.1} parent=1 // pred_region
      _
    $region29: #{tpu_custom_call.1} parent=1 // pred_fallthru
      _
    // Predicated region
    $region30: #{tpu_custom_call.1} parent=1 // pred_check
      _
    $region31: #{tpu_custom_call.1} parent=1 // pred_check_branch
      %34 = sbr.rel (0) target = $region33
    $region32: #{tpu_custom_call.1} parent=1 // pred_region
      _
    $region33: #{tpu_custom_call.1} parent=1 // pred_fallthru
      _
    // Predicated region
    $region34: #{tpu_custom_call.1} parent=1 // pred_check
      _
    $region35: #{tpu_custom_call.1} parent=1 // pred_check_branch
      %36 = sbr.rel (0) target = $region37
    $region36: #{tpu_custom_call.1} parent=1 // pred_region
      _
    $region37: #{tpu_custom_call.1} parent=1 // pred_fallthru
      _
    // Predicated region
    $region38: #{tpu_custom_call.1} parent=1 // pred_check
      _
    $region39: #{tpu_custom_call.1} parent=1 // pred_check_branch
      %38 = sbr.rel (0) target = $region41
    $region40: #{tpu_custom_call.1} parent=1 // pred_region
      _
    $region41: #{tpu_custom_call.1} parent=1 // pred_fallthru
      _
    // Predicated region
    $region42: #{tpu_custom_call.1} parent=1 // pred_check
      _
    $region43: #{tpu_custom_call.1} parent=1 // pred_check_branch
      %40 = sbr.rel (0) target = $region45
    $region44: #{tpu_custom_call.1} parent=1 // pred_region
      _
    $region45: #{tpu_custom_call.1} parent=1 // pred_fallthru
      _
    %v42 = vld [vmem:[%s3] sm:$0xff]
    %v43 = vld [vmem:[%s3 + $0x8] sm:$0xff]
    %v44 = vld [vmem:[%s3 + $0x10] sm:$0xff]
    %v45 = vld [vmem:[%s3 + $0x18] sm:$0xff]
    %v46 = vld [vmem:[%s3 + $0x20] sm:$0xff]
    %v47 = vld [vmem:[%s3 + $0x28] sm:$0xff]
    %v48 = vld [vmem:[%s3 + $0x30] sm:$0xff]
    %v49 = vld [vmem:[%s3 + $0x38] sm:$0xff]
    %v50 = vld [vmem:[%s3 + $0x40] sm:$0xff]
    %v51 = vld [vmem:[%s3 + $0x48] sm:$0xff]
    %v52 = vld [vmem:[%s3 + $0x50] sm:$0xff]
    %v53 = vld [vmem:[%s3 + $0x58] sm:$0xff]
    %v54 = vld [vmem:[%s3 + $0x60] sm:$0xff]
    %v55 = vld [vmem:[%s3 + $0x68] sm:$0xff]
    %v56 = vld [vmem:[%s3 + $0x70] sm:$0xff]
    %v57 = vld [vmem:[%s3 + $0x78] sm:$0xff]
    %v58 = vld [vmem:[%s4] sm:$0xff]
    %v59 = vld [vmem:[%s4 + $0x8] sm:$0xff]
    %v60 = vld [vmem:[%s4 + $0x10] sm:$0xff]
    %v61 = vld [vmem:[%s4 + $0x18] sm:$0xff]
    %v62 = vld [vmem:[%s4 + $0x20] sm:$0xff]
    %v63 = vld [vmem:[%s4 + $0x28] sm:$0xff]
    %v64 = vld [vmem:[%s4 + $0x30] sm:$0xff]
    %v65 = vld [vmem:[%s4 + $0x38] sm:$0xff]
    %v66 = vld [vmem:[%s4 + $0x40] sm:$0xff]
    %v67 = vld [vmem:[%s4 + $0x48] sm:$0xff]
    %v68 = vld [vmem:[%s4 + $0x50] sm:$0xff]
    %v69 = vld [vmem:[%s4 + $0x58] sm:$0xff]
    %v70 = vld [vmem:[%s4 + $0x60] sm:$0xff]
    %v71 = vld [vmem:[%s4 + $0x68] sm:$0xff]
    %v72 = vld [vmem:[%s4 + $0x70] sm:$0xff]
    %v73 = vld [vmem:[%s4 + $0x78] sm:$0xff]
    %v74 = vld [vmem:[%s5] sm:$0xf]
    %v75 = vld [vmem:[%s5 + $0x4] sm:$0xf]
    %v76 = vld [vmem:[%s5 + $0x8] sm:$0xf]
    %v77 = vld [vmem:[%s5 + $0xc] sm:$0xf]
    %v78 = vld [vmem:[%s5 + $0x10] sm:$0xf]
    %v79 = vld [vmem:[%s5 + $0x14] sm:$0xf]
    %v80 = vld [vmem:[%s5 + $0x18] sm:$0xf]
    %v81 = vld [vmem:[%s5 + $0x1c] sm:$0xf]
    %v82 = vld [vmem:[%s6] sm:$0xff]
    %v83 = vld [vmem:[%s6 + $0x8] sm:$0xff]
    %v84 = vld [vmem:[%s6 + $0x10] sm:$0xff]
    %v85 = vld [vmem:[%s6 + $0x18] sm:$0xff]
    %v86 = vld [vmem:[%s6 + $0x20] sm:$0xff]
    %v87 = vld [vmem:[%s6 + $0x28] sm:$0xff]
    %v88 = vld [vmem:[%s6 + $0x30] sm:$0xff]
    %v89 = vld [vmem:[%s6 + $0x38] sm:$0xff]
    %v90 = vld [vmem:[%s7] sm:$0xf]
    %v91 = vld [vmem:[%s7 + $0x4] sm:$0xf]
    %v92 = vld [vmem:[%s7 + $0x8] sm:$0xf]
    %v93 = vld [vmem:[%s7 + $0xc] sm:$0xf]
    %v94 = vld [vmem:[%s8] sm:$0xff]
    %v95 = vld [vmem:[%s8 + $0x8] sm:$0xff]
    %v96 = vld [vmem:[%s8 + $0x10] sm:$0xff]
    %v97 = vld [vmem:[%s8 + $0x18] sm:$0xff]
    %v98 = vld [vmem:[%s9] sm:$0xff]
    %v99 = vld [vmem:[%s9 + $0x8] sm:$0xff]
    %v100 = vld [vmem:[%s9 + $0x10] sm:$0xff]
    %v101 = vld [vmem:[%s9 + $0x18] sm:$0xff]
    %v102 = vld [vmem:[#allocation2] sm:$0x1]
    %v103 = vld [vmem:[%s0] sm:$0xf]
    %v104 = vcvt.s32.f32 %v103
    %v105 = vld [vmem:[%s1] sm:$0xf]
    %v106 = vcvt.s32.f32 %v105
    %v107 = vld [vmem:[%s2] sm:$0xf]
    %v108 = vcvt.s32.f32 %v107
    %v109 = vsub.f32 %v108, 1.0
    %v110 = vrcp.pop %v109
    %v111 = vmul.f32 1.0, %v110
    %v112 = vmul.f32 %v104, %v111
    %v113 = vsub.f32 %v106, 1.0
    %v114 = vmul.f32 %v113, %v111
    %v115 = vmul.f32 %v108, 0.11111111
    %117 = vset.pattern.permute.xlu0 0
    %118 = vperm.xlu0 %117, %v42
    %v119 = vpop.permute.xlu0 %118
    %122 = vset.pattern.permute.xlu0 0
    %123 = vperm.xlu0 %122, %v43
    %v124 = vpop.permute.xlu0 %123
    %127 = vset.pattern.permute.xlu0 0
    %128 = vperm.xlu0 %127, %v44
    %v129 = vpop.permute.xlu0 %128
    %132 = vset.pattern.permute.xlu0 0
    %133 = vperm.xlu0 %132, %v45
    %v134 = vpop.permute.xlu0 %133
    %137 = vset.pattern.permute.xlu0 0
    %138 = vperm.xlu0 %137, %v46
    %v139 = vpop.permute.xlu0 %138
    %142 = vset.pattern.permute.xlu0 0
    %143 = vperm.xlu0 %142, %v47
    %v144 = vpop.permute.xlu0 %143
    %147 = vset.pattern.permute.xlu0 0
    %148 = vperm.xlu0 %147, %v48
    %v149 = vpop.permute.xlu0 %148
    %152 = vset.pattern.permute.xlu0 0
    %153 = vperm.xlu0 %152, %v49
    %v154 = vpop.permute.xlu0 %153
    %157 = vset.pattern.permute.xlu0 0
    %158 = vperm.xlu0 %157, %v50
    %v159 = vpop.permute.xlu0 %158
    %162 = vset.pattern.permute.xlu0 0
    %163 = vperm.xlu0 %162, %v51
    %v164 = vpop.permute.xlu0 %163
    %167 = vset.pattern.permute.xlu0 0
    %168 = vperm.xlu0 %167, %v52
    %v169 = vpop.permute.xlu0 %168
    %172 = vset.pattern.permute.xlu0 0
    %173 = vperm.xlu0 %172, %v53
    %v174 = vpop.permute.xlu0 %173
    %177 = vset.pattern.permute.xlu0 0
    %178 = vperm.xlu0 %177, %v54
    %v179 = vpop.permute.xlu0 %178
    %182 = vset.pattern.permute.xlu0 0
    %183 = vperm.xlu0 %182, %v55
    %v184 = vpop.permute.xlu0 %183
    %187 = vset.pattern.permute.xlu0 0
    %188 = vperm.xlu0 %187, %v56
    %v189 = vpop.permute.xlu0 %188
    %192 = vset.pattern.permute.xlu0 0
    %193 = vperm.xlu0 %192, %v57
    %v194 = vpop.permute.xlu0 %193
    %v197 = vlaneseq
    %v198 = vshrl.u32 %v197, 7
    %v199 = vsub.s32 0, %v198
    %v200 = vrot.slane %v112, %v199
    %v201 = vlaneseq
    %v202 = vshrl.u32 %v201, 7
    %v203 = vsub.s32 1, %v202
    %v204 = vrot.slane %v112, %v203
    %v205 = vlaneseq
    %v206 = vshrl.u32 %v205, 7
    %v207 = vsub.s32 2, %v206
    %v208 = vrot.slane %v112, %v207
    %v209 = vlaneseq
    %v210 = vshrl.u32 %v209, 7
    %v211 = vsub.s32 3, %v210
    %v212 = vrot.slane %v112, %v211
    %v217 = vmul.f32 %v119, %v200
    %v218 = vmul.f32 %v119, %v204
    %v219 = vmul.f32 %v119, %v208
    %v220 = vmul.f32 %v119, %v212
    %v221 = vmul.f32 %v124, %v200
    %v222 = vmul.f32 %v124, %v204
    %v223 = vmul.f32 %v124, %v208
    %v224 = vmul.f32 %v124, %v212
    %v225 = vmul.f32 %v129, %v200
    %v226 = vmul.f32 %v129, %v204
    %v227 = vmul.f32 %v129, %v208
    %v228 = vmul.f32 %v129, %v212
    %v229 = vmul.f32 %v134, %v200
    %v230 = vmul.f32 %v134, %v204
    %v231 = vmul.f32 %v134, %v208
    %v232 = vmul.f32 %v134, %v212
    %v233 = vmul.f32 %v139, %v200
    %v234 = vmul.f32 %v139, %v204
    %v235 = vmul.f32 %v139, %v208
    %v236 = vmul.f32 %v139, %v212
    %v237 = vmul.f32 %v144, %v200
    %v238 = vmul.f32 %v144, %v204
    %v239 = vmul.f32 %v144, %v208
    %v240 = vmul.f32 %v144, %v212
    %v241 = vmul.f32 %v149, %v200
    %v242 = vmul.f32 %v149, %v204
    %v243 = vmul.f32 %v149, %v208
    %v244 = vmul.f32 %v149, %v212
    %v245 = vmul.f32 %v154, %v200
    %v246 = vmul.f32 %v154, %v204
    %v247 = vmul.f32 %v154, %v208
    %v248 = vmul.f32 %v154, %v212
    %v249 = vmul.f32 %v159, %v200
    %v250 = vmul.f32 %v159, %v204
    %v251 = vmul.f32 %v159, %v208
    %v252 = vmul.f32 %v159, %v212
    %v253 = vmul.f32 %v164, %v200
    %v254 = vmul.f32 %v164, %v204
    %v255 = vmul.f32 %v164, %v208
    %v256 = vmul.f32 %v164, %v212
    %v257 = vmul.f32 %v169, %v200
    %v258 = vmul.f32 %v169, %v204
    %v259 = vmul.f32 %v169, %v208
    %v260 = vmul.f32 %v169, %v212
    %v261 = vmul.f32 %v174, %v200
    %v262 = vmul.f32 %v174, %v204
    %v263 = vmul.f32 %v174, %v208
    %v264 = vmul.f32 %v174, %v212
    %v265 = vmul.f32 %v179, %v200
    %v266 = vmul.f32 %v179, %v204
    %v267 = vmul.f32 %v179, %v208
    %v268 = vmul.f32 %v179, %v212
    %v269 = vmul.f32 %v184, %v200
    %v270 = vmul.f32 %v184, %v204
    %v271 = vmul.f32 %v184, %v208
    %v272 = vmul.f32 %v184, %v212
    %v273 = vmul.f32 %v189, %v200
    %v274 = vmul.f32 %v189, %v204
    %v275 = vmul.f32 %v189, %v208
    %v276 = vmul.f32 %v189, %v212
    %v277 = vmul.f32 %v194, %v200
    %v278 = vmul.f32 %v194, %v204
    %v279 = vmul.f32 %v194, %v208
    %v280 = vmul.f32 %v194, %v212
    %281 = vset.pattern.permute.xlu0 1
    %282 = vperm.xlu0 %281, %v42
    %v283 = vpop.permute.xlu0 %282
    %285 = vset.pattern.permute.xlu0 1
    %286 = vperm.xlu0 %285, %v43
    %v287 = vpop.permute.xlu0 %286
    %289 = vset.pattern.permute.xlu0 1
    %290 = vperm.xlu0 %289, %v44
    %v291 = vpop.permute.xlu0 %290
    %293 = vset.pattern.permute.xlu0 1
    %294 = vperm.xlu0 %293, %v45
    %v295 = vpop.permute.xlu0 %294
    %297 = vset.pattern.permute.xlu0 1
    %298 = vperm.xlu0 %297, %v46
    %v299 = vpop.permute.xlu0 %298
    %301 = vset.pattern.permute.xlu0 1
    %302 = vperm.xlu0 %301, %v47
    %v303 = vpop.permute.xlu0 %302
    %305 = vset.pattern.permute.xlu0 1
    %306 = vperm.xlu0 %305, %v48
    %v307 = vpop.permute.xlu0 %306
    %309 = vset.pattern.permute.xlu0 1
    %310 = vperm.xlu0 %309, %v49
    %v311 = vpop.permute.xlu0 %310
    %313 = vset.pattern.permute.xlu0 1
    %314 = vperm.xlu0 %313, %v50
    %v315 = vpop.permute.xlu0 %314
    %317 = vset.pattern.permute.xlu0 1
    %318 = vperm.xlu0 %317, %v51
    %v319 = vpop.permute.xlu0 %318
    %321 = vset.pattern.permute.xlu0 1
    %322 = vperm.xlu0 %321, %v52
    %v323 = vpop.permute.xlu0 %322
    %325 = vset.pattern.permute.xlu0 1
    %326 = vperm.xlu0 %325, %v53
    %v327 = vpop.permute.xlu0 %326
    %329 = vset.pattern.permute.xlu0 1
    %330 = vperm.xlu0 %329, %v54
    %v331 = vpop.permute.xlu0 %330
    %333 = vset.pattern.permute.xlu0 1
    %334 = vperm.xlu0 %333, %v55
    %v335 = vpop.permute.xlu0 %334
    %337 = vset.pattern.permute.xlu0 1
    %338 = vperm.xlu0 %337, %v56
    %v339 = vpop.permute.xlu0 %338
    %341 = vset.pattern.permute.xlu0 1
    %342 = vperm.xlu0 %341, %v57
    %v343 = vpop.permute.xlu0 %342
    %v346 = vlaneseq
    %v347 = vshrl.u32 %v346, 7
    %v348 = vsub.s32 0, %v347
    %v349 = vrot.slane %v114, %v348
    %v350 = vlaneseq
    %v351 = vshrl.u32 %v350, 7
    %v352 = vsub.s32 1, %v351
    %v353 = vrot.slane %v114, %v352
    %v354 = vlaneseq
    %v355 = vshrl.u32 %v354, 7
    %v356 = vsub.s32 2, %v355
    %v357 = vrot.slane %v114, %v356
    %v358 = vlaneseq
    %v359 = vshrl.u32 %v358, 7
    %v360 = vsub.s32 3, %v359
    %v361 = vrot.slane %v114, %v360
    %v366 = vmul.f32 %v283, %v349
    %v367 = vmul.f32 %v283, %v353
    %v368 = vmul.f32 %v283, %v357
    %v369 = vmul.f32 %v283, %v361
    %v370 = vmul.f32 %v287, %v349
    %v371 = vmul.f32 %v287, %v353
    %v372 = vmul.f32 %v287, %v357
    %v373 = vmul.f32 %v287, %v361
    %v374 = vmul.f32 %v291, %v349
    %v375 = vmul.f32 %v291, %v353
    %v376 = vmul.f32 %v291, %v357
    %v377 = vmul.f32 %v291, %v361
    %v378 = vmul.f32 %v295, %v349
    %v379 = vmul.f32 %v295, %v353
    %v380 = vmul.f32 %v295, %v357
    %v381 = vmul.f32 %v295, %v361
    %v382 = vmul.f32 %v299, %v349
    %v383 = vmul.f32 %v299, %v353
    %v384 = vmul.f32 %v299, %v357
    %v385 = vmul.f32 %v299, %v361
    %v386 = vmul.f32 %v303, %v349
    %v387 = vmul.f32 %v303, %v353
    %v388 = vmul.f32 %v303, %v357
    %v389 = vmul.f32 %v303, %v361
    %v390 = vmul.f32 %v307, %v349
    %v391 = vmul.f32 %v307, %v353
    %v392 = vmul.f32 %v307, %v357
    %v393 = vmul.f32 %v307, %v361
    %v394 = vmul.f32 %v311, %v349
    %v395 = vmul.f32 %v311, %v353
    %v396 = vmul.f32 %v311, %v357
    %v397 = vmul.f32 %v311, %v361
    %v398 = vmul.f32 %v315, %v349
    %v399 = vmul.f32 %v315, %v353
    %v400 = vmul.f32 %v315, %v357
    %v401 = vmul.f32 %v315, %v361
    %v402 = vmul.f32 %v319, %v349
    %v403 = vmul.f32 %v319, %v353
    %v404 = vmul.f32 %v319, %v357
    %v405 = vmul.f32 %v319, %v361
    %v406 = vmul.f32 %v323, %v349
    %v407 = vmul.f32 %v323, %v353
    %v408 = vmul.f32 %v323, %v357
    %v409 = vmul.f32 %v323, %v361
    %v410 = vmul.f32 %v327, %v349
    %v411 = vmul.f32 %v327, %v353
    %v412 = vmul.f32 %v327, %v357
    %v413 = vmul.f32 %v327, %v361
    %v414 = vmul.f32 %v331, %v349
    %v415 = vmul.f32 %v331, %v353
    %v416 = vmul.f32 %v331, %v357
    %v417 = vmul.f32 %v331, %v361
    %v418 = vmul.f32 %v335, %v349
    %v419 = vmul.f32 %v335, %v353
    %v420 = vmul.f32 %v335, %v357
    %v421 = vmul.f32 %v335, %v361
    %v422 = vmul.f32 %v339, %v349
    %v423 = vmul.f32 %v339, %v353
    %v424 = vmul.f32 %v339, %v357
    %v425 = vmul.f32 %v339, %v361
    %v426 = vmul.f32 %v343, %v349
    %v427 = vmul.f32 %v343, %v353
    %v428 = vmul.f32 %v343, %v357
    %v429 = vmul.f32 %v343, %v361
    %v430 = vadd.f32 %v217, %v366
    %v431 = vadd.f32 %v218, %v367
    %v432 = vadd.f32 %v219, %v368
    %v433 = vadd.f32 %v220, %v369
    %v434 = vadd.f32 %v221, %v370
    %v435 = vadd.f32 %v222, %v371
    %v436 = vadd.f32 %v223, %v372
    %v437 = vadd.f32 %v224, %v373
    %v438 = vadd.f32 %v225, %v374
    %v439 = vadd.f32 %v226, %v375
    %v440 = vadd.f32 %v227, %v376
    %v441 = vadd.f32 %v228, %v377
    %v442 = vadd.f32 %v229, %v378
    %v443 = vadd.f32 %v230, %v379
    %v444 = vadd.f32 %v231, %v380
    %v445 = vadd.f32 %v232, %v381
    %v446 = vadd.f32 %v233, %v382
    %v447 = vadd.f32 %v234, %v383
    %v448 = vadd.f32 %v235, %v384
    %v449 = vadd.f32 %v236, %v385
    %v450 = vadd.f32 %v237, %v386
    %v451 = vadd.f32 %v238, %v387
    %v452 = vadd.f32 %v239, %v388
    %v453 = vadd.f32 %v240, %v389
    %v454 = vadd.f32 %v241, %v390
    %v455 = vadd.f32 %v242, %v391
    %v456 = vadd.f32 %v243, %v392
    %v457 = vadd.f32 %v244, %v393
    %v458 = vadd.f32 %v245, %v394
    %v459 = vadd.f32 %v246, %v395
    %v460 = vadd.f32 %v247, %v396
    %v461 = vadd.f32 %v248, %v397
    %v462 = vadd.f32 %v249, %v398
    %v463 = vadd.f32 %v250, %v399
    %v464 = vadd.f32 %v251, %v400
    %v465 = vadd.f32 %v252, %v401
    %v466 = vadd.f32 %v253, %v402
    %v467 = vadd.f32 %v254, %v403
    %v468 = vadd.f32 %v255, %v404
    %v469 = vadd.f32 %v256, %v405
    %v470 = vadd.f32 %v257, %v406
    %v471 = vadd.f32 %v258, %v407
    %v472 = vadd.f32 %v259, %v408
    %v473 = vadd.f32 %v260, %v409
    %v474 = vadd.f32 %v261, %v410
    %v475 = vadd.f32 %v262, %v411
    %v476 = vadd.f32 %v263, %v412
    %v477 = vadd.f32 %v264, %v413
    %v478 = vadd.f32 %v265, %v414
    %v479 = vadd.f32 %v266, %v415
    %v480 = vadd.f32 %v267, %v416
    %v481 = vadd.f32 %v268, %v417
    %v482 = vadd.f32 %v269, %v418
    %v483 = vadd.f32 %v270, %v419
    %v484 = vadd.f32 %v271, %v420
    %v485 = vadd.f32 %v272, %v421
    %v486 = vadd.f32 %v273, %v422
    %v487 = vadd.f32 %v274, %v423
    %v488 = vadd.f32 %v275, %v424
    %v489 = vadd.f32 %v276, %v425
    %v490 = vadd.f32 %v277, %v426
    %v491 = vadd.f32 %v278, %v427
    %v492 = vadd.f32 %v279, %v428
    %v493 = vadd.f32 %v280, %v429
    %494 = vset.pattern.permute.xlu0 2
    %495 = vperm.xlu0 %494, %v42
    %v496 = vpop.permute.xlu0 %495
    %498 = vset.pattern.permute.xlu0 2
    %499 = vperm.xlu0 %498, %v43
    %v500 = vpop.permute.xlu0 %499
    %502 = vset.pattern.permute.xlu0 2
    %503 = vperm.xlu0 %502, %v44
    %v504 = vpop.permute.xlu0 %503
    %506 = vset.pattern.permute.xlu0 2
    %507 = vperm.xlu0 %506, %v45
    %v508 = vpop.permute.xlu0 %507
    %510 = vset.pattern.permute.xlu0 2
    %511 = vperm.xlu0 %510, %v46
    %v512 = vpop.permute.xlu0 %511
    %514 = vset.pattern.permute.xlu0 2
    %515 = vperm.xlu0 %514, %v47
    %v516 = vpop.permute.xlu0 %515
    %518 = vset.pattern.permute.xlu0 2
    %519 = vperm.xlu0 %518, %v48
    %v520 = vpop.permute.xlu0 %519
    %522 = vset.pattern.permute.xlu0 2
    %523 = vperm.xlu0 %522, %v49
    %v524 = vpop.permute.xlu0 %523
    %526 = vset.pattern.permute.xlu0 2
    %527 = vperm.xlu0 %526, %v50
    %v528 = vpop.permute.xlu0 %527
    %530 = vset.pattern.permute.xlu0 2
    %531 = vperm.xlu0 %530, %v51
    %v532 = vpop.permute.xlu0 %531
    %534 = vset.pattern.permute.xlu0 2
    %535 = vperm.xlu0 %534, %v52
    %v536 = vpop.permute.xlu0 %535
    %538 = vset.pattern.permute.xlu0 2
    %539 = vperm.xlu0 %538, %v53
    %v540 = vpop.permute.xlu0 %539
    %542 = vset.pattern.permute.xlu0 2
    %543 = vperm.xlu0 %542, %v54
    %v544 = vpop.permute.xlu0 %543
    %546 = vset.pattern.permute.xlu0 2
    %547 = vperm.xlu0 %546, %v55
    %v548 = vpop.permute.xlu0 %547
    %550 = vset.pattern.permute.xlu0 2
    %551 = vperm.xlu0 %550, %v56
    %v552 = vpop.permute.xlu0 %551
    %554 = vset.pattern.permute.xlu0 2
    %555 = vperm.xlu0 %554, %v57
    %v556 = vpop.permute.xlu0 %555
    %v559 = vlaneseq
    %v560 = vshrl.u32 %v559, 7
    %v561 = vsub.s32 0, %v560
    %v562 = vrot.slane %v115, %v561
    %v563 = vlaneseq
    %v564 = vshrl.u32 %v563, 7
    %v565 = vsub.s32 1, %v564
    %v566 = vrot.slane %v115, %v565
    %v567 = vlaneseq
    %v568 = vshrl.u32 %v567, 7
    %v569 = vsub.s32 2, %v568
    %v570 = vrot.slane %v115, %v569
    %v571 = vlaneseq
    %v572 = vshrl.u32 %v571, 7
    %v573 = vsub.s32 3, %v572
    %v574 = vrot.slane %v115, %v573
    %v579 = vmul.f32 %v496, %v562
    %v580 = vmul.f32 %v496, %v566
    %v581 = vmul.f32 %v496, %v570
    %v582 = vmul.f32 %v496, %v574
    %v583 = vmul.f32 %v500, %v562
    %v584 = vmul.f32 %v500, %v566
    %v585 = vmul.f32 %v500, %v570
    %v586 = vmul.f32 %v500, %v574
    %v587 = vmul.f32 %v504, %v562
    %v588 = vmul.f32 %v504, %v566
    %v589 = vmul.f32 %v504, %v570
    %v590 = vmul.f32 %v504, %v574
    %v591 = vmul.f32 %v508, %v562
    %v592 = vmul.f32 %v508, %v566
    %v593 = vmul.f32 %v508, %v570
    %v594 = vmul.f32 %v508, %v574
    %v595 = vmul.f32 %v512, %v562
    %v596 = vmul.f32 %v512, %v566
    %v597 = vmul.f32 %v512, %v570
    %v598 = vmul.f32 %v512, %v574
    %v599 = vmul.f32 %v516, %v562
    %v600 = vmul.f32 %v516, %v566
    %v601 = vmul.f32 %v516, %v570
    %v602 = vmul.f32 %v516, %v574
    %v603 = vmul.f32 %v520, %v562
    %v604 = vmul.f32 %v520, %v566
    %v605 = vmul.f32 %v520, %v570
    %v606 = vmul.f32 %v520, %v574
    %v607 = vmul.f32 %v524, %v562
    %v608 = vmul.f32 %v524, %v566
    %v609 = vmul.f32 %v524, %v570
    %v610 = vmul.f32 %v524, %v574
    %v611 = vmul.f32 %v528, %v562
    %v612 = vmul.f32 %v528, %v566
    %v613 = vmul.f32 %v528, %v570
    %v614 = vmul.f32 %v528, %v574
    %v615 = vmul.f32 %v532, %v562
    %v616 = vmul.f32 %v532, %v566
    %v617 = vmul.f32 %v532, %v570
    %v618 = vmul.f32 %v532, %v574
    %v619 = vmul.f32 %v536, %v562
    %v620 = vmul.f32 %v536, %v566
    %v621 = vmul.f32 %v536, %v570
    %v622 = vmul.f32 %v536, %v574
    %v623 = vmul.f32 %v540, %v562
    %v624 = vmul.f32 %v540, %v566
    %v625 = vmul.f32 %v540, %v570
    %v626 = vmul.f32 %v540, %v574
    %v627 = vmul.f32 %v544, %v562
    %v628 = vmul.f32 %v544, %v566
    %v629 = vmul.f32 %v544, %v570
    %v630 = vmul.f32 %v544, %v574
    %v631 = vmul.f32 %v548, %v562
    %v632 = vmul.f32 %v548, %v566
    %v633 = vmul.f32 %v548, %v570
    %v634 = vmul.f32 %v548, %v574
    %v635 = vmul.f32 %v552, %v562
    %v636 = vmul.f32 %v552, %v566
    %v637 = vmul.f32 %v552, %v570
    %v638 = vmul.f32 %v552, %v574
    %v639 = vmul.f32 %v556, %v562
    %v640 = vmul.f32 %v556, %v566
    %v641 = vmul.f32 %v556, %v570
    %v642 = vmul.f32 %v556, %v574
    %v643 = vadd.f32 %v430, %v579
    %v644 = vadd.f32 %v431, %v580
    %v645 = vadd.f32 %v432, %v581
    %v646 = vadd.f32 %v433, %v582
    %v647 = vadd.f32 %v434, %v583
    %v648 = vadd.f32 %v435, %v584
    %v649 = vadd.f32 %v436, %v585
    %v650 = vadd.f32 %v437, %v586
    %v651 = vadd.f32 %v438, %v587
    %v652 = vadd.f32 %v439, %v588
    %v653 = vadd.f32 %v440, %v589
    %v654 = vadd.f32 %v441, %v590
    %v655 = vadd.f32 %v442, %v591
    %v656 = vadd.f32 %v443, %v592
    %v657 = vadd.f32 %v444, %v593
    %v658 = vadd.f32 %v445, %v594
    %v659 = vadd.f32 %v446, %v595
    %v660 = vadd.f32 %v447, %v596
    %v661 = vadd.f32 %v448, %v597
    %v662 = vadd.f32 %v449, %v598
    %v663 = vadd.f32 %v450, %v599
    %v664 = vadd.f32 %v451, %v600
    %v665 = vadd.f32 %v452, %v601
    %v666 = vadd.f32 %v453, %v602
    %v667 = vadd.f32 %v454, %v603
    %v668 = vadd.f32 %v455, %v604
    %v669 = vadd.f32 %v456, %v605
    %v670 = vadd.f32 %v457, %v606
    %v671 = vadd.f32 %v458, %v607
    %v672 = vadd.f32 %v459, %v608
    %v673 = vadd.f32 %v460, %v609
    %v674 = vadd.f32 %v461, %v610
    %v675 = vadd.f32 %v462, %v611
    %v676 = vadd.f32 %v463, %v612
    %v677 = vadd.f32 %v464, %v613
    %v678 = vadd.f32 %v465, %v614
    %v679 = vadd.f32 %v466, %v615
    %v680 = vadd.f32 %v467, %v616
    %v681 = vadd.f32 %v468, %v617
    %v682 = vadd.f32 %v469, %v618
    %v683 = vadd.f32 %v470, %v619
    %v684 = vadd.f32 %v471, %v620
    %v685 = vadd.f32 %v472, %v621
    %v686 = vadd.f32 %v473, %v622
    %v687 = vadd.f32 %v474, %v623
    %v688 = vadd.f32 %v475, %v624
    %v689 = vadd.f32 %v476, %v625
    %v690 = vadd.f32 %v477, %v626
    %v691 = vadd.f32 %v478, %v627
    %v692 = vadd.f32 %v479, %v628
    %v693 = vadd.f32 %v480, %v629
    %v694 = vadd.f32 %v481, %v630
    %v695 = vadd.f32 %v482, %v631
    %v696 = vadd.f32 %v483, %v632
    %v697 = vadd.f32 %v484, %v633
    %v698 = vadd.f32 %v485, %v634
    %v699 = vadd.f32 %v486, %v635
    %v700 = vadd.f32 %v487, %v636
    %v701 = vadd.f32 %v488, %v637
    %v702 = vadd.f32 %v489, %v638
    %v703 = vadd.f32 %v490, %v639
    %v704 = vadd.f32 %v491, %v640
    %v705 = vadd.f32 %v492, %v641
    %v706 = vadd.f32 %v493, %v642
    %708 = vset.pattern.permute.xlu0 0
    %709 = vperm.xlu0 %708, %v58
    %v710 = vpop.permute.xlu0 %709
    %713 = vset.pattern.permute.xlu0 0
    %714 = vperm.xlu0 %713, %v59
    %v715 = vpop.permute.xlu0 %714
    %718 = vset.pattern.permute.xlu0 0
    %719 = vperm.xlu0 %718, %v60
    %v720 = vpop.permute.xlu0 %719
    %723 = vset.pattern.permute.xlu0 0
    %724 = vperm.xlu0 %723, %v61
    %v725 = vpop.permute.xlu0 %724
    %728 = vset.pattern.permute.xlu0 0
    %729 = vperm.xlu0 %728, %v62
    %v730 = vpop.permute.xlu0 %729
    %733 = vset.pattern.permute.xlu0 0
    %734 = vperm.xlu0 %733, %v63
    %v735 = vpop.permute.xlu0 %734
    %738 = vset.pattern.permute.xlu0 0
    %739 = vperm.xlu0 %738, %v64
    %v740 = vpop.permute.xlu0 %739
    %743 = vset.pattern.permute.xlu0 0
    %744 = vperm.xlu0 %743, %v65
    %v745 = vpop.permute.xlu0 %744
    %748 = vset.pattern.permute.xlu0 0
    %749 = vperm.xlu0 %748, %v66
    %v750 = vpop.permute.xlu0 %749
    %753 = vset.pattern.permute.xlu0 0
    %754 = vperm.xlu0 %753, %v67
    %v755 = vpop.permute.xlu0 %754
    %758 = vset.pattern.permute.xlu0 0
    %759 = vperm.xlu0 %758, %v68
    %v760 = vpop.permute.xlu0 %759
    %763 = vset.pattern.permute.xlu0 0
    %764 = vperm.xlu0 %763, %v69
    %v765 = vpop.permute.xlu0 %764
    %768 = vset.pattern.permute.xlu0 0
    %769 = vperm.xlu0 %768, %v70
    %v770 = vpop.permute.xlu0 %769
    %773 = vset.pattern.permute.xlu0 0
    %774 = vperm.xlu0 %773, %v71
    %v775 = vpop.permute.xlu0 %774
    %778 = vset.pattern.permute.xlu0 0
    %779 = vperm.xlu0 %778, %v72
    %v780 = vpop.permute.xlu0 %779
    %783 = vset.pattern.permute.xlu0 0
    %784 = vperm.xlu0 %783, %v73
    %v785 = vpop.permute.xlu0 %784
    %v787 = vadd.f32 %v643, %v710
    %v788 = vadd.f32 %v644, %v710
    %v789 = vadd.f32 %v645, %v710
    %v790 = vadd.f32 %v646, %v710
    %v791 = vadd.f32 %v647, %v715
    %v792 = vadd.f32 %v648, %v715
    %v793 = vadd.f32 %v649, %v715
    %v794 = vadd.f32 %v650, %v715
    %v795 = vadd.f32 %v651, %v720
    %v796 = vadd.f32 %v652, %v720
    %v797 = vadd.f32 %v653, %v720
    %v798 = vadd.f32 %v654, %v720
    %v799 = vadd.f32 %v655, %v725
    %v800 = vadd.f32 %v656, %v725
    %v801 = vadd.f32 %v657, %v725
    %v802 = vadd.f32 %v658, %v725
    %v803 = vadd.f32 %v659, %v730
    %v804 = vadd.f32 %v660, %v730
    %v805 = vadd.f32 %v661, %v730
    %v806 = vadd.f32 %v662, %v730
    %v807 = vadd.f32 %v663, %v735
    %v808 = vadd.f32 %v664, %v735
    %v809 = vadd.f32 %v665, %v735
    %v810 = vadd.f32 %v666, %v735
    %v811 = vadd.f32 %v667, %v740
    %v812 = vadd.f32 %v668, %v740
    %v813 = vadd.f32 %v669, %v740
    %v814 = vadd.f32 %v670, %v740
    %v815 = vadd.f32 %v671, %v745
    %v816 = vadd.f32 %v672, %v745
    %v817 = vadd.f32 %v673, %v745
    %v818 = vadd.f32 %v674, %v745
    %v819 = vadd.f32 %v675, %v750
    %v820 = vadd.f32 %v676, %v750
    %v821 = vadd.f32 %v677, %v750
    %v822 = vadd.f32 %v678, %v750
    %v823 = vadd.f32 %v679, %v755
    %v824 = vadd.f32 %v680, %v755
    %v825 = vadd.f32 %v681, %v755
    %v826 = vadd.f32 %v682, %v755
    %v827 = vadd.f32 %v683, %v760
    %v828 = vadd.f32 %v684, %v760
    %v829 = vadd.f32 %v685, %v760
    %v830 = vadd.f32 %v686, %v760
    %v831 = vadd.f32 %v687, %v765
    %v832 = vadd.f32 %v688, %v765
    %v833 = vadd.f32 %v689, %v765
    %v834 = vadd.f32 %v690, %v765
    %v835 = vadd.f32 %v691, %v770
    %v836 = vadd.f32 %v692, %v770
    %v837 = vadd.f32 %v693, %v770
    %v838 = vadd.f32 %v694, %v770
    %v839 = vadd.f32 %v695, %v775
    %v840 = vadd.f32 %v696, %v775
    %v841 = vadd.f32 %v697, %v775
    %v842 = vadd.f32 %v698, %v775
    %v843 = vadd.f32 %v699, %v780
    %v844 = vadd.f32 %v700, %v780
    %v845 = vadd.f32 %v701, %v780
    %v846 = vadd.f32 %v702, %v780
    %v847 = vadd.f32 %v703, %v785
    %v848 = vadd.f32 %v704, %v785
    %v849 = vadd.f32 %v705, %v785
    %v850 = vadd.f32 %v706, %v785
    %v851 = vmax.f32 %v787, 0.0
    %v852 = vmax.f32 %v788, 0.0
    %v853 = vmax.f32 %v789, 0.0
    %v854 = vmax.f32 %v790, 0.0
    %v855 = vmax.f32 %v791, 0.0
    %v856 = vmax.f32 %v792, 0.0
    %v857 = vmax.f32 %v793, 0.0
    %v858 = vmax.f32 %v794, 0.0
    %v859 = vmax.f32 %v795, 0.0
    %v860 = vmax.f32 %v796, 0.0
    %v861 = vmax.f32 %v797, 0.0
    %v862 = vmax.f32 %v798, 0.0
    %v863 = vmax.f32 %v799, 0.0
    %v864 = vmax.f32 %v800, 0.0
    %v865 = vmax.f32 %v801, 0.0
    %v866 = vmax.f32 %v802, 0.0
    %v867 = vmax.f32 %v803, 0.0
    %v868 = vmax.f32 %v804, 0.0
    %v869 = vmax.f32 %v805, 0.0
    %v870 = vmax.f32 %v806, 0.0
    %v871 = vmax.f32 %v807, 0.0
    %v872 = vmax.f32 %v808, 0.0
    %v873 = vmax.f32 %v809, 0.0
    %v874 = vmax.f32 %v810, 0.0
    %v875 = vmax.f32 %v811, 0.0
    %v876 = vmax.f32 %v812, 0.0
    %v877 = vmax.f32 %v813, 0.0
    %v878 = vmax.f32 %v814, 0.0
    %v879 = vmax.f32 %v815, 0.0
    %v880 = vmax.f32 %v816, 0.0
    %v881 = vmax.f32 %v817, 0.0
    %v882 = vmax.f32 %v818, 0.0
    %v883 = vmax.f32 %v819, 0.0
    %v884 = vmax.f32 %v820, 0.0
    %v885 = vmax.f32 %v821, 0.0
    %v886 = vmax.f32 %v822, 0.0
    %v887 = vmax.f32 %v823, 0.0
    %v888 = vmax.f32 %v824, 0.0
    %v889 = vmax.f32 %v825, 0.0
    %v890 = vmax.f32 %v826, 0.0
    %v891 = vmax.f32 %v827, 0.0
    %v892 = vmax.f32 %v828, 0.0
    %v893 = vmax.f32 %v829, 0.0
    %v894 = vmax.f32 %v830, 0.0
    %v895 = vmax.f32 %v831, 0.0
    %v896 = vmax.f32 %v832, 0.0
    %v897 = vmax.f32 %v833, 0.0
    %v898 = vmax.f32 %v834, 0.0
    %v899 = vmax.f32 %v835, 0.0
    %v900 = vmax.f32 %v836, 0.0
    %v901 = vmax.f32 %v837, 0.0
    %v902 = vmax.f32 %v838, 0.0
    %v903 = vmax.f32 %v839, 0.0
    %v904 = vmax.f32 %v840, 0.0
    %v905 = vmax.f32 %v841, 0.0
    %v906 = vmax.f32 %v842, 0.0
    %v907 = vmax.f32 %v843, 0.0
    %v908 = vmax.f32 %v844, 0.0
    %v909 = vmax.f32 %v845, 0.0
    %v910 = vmax.f32 %v846, 0.0
    %v911 = vmax.f32 %v847, 0.0
    %v912 = vmax.f32 %v848, 0.0
    %v913 = vmax.f32 %v849, 0.0
    %v914 = vmax.f32 %v850, 0.0
    %v915 = vpack.c.bf16 %v855, %v851
    %v916 = vpack.c.bf16 %v856, %v852
    %v917 = vpack.c.bf16 %v857, %v853
    %v918 = vpack.c.bf16 %v858, %v854
    %v919 = vpack.c.bf16 %v863, %v859
    %v920 = vpack.c.bf16 %v864, %v860
    %v921 = vpack.c.bf16 %v865, %v861
    %v922 = vpack.c.bf16 %v866, %v862
    %v923 = vpack.c.bf16 %v871, %v867
    %v924 = vpack.c.bf16 %v872, %v868
    %v925 = vpack.c.bf16 %v873, %v869
    %v926 = vpack.c.bf16 %v874, %v870
    %v927 = vpack.c.bf16 %v879, %v875
    %v928 = vpack.c.bf16 %v880, %v876
    %v929 = vpack.c.bf16 %v881, %v877
    %v930 = vpack.c.bf16 %v882, %v878
    %v931 = vpack.c.bf16 %v887, %v883
    %v932 = vpack.c.bf16 %v888, %v884
    %v933 = vpack.c.bf16 %v889, %v885
    %v934 = vpack.c.bf16 %v890, %v886
    %v935 = vpack.c.bf16 %v895, %v891
    %v936 = vpack.c.bf16 %v896, %v892
    %v937 = vpack.c.bf16 %v897, %v893
    %v938 = vpack.c.bf16 %v898, %v894
    %v939 = vpack.c.bf16 %v903, %v899
    %v940 = vpack.c.bf16 %v904, %v900
    %v941 = vpack.c.bf16 %v905, %v901
    %v942 = vpack.c.bf16 %v906, %v902
    %v943 = vpack.c.bf16 %v911, %v907
    %v944 = vpack.c.bf16 %v912, %v908
    %v945 = vpack.c.bf16 %v913, %v909
    %v946 = vpack.c.bf16 %v914, %v910
    %948 = vset.pattern.permute.xlu0 0
    %949 = vperm.xlu0 %948, %v82
    %v950 = vpop.permute.xlu0 %949
    %953 = vset.pattern.permute.xlu0 0
    %954 = vperm.xlu0 %953, %v83
    %v955 = vpop.permute.xlu0 %954
    %958 = vset.pattern.permute.xlu0 0
    %959 = vperm.xlu0 %958, %v84
    %v960 = vpop.permute.xlu0 %959
    %963 = vset.pattern.permute.xlu0 0
    %964 = vperm.xlu0 %963, %v85
    %v965 = vpop.permute.xlu0 %964
    %968 = vset.pattern.permute.xlu0 0
    %969 = vperm.xlu0 %968, %v86
    %v970 = vpop.permute.xlu0 %969
    %973 = vset.pattern.permute.xlu0 0
    %974 = vperm.xlu0 %973, %v87
    %v975 = vpop.permute.xlu0 %974
    %978 = vset.pattern.permute.xlu0 0
    %979 = vperm.xlu0 %978, %v88
    %v980 = vpop.permute.xlu0 %979
    %983 = vset.pattern.permute.xlu0 0
    %984 = vperm.xlu0 %983, %v89
    %v985 = vpop.permute.xlu0 %984
    %v995 = vunpack.c.l.b16 %v74
    %v996 = vunpack.c.l.b16 %v75
    %v997 = vunpack.c.l.b16 %v76
    %v998 = vunpack.c.l.b16 %v77
    %v999 = vunpack.c.l.b16 %v78
    %v1000 = vunpack.c.l.b16 %v79
    %v1001 = vunpack.c.l.b16 %v80
    %v1002 = vunpack.c.l.b16 %v81
    %v1003 = vpack.c.b16 %v996, %v995
    %v1004 = vpack.c.b16 %v998, %v997
    %v1005 = vpack.c.b16 %v1000, %v999
    %v1006 = vpack.c.b16 %v1002, %v1001
    %1011 = vmatprep.subr.bf16.mxu0 %v916
    %1012 = vmatpush1.bf16.msra.mxu0 %v915
    %1013 = vmatprep.subr.bf16.mxu0 %v920
    %1014 = vmatpush1.bf16.msra.mxu0 %v919
    %1015 = vmatprep.subr.bf16.mxu0 %v924
    %1016 = vmatpush1.bf16.msra.mxu0 %v923
    %1017 = vmatprep.subr.bf16.mxu0 %v928
    %1018 = vmatpush1.bf16.msra.mxu0 %v927
    %1019 = vmatprep.subr.bf16.mxu0 %v932
    %1020 = vmatpush1.bf16.msra.mxu0 %v931
    %1021 = vmatprep.subr.bf16.mxu0 %v936
    %1022 = vmatpush1.bf16.msra.mxu0 %v935
    %1023 = vmatprep.subr.bf16.mxu0 %v940
    %1024 = vmatpush1.bf16.msra.mxu0 %v939
    %1025 = vmatprep.subr.bf16.mxu0 %v944
    %1026 = vmatpush1.bf16.msra.mxu0 %v943
    %1027 = vmatprep.subr.bf16.mxu0 0
    %1028 = vmatpush1.bf16.msra.mxu0 0
    %1029 = vmatprep.subr.bf16.mxu0 0
    %1030 = vmatpush1.bf16.msra.mxu0 0
    %1031 = vmatprep.subr.bf16.mxu0 0
    %1032 = vmatpush1.bf16.msra.mxu0 0
    %1033 = vmatprep.subr.bf16.mxu0 0
    %1034 = vmatpush1.bf16.msra.mxu0 0
    %1035 = vmatprep.subr.bf16.mxu0 0
    %1036 = vmatpush1.bf16.msra.mxu0 0
    %1037 = vmatprep.subr.bf16.mxu0 0
    %1038 = vmatpush1.bf16.msra.mxu0 0
    %1039 = vmatprep.subr.bf16.mxu0 0
    %1040 = vmatpush1.bf16.msra.mxu0 0
    %1041 = vmatprep.subr.bf16.mxu0 0
    %1042 = vmatpush1.bf16.msra.mxu0 0
    %1043 = vmatprep.mubr.bf16.mxu0 0
    %1044 = vmatmul.mubr.bf16.gmra.mrb[0].mxu0 %v1003
    %v1045 = vpop.f32.mrb[0].mxu0
    %v1046 = vadd.f32 %v950, %v1045
    %v1047 = vpop.f32.mrb[0].mxu0
    %v1048 = vadd.f32 %v950, %v1047
    %v1049 = vpop.f32.mrb[0].mxu0
    %v1050 = vadd.f32 %v955, %v1049
    %v1051 = vpop.f32.mrb[0].mxu0
    %v1052 = vadd.f32 %v955, %v1051
    %1053 = vmatprep.mubr.bf16.mxu0 0
    %1054 = vmatmul.mubr.bf16.gmra.mrb[0].mxu0 %v1004
    %v1055 = vpop.f32.mrb[0].mxu0
    %v1056 = vadd.f32 %v960, %v1055
    %v1057 = vpop.f32.mrb[0].mxu0
    %v1058 = vadd.f32 %v960, %v1057
    %v1059 = vpop.f32.mrb[0].mxu0
    %v1060 = vadd.f32 %v965, %v1059
    %v1061 = vpop.f32.mrb[0].mxu0
    %v1062 = vadd.f32 %v965, %v1061
    %1063 = vmatprep.mubr.bf16.mxu0 0
    %1064 = vmatmul.mubr.bf16.gmra.mrb[0].mxu0 %v1005
    %v1065 = vpop.f32.mrb[0].mxu0
    %v1066 = vadd.f32 %v970, %v1065
    %v1067 = vpop.f32.mrb[0].mxu0
    %v1068 = vadd.f32 %v970, %v1067
    %v1069 = vpop.f32.mrb[0].mxu0
    %v1070 = vadd.f32 %v975, %v1069
    %v1071 = vpop.f32.mrb[0].mxu0
    %v1072 = vadd.f32 %v975, %v1071
    %1073 = vmatprep.mubr.bf16.mxu0 0
    %1074 = vmatmul.mubr.bf16.gmra.mrb[0].mxu0 %v1006
    %v1075 = vpop.f32.mrb[0].mxu0
    %v1076 = vadd.f32 %v980, %v1075
    %v1077 = vpop.f32.mrb[0].mxu0
    %v1078 = vadd.f32 %v980, %v1077
    %v1079 = vpop.f32.mrb[0].mxu0
    %v1080 = vadd.f32 %v985, %v1079
    %v1081 = vpop.f32.mrb[0].mxu0
    %v1082 = vadd.f32 %v985, %v1081
    %1083 = vdwg.mxu0
    %1084 = vmatprep.subr.bf16.mxu0 %v918
    %1085 = vmatpush1.bf16.msra.mxu0 %v917
    %1086 = vmatprep.subr.bf16.mxu0 %v922
    %1087 = vmatpush1.bf16.msra.mxu0 %v921
    %1088 = vmatprep.subr.bf16.mxu0 %v926
    %1089 = vmatpush1.bf16.msra.mxu0 %v925
    %1090 = vmatprep.subr.bf16.mxu0 %v930
    %1091 = vmatpush1.bf16.msra.mxu0 %v929
    %1092 = vmatprep.subr.bf16.mxu0 %v934
    %1093 = vmatpush1.bf16.msra.mxu0 %v933
    %1094 = vmatprep.subr.bf16.mxu0 %v938
    %1095 = vmatpush1.bf16.msra.mxu0 %v937
    %1096 = vmatprep.subr.bf16.mxu0 %v942
    %1097 = vmatpush1.bf16.msra.mxu0 %v941
    %1098 = vmatprep.subr.bf16.mxu0 %v946
    %1099 = vmatpush1.bf16.msra.mxu0 %v945
    %1100 = vmatprep.subr.bf16.mxu0 0
    %1101 = vmatpush1.bf16.msra.mxu0 0
    %1102 = vmatprep.subr.bf16.mxu0 0
    %1103 = vmatpush1.bf16.msra.mxu0 0
    %1104 = vmatprep.subr.bf16.mxu0 0
    %1105 = vmatpush1.bf16.msra.mxu0 0
    %1106 = vmatprep.subr.bf16.mxu0 0
    %1107 = vmatpush1.bf16.msra.mxu0 0
    %1108 = vmatprep.subr.bf16.mxu0 0
    %1109 = vmatpush1.bf16.msra.mxu0 0
    %1110 = vmatprep.subr.bf16.mxu0 0
    %1111 = vmatpush1.bf16.msra.mxu0 0
    %1112 = vmatprep.subr.bf16.mxu0 0
    %1113 = vmatpush1.bf16.msra.mxu0 0
    %1114 = vmatprep.subr.bf16.mxu0 0
    %1115 = vmatpush1.bf16.msra.mxu0 0
    %1116 = vmatprep.mubr.bf16.mxu0 0
    %1117 = vmatmul.mubr.bf16.gmra.mrb[0].mxu0 %v1003
    %v1118 = vpop.f32.mrb[0].mxu0
    %v1119 = vadd.f32 %v950, %v1118
    %v1120 = vpop.f32.mrb[0].mxu0
    %v1121 = vadd.f32 %v950, %v1120
    %v1122 = vpop.f32.mrb[0].mxu0
    %v1123 = vadd.f32 %v955, %v1122
    %v1124 = vpop.f32.mrb[0].mxu0
    %v1125 = vadd.f32 %v955, %v1124
    %1126 = vmatprep.mubr.bf16.mxu0 0
    %1127 = vmatmul.mubr.bf16.gmra.mrb[0].mxu0 %v1004
    %v1128 = vpop.f32.mrb[0].mxu0
    %v1129 = vadd.f32 %v960, %v1128
    %v1130 = vpop.f32.mrb[0].mxu0
    %v1131 = vadd.f32 %v960, %v1130
    %v1132 = vpop.f32.mrb[0].mxu0
    %v1133 = vadd.f32 %v965, %v1132
    %v1134 = vpop.f32.mrb[0].mxu0
    %v1135 = vadd.f32 %v965, %v1134
    %1136 = vmatprep.mubr.bf16.mxu0 0
    %1137 = vmatmul.mubr.bf16.gmra.mrb[0].mxu0 %v1005
    %v1138 = vpop.f32.mrb[0].mxu0
    %v1139 = vadd.f32 %v970, %v1138
    %v1140 = vpop.f32.mrb[0].mxu0
    %v1141 = vadd.f32 %v970, %v1140
    %v1142 = vpop.f32.mrb[0].mxu0
    %v1143 = vadd.f32 %v975, %v1142
    %v1144 = vpop.f32.mrb[0].mxu0
    %v1145 = vadd.f32 %v975, %v1144
    %1146 = vmatprep.mubr.bf16.mxu0 0
    %1147 = vmatmul.mubr.bf16.gmra.mrb[0].mxu0 %v1006
    %v1148 = vpop.f32.mrb[0].mxu0
    %v1149 = vadd.f32 %v980, %v1148
    %v1150 = vpop.f32.mrb[0].mxu0
    %v1151 = vadd.f32 %v980, %v1150
    %v1152 = vpop.f32.mrb[0].mxu0
    %v1153 = vadd.f32 %v985, %v1152
    %v1154 = vpop.f32.mrb[0].mxu0
    %v1155 = vadd.f32 %v985, %v1154
    %1156 = vdwg.mxu0
    %v1157 = vmax.f32 %v1046, 0.0
    %v1158 = vmax.f32 %v1048, 0.0
    %v1159 = vmax.f32 %v1119, 0.0
    %v1160 = vmax.f32 %v1121, 0.0
    %v1161 = vmax.f32 %v1050, 0.0
    %v1162 = vmax.f32 %v1052, 0.0
    %v1163 = vmax.f32 %v1123, 0.0
    %v1164 = vmax.f32 %v1125, 0.0
    %v1165 = vmax.f32 %v1056, 0.0
    %v1166 = vmax.f32 %v1058, 0.0
    %v1167 = vmax.f32 %v1129, 0.0
    %v1168 = vmax.f32 %v1131, 0.0
    %v1169 = vmax.f32 %v1060, 0.0
    %v1170 = vmax.f32 %v1062, 0.0
    %v1171 = vmax.f32 %v1133, 0.0
    %v1172 = vmax.f32 %v1135, 0.0
    %v1173 = vmax.f32 %v1066, 0.0
    %v1174 = vmax.f32 %v1068, 0.0
    %v1175 = vmax.f32 %v1139, 0.0
    %v1176 = vmax.f32 %v1141, 0.0
    %v1177 = vmax.f32 %v1070, 0.0
    %v1178 = vmax.f32 %v1072, 0.0
    %v1179 = vmax.f32 %v1143, 0.0
    %v1180 = vmax.f32 %v1145, 0.0
    %v1181 = vmax.f32 %v1076, 0.0
    %v1182 = vmax.f32 %v1078, 0.0
    %v1183 = vmax.f32 %v1149, 0.0
    %v1184 = vmax.f32 %v1151, 0.0
    %v1185 = vmax.f32 %v1080, 0.0
    %v1186 = vmax.f32 %v1082, 0.0
    %v1187 = vmax.f32 %v1153, 0.0
    %v1188 = vmax.f32 %v1155, 0.0
    %v1189 = vpack.c.bf16 %v1161, %v1157
    %v1190 = vpack.c.bf16 %v1162, %v1158
    %v1191 = vpack.c.bf16 %v1163, %v1159
    %v1192 = vpack.c.bf16 %v1164, %v1160
    %v1193 = vpack.c.bf16 %v1169, %v1165
    %v1194 = vpack.c.bf16 %v1170, %v1166
    %v1195 = vpack.c.bf16 %v1171, %v1167
    %v1196 = vpack.c.bf16 %v1172, %v1168
    %v1197 = vpack.c.bf16 %v1177, %v1173
    %v1198 = vpack.c.bf16 %v1178, %v1174
    %v1199 = vpack.c.bf16 %v1179, %v1175
    %v1200 = vpack.c.bf16 %v1180, %v1176
    %v1201 = vpack.c.bf16 %v1185, %v1181
    %v1202 = vpack.c.bf16 %v1186, %v1182
    %v1203 = vpack.c.bf16 %v1187, %v1183
    %v1204 = vpack.c.bf16 %v1188, %v1184
    %1206 = vset.pattern.permute.xlu0 0
    %1207 = vperm.xlu0 %1206, %v94
    %v1208 = vpop.permute.xlu0 %1207
    %1211 = vset.pattern.permute.xlu0 0
    %1212 = vperm.xlu0 %1211, %v95
    %v1213 = vpop.permute.xlu0 %1212
    %1216 = vset.pattern.permute.xlu0 0
    %1217 = vperm.xlu0 %1216, %v96
    %v1218 = vpop.permute.xlu0 %1217
    %1221 = vset.pattern.permute.xlu0 0
    %1222 = vperm.xlu0 %1221, %v97
    %v1223 = vpop.permute.xlu0 %1222
    %v1229 = vunpack.c.l.b16 %v90
    %v1230 = vunpack.c.l.b16 %v91
    %v1231 = vunpack.c.l.b16 %v92
    %v1232 = vunpack.c.l.b16 %v93
    %v1233 = vpack.c.b16 %v1230, %v1229
    %v1234 = vpack.c.b16 %v1232, %v1231
    %vm1235 = vcmask 523264
    %v1237 = vsel %vm1235, %v1233, 0
    %v1240 = vsel %vm1235, %v1234, 0
    %1242 = vmatprep.subr.bf16.mxu0 %v1190
    %1243 = vmatpush1.bf16.msra.mxu0 %v1189
    %1244 = vmatprep.subr.bf16.mxu0 %v1194
    %1245 = vmatpush1.bf16.msra.mxu0 %v1193
    %1246 = vmatprep.subr.bf16.mxu0 %v1198
    %1247 = vmatpush1.bf16.msra.mxu0 %v1197
    %1248 = vmatprep.subr.bf16.mxu0 %v1202
    %1249 = vmatpush1.bf16.msra.mxu0 %v1201
    %1250 = vmatprep.subr.bf16.mxu0 0
    %1251 = vmatpush1.bf16.msra.mxu0 0
    %1252 = vmatprep.subr.bf16.mxu0 0
    %1253 = vmatpush1.bf16.msra.mxu0 0
    %1254 = vmatprep.subr.bf16.mxu0 0
    %1255 = vmatpush1.bf16.msra.mxu0 0
    %1256 = vmatprep.subr.bf16.mxu0 0
    %1257 = vmatpush1.bf16.msra.mxu0 0
    %1258 = vmatprep.subr.bf16.mxu0 0
    %1259 = vmatpush1.bf16.msra.mxu0 0
    %1260 = vmatprep.subr.bf16.mxu0 0
    %1261 = vmatpush1.bf16.msra.mxu0 0
    %1262 = vmatprep.subr.bf16.mxu0 0
    %1263 = vmatpush1.bf16.msra.mxu0 0
    %1264 = vmatprep.subr.bf16.mxu0 0
    %1265 = vmatpush1.bf16.msra.mxu0 0
    %1266 = vmatprep.subr.bf16.mxu0 0
    %1267 = vmatpush1.bf16.msra.mxu0 0
    %1268 = vmatprep.subr.bf16.mxu0 0
    %1269 = vmatpush1.bf16.msra.mxu0 0
    %1270 = vmatprep.subr.bf16.mxu0 0
    %1271 = vmatpush1.bf16.msra.mxu0 0
    %1272 = vmatprep.subr.bf16.mxu0 0
    %1273 = vmatpush1.bf16.msra.mxu0 0
    %1274 = vmatprep.mubr.bf16.mxu0 0
    %1275 = vmatmul.mubr.bf16.gmra.mrb[0].mxu0 %v1237
    %v1276 = vpop.f32.mrb[0].mxu0
    %v1277 = vadd.f32 %v1208, %v1276
    %v1278 = vpop.f32.mrb[0].mxu0
    %v1279 = vadd.f32 %v1208, %v1278
    %v1280 = vpop.f32.mrb[0].mxu0
    %v1281 = vadd.f32 %v1213, %v1280
    %v1282 = vpop.f32.mrb[0].mxu0
    %v1283 = vadd.f32 %v1213, %v1282
    %1284 = vmatprep.mubr.bf16.mxu0 0
    %1285 = vmatmul.mubr.bf16.gmra.mrb[0].mxu0 %v1240
    %v1286 = vpop.f32.mrb[0].mxu0
    %v1287 = vadd.f32 %v1218, %v1286
    %v1288 = vpop.f32.mrb[0].mxu0
    %v1289 = vadd.f32 %v1218, %v1288
    %v1290 = vpop.f32.mrb[0].mxu0
    %v1291 = vadd.f32 %v1223, %v1290
    %v1292 = vpop.f32.mrb[0].mxu0
    %v1293 = vadd.f32 %v1223, %v1292
    %1294 = vdwg.mxu0
    %1295 = vmatprep.subr.bf16.mxu0 %v1192
    %1296 = vmatpush1.bf16.msra.mxu0 %v1191
    %1297 = vmatprep.subr.bf16.mxu0 %v1196
    %1298 = vmatpush1.bf16.msra.mxu0 %v1195
    %1299 = vmatprep.subr.bf16.mxu0 %v1200
    %1300 = vmatpush1.bf16.msra.mxu0 %v1199
    %1301 = vmatprep.subr.bf16.mxu0 %v1204
    %1302 = vmatpush1.bf16.msra.mxu0 %v1203
    %1303 = vmatprep.subr.bf16.mxu0 0
    %1304 = vmatpush1.bf16.msra.mxu0 0
    %1305 = vmatprep.subr.bf16.mxu0 0
    %1306 = vmatpush1.bf16.msra.mxu0 0
    %1307 = vmatprep.subr.bf16.mxu0 0
    %1308 = vmatpush1.bf16.msra.mxu0 0
    %1309 = vmatprep.subr.bf16.mxu0 0
    %1310 = vmatpush1.bf16.msra.mxu0 0
    %1311 = vmatprep.subr.bf16.mxu0 0
    %1312 = vmatpush1.bf16.msra.mxu0 0
    %1313 = vmatprep.subr.bf16.mxu0 0
    %1314 = vmatpush1.bf16.msra.mxu0 0
    %1315 = vmatprep.subr.bf16.mxu0 0
    %1316 = vmatpush1.bf16.msra.mxu0 0
    %1317 = vmatprep.subr.bf16.mxu0 0
    %1318 = vmatpush1.bf16.msra.mxu0 0
    %1319 = vmatprep.subr.bf16.mxu0 0
    %1320 = vmatpush1.bf16.msra.mxu0 0
    %1321 = vmatprep.subr.bf16.mxu0 0
    %1322 = vmatpush1.bf16.msra.mxu0 0
    %1323 = vmatprep.subr.bf16.mxu0 0
    %1324 = vmatpush1.bf16.msra.mxu0 0
    %1325 = vmatprep.subr.bf16.mxu0 0
    %1326 = vmatpush1.bf16.msra.mxu0 0
    %1327 = vmatprep.mubr.bf16.mxu0 0
    %1328 = vmatmul.mubr.bf16.gmra.mrb[0].mxu0 %v1237
    %v1329 = vpop.f32.mrb[0].mxu0
    %v1330 = vadd.f32 %v1208, %v1329
    %v1331 = vpop.f32.mrb[0].mxu0
    %v1332 = vadd.f32 %v1208, %v1331
    %v1333 = vpop.f32.mrb[0].mxu0
    %v1334 = vadd.f32 %v1213, %v1333
    %v1335 = vpop.f32.mrb[0].mxu0
    %v1336 = vadd.f32 %v1213, %v1335
    %1337 = vmatprep.mubr.bf16.mxu0 0
    %1338 = vmatmul.mubr.bf16.gmra.mrb[0].mxu0 %v1240
    %v1339 = vpop.f32.mrb[0].mxu0
    %v1340 = vadd.f32 %v1218, %v1339
    %v1341 = vpop.f32.mrb[0].mxu0
    %v1342 = vadd.f32 %v1218, %v1341
    %v1343 = vpop.f32.mrb[0].mxu0
    %v1344 = vadd.f32 %v1223, %v1343
    %v1345 = vpop.f32.mrb[0].mxu0
    %v1346 = vadd.f32 %v1223, %v1345
    %1347 = vdwg.mxu0
    %v1348 = vmax.f32 %v1277, 0.0
    %v1349 = vmax.f32 %v1279, 0.0
    %v1350 = vmax.f32 %v1330, 0.0
    %v1351 = vmax.f32 %v1332, 0.0
    %v1352 = vmax.f32 %v1281, 0.0
    %v1353 = vmax.f32 %v1283, 0.0
    %v1354 = vmax.f32 %v1334, 0.0
    %v1355 = vmax.f32 %v1336, 0.0
    %v1356 = vmax.f32 %v1287, 0.0
    %v1357 = vmax.f32 %v1289, 0.0
    %v1358 = vmax.f32 %v1340, 0.0
    %v1359 = vmax.f32 %v1342, 0.0
    %v1360 = vmax.f32 %v1291, 0.0
    %v1361 = vmax.f32 %v1293, 0.0
    %v1362 = vmax.f32 %v1344, 0.0
    %v1363 = vmax.f32 %v1346, 0.0
    %1365 = vset.pattern.permute.xlu0 0
    %1366 = vperm.xlu0 %1365, %v98
    %v1367 = vpop.permute.xlu0 %1366
    %1370 = vset.pattern.permute.xlu0 0
    %1371 = vperm.xlu0 %1370, %v99
    %v1372 = vpop.permute.xlu0 %1371
    %1375 = vset.pattern.permute.xlu0 0
    %1376 = vperm.xlu0 %1375, %v100
    %v1377 = vpop.permute.xlu0 %1376
    %1380 = vset.pattern.permute.xlu0 0
    %1381 = vperm.xlu0 %1380, %v101
    %v1382 = vpop.permute.xlu0 %1381
    %v1384 = vmul.f32 %v1348, %v1367
    %v1385 = vmul.f32 %v1349, %v1367
    %v1386 = vmul.f32 %v1350, %v1367
    %v1387 = vmul.f32 %v1351, %v1367
    %v1388 = vmul.f32 %v1352, %v1372
    %v1389 = vmul.f32 %v1353, %v1372
    %v1390 = vmul.f32 %v1354, %v1372
    %v1391 = vmul.f32 %v1355, %v1372
    %v1392 = vmul.f32 %v1356, %v1377
    %v1393 = vmul.f32 %v1357, %v1377
    %v1394 = vmul.f32 %v1358, %v1377
    %v1395 = vmul.f32 %v1359, %v1377
    %v1396 = vmul.f32 %v1360, %v1382
    %v1397 = vmul.f32 %v1361, %v1382
    %v1398 = vmul.f32 %v1362, %v1382
    %v1399 = vmul.f32 %v1363, %v1382
    %v1400 = vadd.f32 %v1384, %v1388
    %v1401 = vadd.f32 %v1400, %v1392
    %v1402 = vadd.f32 %v1401, %v1396
    %v1403 = vrot.slane %v1402, 4
    %v1404 = vadd.f32 %v1402, %v1403
    %v1405 = vrot.slane %v1404, 2
    %v1406 = vadd.f32 %v1404, %v1405
    %v1407 = vrot.slane %v1406, 1
    %v1408 = vadd.f32 %v1406, %v1407
    %v1409 = vadd.f32 %v1385, %v1389
    %v1410 = vadd.f32 %v1409, %v1393
    %v1411 = vadd.f32 %v1410, %v1397
    %v1412 = vrot.slane %v1411, 4
    %v1413 = vadd.f32 %v1411, %v1412
    %v1414 = vrot.slane %v1413, 2
    %v1415 = vadd.f32 %v1413, %v1414
    %v1416 = vrot.slane %v1415, 1
    %v1417 = vadd.f32 %v1415, %v1416
    %v1418 = vadd.f32 %v1386, %v1390
    %v1419 = vadd.f32 %v1418, %v1394
    %v1420 = vadd.f32 %v1419, %v1398
    %v1421 = vrot.slane %v1420, 4
    %v1422 = vadd.f32 %v1420, %v1421
    %v1423 = vrot.slane %v1422, 2
    %v1424 = vadd.f32 %v1422, %v1423
    %v1425 = vrot.slane %v1424, 1
    %v1426 = vadd.f32 %v1424, %v1425
    %v1427 = vadd.f32 %v1387, %v1391
    %v1428 = vadd.f32 %v1427, %v1395
    %v1429 = vadd.f32 %v1428, %v1399
    %v1430 = vrot.slane %v1429, 4
    %v1431 = vadd.f32 %v1429, %v1430
    %v1432 = vrot.slane %v1431, 2
    %v1433 = vadd.f32 %v1431, %v1432
    %v1434 = vrot.slane %v1433, 1
    %v1435 = vadd.f32 %v1433, %v1434
    %1437 = vset.pattern.permute.xlu0 0
    %1438 = vperm.xlu0 %1437, %v102
    %v1439 = vpop.permute.xlu0 %1438
    %v1441 = vlaneseq
    %v1442 = vshrl.u32 %v1441, 7
    %v1443 = vsub.s32 0, %v1442
    %v1444 = vrot.slane %v1439, %v1443
    %v1445 = vadd.f32 %v1408, %v1444
    %v1446 = vadd.f32 %v1417, %v1444
    %v1447 = vadd.f32 %v1426, %v1444
    %v1448 = vadd.f32 %v1435, %v1444
    %v1449 = vsub.f32 0.0, %v1445
    %v1450 = vsub.f32 0.0, %v1446
    %v1451 = vsub.f32 0.0, %v1447
    %v1452 = vsub.f32 0.0, %v1448
    %v1453 = vmul.f32 %v1449, 1.442695
    %v1454 = vpow.pop %v1453
    %v1455 = vmul.f32 %v1450, 1.442695
    %v1456 = vpow.pop %v1455
    %v1457 = vmul.f32 %v1451, 1.442695
    %v1458 = vpow.pop %v1457
    %v1459 = vmul.f32 %v1452, 1.442695
    %v1460 = vpow.pop %v1459
    %v1461 = vadd.f32 %v1454, 1.0
    %v1462 = vadd.f32 %v1456, 1.0
    %v1463 = vadd.f32 %v1458, 1.0
    %v1464 = vadd.f32 %v1460, 1.0
    %v1465 = vrcp.pop %v1461
    %v1466 = vrcp.pop %v1462
    %v1467 = vrcp.pop %v1463
    %v1468 = vrcp.pop %v1464
    %v1473 = vcombine.low %v1465, %v1466
    %v1474 = vcombine.low %v1467, %v1468
    %v1476 = vunpack.c.l.s4 1966171168
    %v1477 = vunpack.c.0.s8 %v1476
    %v1478 = vlaneseq
    %v1479 = vshrl.u32 %v1478, 7
    %v1480 = vsub.s32 %v1477, %v1479
    %v1481 = vrot.slane %v1473, %v1480
    %v1483 = vunpack.c.l.s4 1966171168
    %v1484 = vunpack.c.0.s8 %v1483
    %v1485 = vlaneseq
    %v1486 = vshrl.u32 %v1485, 7
    %v1487 = vsub.s32 %v1484, %v1486
    %v1488 = vrot.slane %v1474, %v1487
    %v1489 = vcombine.low %v1481, %v1488
    %v1491 = vunpack.c.l.s4 1966171168
    %v1492 = vunpack.c.0.s8 %v1491
    %v1493 = vlaneseq
    %v1494 = vshrl.u32 %v1493, 7
    %v1495 = vsub.s32 %v1492, %v1494
    %v1496 = vrot.slane %v1489, %v1495
    %v1498 = vlaneseq
    %vm1499 = vcmp.ge.s32.totalorder %v1498, 0
    %vm1500 = vcmp.lt.s32.totalorder %v1498, 512
    %vm1501 = vmand %vm1499, %vm1500
    %1502 = vst.msk [vmem:[#allocation3] sm:$0xf] %vm1501, %v1496
    %s1503 = scalar_lea.vmem %s0, 4
    %v1504 = vld [vmem:[%s1503] sm:$0xf]
    %v1505 = vcvt.s32.f32 %v1504
    %s1506 = scalar_lea.vmem %s1, 4
    %v1507 = vld [vmem:[%s1506] sm:$0xf]
    %v1508 = vcvt.s32.f32 %v1507
    %s1509 = scalar_lea.vmem %s2, 4
    %v1510 = vld [vmem:[%s1509] sm:$0xf]
    %v1511 = vcvt.s32.f32 %v1510
    %v1512 = vsub.f32 %v1511, 1.0
    %v1513 = vrcp.pop %v1512
    %v1514 = vmul.f32 1.0, %v1513
    %v1515 = vmul.f32 %v1505, %v1514
    %v1516 = vsub.f32 %v1508, 1.0
    %v1517 = vmul.f32 %v1516, %v1514
    %v1518 = vmul.f32 %v1511, 0.11111111
    %v1520 = vlaneseq
    %v1521 = vshrl.u32 %v1520, 7
    %v1522 = vsub.s32 0, %v1521
    %v1523 = vrot.slane %v1515, %v1522
    %v1524 = vlaneseq
    %v1525 = vshrl.u32 %v1524, 7
    %v1526 = vsub.s32 1, %v1525
    %v1527 = vrot.slane %v1515, %v1526
    %v1528 = vlaneseq
    %v1529 = vshrl.u32 %v1528, 7
    %v1530 = vsub.s32 2, %v1529
    %v1531 = vrot.slane %v1515, %v1530
    %v1532 = vlaneseq
    %v1533 = vshrl.u32 %v1532, 7
    %v1534 = vsub.s32 3, %v1533
    %v1535 = vrot.slane %v1515, %v1534
    %v1540 = vmul.f32 %v119, %v1523
    %v1541 = vmul.f32 %v119, %v1527
    %v1542 = vmul.f32 %v119, %v1531
    %v1543 = vmul.f32 %v119, %v1535
    %v1544 = vmul.f32 %v124, %v1523
    %v1545 = vmul.f32 %v124, %v1527
    %v1546 = vmul.f32 %v124, %v1531
    %v1547 = vmul.f32 %v124, %v1535
    %v1548 = vmul.f32 %v129, %v1523
    %v1549 = vmul.f32 %v129, %v1527
    %v1550 = vmul.f32 %v129, %v1531
    %v1551 = vmul.f32 %v129, %v1535
    %v1552 = vmul.f32 %v134, %v1523
    %v1553 = vmul.f32 %v134, %v1527
    %v1554 = vmul.f32 %v134, %v1531
    %v1555 = vmul.f32 %v134, %v1535
    %v1556 = vmul.f32 %v139, %v1523
    %v1557 = vmul.f32 %v139, %v1527
    %v1558 = vmul.f32 %v139, %v1531
    %v1559 = vmul.f32 %v139, %v1535
    %v1560 = vmul.f32 %v144, %v1523
    %v1561 = vmul.f32 %v144, %v1527
    %v1562 = vmul.f32 %v144, %v1531
    %v1563 = vmul.f32 %v144, %v1535
    %v1564 = vmul.f32 %v149, %v1523
    %v1565 = vmul.f32 %v149, %v1527
    %v1566 = vmul.f32 %v149, %v1531
    %v1567 = vmul.f32 %v149, %v1535
    %v1568 = vmul.f32 %v154, %v1523
    %v1569 = vmul.f32 %v154, %v1527
    %v1570 = vmul.f32 %v154, %v1531
    %v1571 = vmul.f32 %v154, %v1535
    %v1572 = vmul.f32 %v159, %v1523
    %v1573 = vmul.f32 %v159, %v1527
    %v1574 = vmul.f32 %v159, %v1531
    %v1575 = vmul.f32 %v159, %v1535
    %v1576 = vmul.f32 %v164, %v1523
    %v1577 = vmul.f32 %v164, %v1527
    %v1578 = vmul.f32 %v164, %v1531
    %v1579 = vmul.f32 %v164, %v1535
    %v1580 = vmul.f32 %v169, %v1523
    %v1581 = vmul.f32 %v169, %v1527
    %v1582 = vmul.f32 %v169, %v1531
    %v1583 = vmul.f32 %v169, %v1535
    %v1584 = vmul.f32 %v174, %v1523
    %v1585 = vmul.f32 %v174, %v1527
    %v1586 = vmul.f32 %v174, %v1531
    %v1587 = vmul.f32 %v174, %v1535
    %v1588 = vmul.f32 %v179, %v1523
    %v1589 = vmul.f32 %v179, %v1527
    %v1590 = vmul.f32 %v179, %v1531
    %v1591 = vmul.f32 %v179, %v1535
    %v1592 = vmul.f32 %v184, %v1523
    %v1593 = vmul.f32 %v184, %v1527
    %v1594 = vmul.f32 %v184, %v1531
    %v1595 = vmul.f32 %v184, %v1535
    %v1596 = vmul.f32 %v189, %v1523
    %v1597 = vmul.f32 %v189, %v1527
    %v1598 = vmul.f32 %v189, %v1531
    %v1599 = vmul.f32 %v189, %v1535
    %v1600 = vmul.f32 %v194, %v1523
    %v1601 = vmul.f32 %v194, %v1527
    %v1602 = vmul.f32 %v194, %v1531
    %v1603 = vmul.f32 %v194, %v1535
    %v1605 = vlaneseq
    %v1606 = vshrl.u32 %v1605, 7
    %v1607 = vsub.s32 0, %v1606
    %v1608 = vrot.slane %v1517, %v1607
    %v1609 = vlaneseq
    %v1610 = vshrl.u32 %v1609, 7
    %v1611 = vsub.s32 1, %v1610
    %v1612 = vrot.slane %v1517, %v1611
    %v1613 = vlaneseq
    %v1614 = vshrl.u32 %v1613, 7
    %v1615 = vsub.s32 2, %v1614
    %v1616 = vrot.slane %v1517, %v1615
    %v1617 = vlaneseq
    %v1618 = vshrl.u32 %v1617, 7
    %v1619 = vsub.s32 3, %v1618
    %v1620 = vrot.slane %v1517, %v1619
    %v1625 = vmul.f32 %v283, %v1608
    %v1626 = vmul.f32 %v283, %v1612
    %v1627 = vmul.f32 %v283, %v1616
    %v1628 = vmul.f32 %v283, %v1620
    %v1629 = vmul.f32 %v287, %v1608
    %v1630 = vmul.f32 %v287, %v1612
    %v1631 = vmul.f32 %v287, %v1616
    %v1632 = vmul.f32 %v287, %v1620
    %v1633 = vmul.f32 %v291, %v1608
    %v1634 = vmul.f32 %v291, %v1612
    %v1635 = vmul.f32 %v291, %v1616
    %v1636 = vmul.f32 %v291, %v1620
    %v1637 = vmul.f32 %v295, %v1608
    %v1638 = vmul.f32 %v295, %v1612
    %v1639 = vmul.f32 %v295, %v1616
    %v1640 = vmul.f32 %v295, %v1620
    %v1641 = vmul.f32 %v299, %v1608
    %v1642 = vmul.f32 %v299, %v1612
    %v1643 = vmul.f32 %v299, %v1616
    %v1644 = vmul.f32 %v299, %v1620
    %v1645 = vmul.f32 %v303, %v1608
    %v1646 = vmul.f32 %v303, %v1612
    %v1647 = vmul.f32 %v303, %v1616
    %v1648 = vmul.f32 %v303, %v1620
    %v1649 = vmul.f32 %v307, %v1608
    %v1650 = vmul.f32 %v307, %v1612
    %v1651 = vmul.f32 %v307, %v1616
    %v1652 = vmul.f32 %v307, %v1620
    %v1653 = vmul.f32 %v311, %v1608
    %v1654 = vmul.f32 %v311, %v1612
    %v1655 = vmul.f32 %v311, %v1616
    %v1656 = vmul.f32 %v311, %v1620
    %v1657 = vmul.f32 %v315, %v1608
    %v1658 = vmul.f32 %v315, %v1612
    %v1659 = vmul.f32 %v315, %v1616
    %v1660 = vmul.f32 %v315, %v1620
    %v1661 = vmul.f32 %v319, %v1608
    %v1662 = vmul.f32 %v319, %v1612
    %v1663 = vmul.f32 %v319, %v1616
    %v1664 = vmul.f32 %v319, %v1620
    %v1665 = vmul.f32 %v323, %v1608
    %v1666 = vmul.f32 %v323, %v1612
    %v1667 = vmul.f32 %v323, %v1616
    %v1668 = vmul.f32 %v323, %v1620
    %v1669 = vmul.f32 %v327, %v1608
    %v1670 = vmul.f32 %v327, %v1612
    %v1671 = vmul.f32 %v327, %v1616
    %v1672 = vmul.f32 %v327, %v1620
    %v1673 = vmul.f32 %v331, %v1608
    %v1674 = vmul.f32 %v331, %v1612
    %v1675 = vmul.f32 %v331, %v1616
    %v1676 = vmul.f32 %v331, %v1620
    %v1677 = vmul.f32 %v335, %v1608
    %v1678 = vmul.f32 %v335, %v1612
    %v1679 = vmul.f32 %v335, %v1616
    %v1680 = vmul.f32 %v335, %v1620
    %v1681 = vmul.f32 %v339, %v1608
    %v1682 = vmul.f32 %v339, %v1612
    %v1683 = vmul.f32 %v339, %v1616
    %v1684 = vmul.f32 %v339, %v1620
    %v1685 = vmul.f32 %v343, %v1608
    %v1686 = vmul.f32 %v343, %v1612
    %v1687 = vmul.f32 %v343, %v1616
    %v1688 = vmul.f32 %v343, %v1620
    %v1689 = vadd.f32 %v1540, %v1625
    %v1690 = vadd.f32 %v1541, %v1626
    %v1691 = vadd.f32 %v1542, %v1627
    %v1692 = vadd.f32 %v1543, %v1628
    %v1693 = vadd.f32 %v1544, %v1629
    %v1694 = vadd.f32 %v1545, %v1630
    %v1695 = vadd.f32 %v1546, %v1631
    %v1696 = vadd.f32 %v1547, %v1632
    %v1697 = vadd.f32 %v1548, %v1633
    %v1698 = vadd.f32 %v1549, %v1634
    %v1699 = vadd.f32 %v1550, %v1635
    %v1700 = vadd.f32 %v1551, %v1636
    %v1701 = vadd.f32 %v1552, %v1637
    %v1702 = vadd.f32 %v1553, %v1638
    %v1703 = vadd.f32 %v1554, %v1639
    %v1704 = vadd.f32 %v1555, %v1640
    %v1705 = vadd.f32 %v1556, %v1641
    %v1706 = vadd.f32 %v1557, %v1642
    %v1707 = vadd.f32 %v1558, %v1643
    %v1708 = vadd.f32 %v1559, %v1644
    %v1709 = vadd.f32 %v1560, %v1645
    %v1710 = vadd.f32 %v1561, %v1646
    %v1711 = vadd.f32 %v1562, %v1647
    %v1712 = vadd.f32 %v1563, %v1648
    %v1713 = vadd.f32 %v1564, %v1649
    %v1714 = vadd.f32 %v1565, %v1650
    %v1715 = vadd.f32 %v1566, %v1651
    %v1716 = vadd.f32 %v1567, %v1652
    %v1717 = vadd.f32 %v1568, %v1653
    %v1718 = vadd.f32 %v1569, %v1654
    %v1719 = vadd.f32 %v1570, %v1655
    %v1720 = vadd.f32 %v1571, %v1656
    %v1721 = vadd.f32 %v1572, %v1657
    %v1722 = vadd.f32 %v1573, %v1658
    %v1723 = vadd.f32 %v1574, %v1659
    %v1724 = vadd.f32 %v1575, %v1660
    %v1725 = vadd.f32 %v1576, %v1661
    %v1726 = vadd.f32 %v1577, %v1662
    %v1727 = vadd.f32 %v1578, %v1663
    %v1728 = vadd.f32 %v1579, %v1664
    %v1729 = vadd.f32 %v1580, %v1665
    %v1730 = vadd.f32 %v1581, %v1666
    %v1731 = vadd.f32 %v1582, %v1667
    %v1732 = vadd.f32 %v1583, %v1668
    %v1733 = vadd.f32 %v1584, %v1669
    %v1734 = vadd.f32 %v1585, %v1670
    %v1735 = vadd.f32 %v1586, %v1671
    %v1736 = vadd.f32 %v1587, %v1672
    %v1737 = vadd.f32 %v1588, %v1673
    %v1738 = vadd.f32 %v1589, %v1674
    %v1739 = vadd.f32 %v1590, %v1675
    %v1740 = vadd.f32 %v1591, %v1676
    %v1741 = vadd.f32 %v1592, %v1677
    %v1742 = vadd.f32 %v1593, %v1678
    %v1743 = vadd.f32 %v1594, %v1679
    %v1744 = vadd.f32 %v1595, %v1680
    %v1745 = vadd.f32 %v1596, %v1681
    %v1746 = vadd.f32 %v1597, %v1682
    %v1747 = vadd.f32 %v1598, %v1683
    %v1748 = vadd.f32 %v1599, %v1684
    %v1749 = vadd.f32 %v1600, %v1685
    %v1750 = vadd.f32 %v1601, %v1686
    %v1751 = vadd.f32 %v1602, %v1687
    %v1752 = vadd.f32 %v1603, %v1688
    %v1754 = vlaneseq
    %v1755 = vshrl.u32 %v1754, 7
    %v1756 = vsub.s32 0, %v1755
    %v1757 = vrot.slane %v1518, %v1756
    %v1758 = vlaneseq
    %v1759 = vshrl.u32 %v1758, 7
    %v1760 = vsub.s32 1, %v1759
    %v1761 = vrot.slane %v1518, %v1760
    %v1762 = vlaneseq
    %v1763 = vshrl.u32 %v1762, 7
    %v1764 = vsub.s32 2, %v1763
    %v1765 = vrot.slane %v1518, %v1764
    %v1766 = vlaneseq
    %v1767 = vshrl.u32 %v1766, 7
    %v1768 = vsub.s32 3, %v1767
    %v1769 = vrot.slane %v1518, %v1768
    %v1774 = vmul.f32 %v496, %v1757
    %v1775 = vmul.f32 %v496, %v1761
    %v1776 = vmul.f32 %v496, %v1765
    %v1777 = vmul.f32 %v496, %v1769
    %v1778 = vmul.f32 %v500, %v1757
    %v1779 = vmul.f32 %v500, %v1761
    %v1780 = vmul.f32 %v500, %v1765
    %v1781 = vmul.f32 %v500, %v1769
    %v1782 = vmul.f32 %v504, %v1757
    %v1783 = vmul.f32 %v504, %v1761
    %v1784 = vmul.f32 %v504, %v1765
    %v1785 = vmul.f32 %v504, %v1769
    %v1786 = vmul.f32 %v508, %v1757
    %v1787 = vmul.f32 %v508, %v1761
    %v1788 = vmul.f32 %v508, %v1765
    %v1789 = vmul.f32 %v508, %v1769
    %v1790 = vmul.f32 %v512, %v1757
    %v1791 = vmul.f32 %v512, %v1761
    %v1792 = vmul.f32 %v512, %v1765
    %v1793 = vmul.f32 %v512, %v1769
    %v1794 = vmul.f32 %v516, %v1757
    %v1795 = vmul.f32 %v516, %v1761
    %v1796 = vmul.f32 %v516, %v1765
    %v1797 = vmul.f32 %v516, %v1769
    %v1798 = vmul.f32 %v520, %v1757
    %v1799 = vmul.f32 %v520, %v1761
    %v1800 = vmul.f32 %v520, %v1765
    %v1801 = vmul.f32 %v520, %v1769
    %v1802 = vmul.f32 %v524, %v1757
    %v1803 = vmul.f32 %v524, %v1761
    %v1804 = vmul.f32 %v524, %v1765
    %v1805 = vmul.f32 %v524, %v1769
    %v1806 = vmul.f32 %v528, %v1757
    %v1807 = vmul.f32 %v528, %v1761
    %v1808 = vmul.f32 %v528, %v1765
    %v1809 = vmul.f32 %v528, %v1769
    %v1810 = vmul.f32 %v532, %v1757
    %v1811 = vmul.f32 %v532, %v1761
    %v1812 = vmul.f32 %v532, %v1765
    %v1813 = vmul.f32 %v532, %v1769
    %v1814 = vmul.f32 %v536, %v1757
    %v1815 = vmul.f32 %v536, %v1761
    %v1816 = vmul.f32 %v536, %v1765
    %v1817 = vmul.f32 %v536, %v1769
    %v1818 = vmul.f32 %v540, %v1757
    %v1819 = vmul.f32 %v540, %v1761
    %v1820 = vmul.f32 %v540, %v1765
    %v1821 = vmul.f32 %v540, %v1769
    %v1822 = vmul.f32 %v544, %v1757
    %v1823 = vmul.f32 %v544, %v1761
    %v1824 = vmul.f32 %v544, %v1765
    %v1825 = vmul.f32 %v544, %v1769
    %v1826 = vmul.f32 %v548, %v1757
    %v1827 = vmul.f32 %v548, %v1761
    %v1828 = vmul.f32 %v548, %v1765
    %v1829 = vmul.f32 %v548, %v1769
    %v1830 = vmul.f32 %v552, %v1757
    %v1831 = vmul.f32 %v552, %v1761
    %v1832 = vmul.f32 %v552, %v1765
    %v1833 = vmul.f32 %v552, %v1769
    %v1834 = vmul.f32 %v556, %v1757
    %v1835 = vmul.f32 %v556, %v1761
    %v1836 = vmul.f32 %v556, %v1765
    %v1837 = vmul.f32 %v556, %v1769
    %v1838 = vadd.f32 %v1689, %v1774
    %v1839 = vadd.f32 %v1690, %v1775
    %v1840 = vadd.f32 %v1691, %v1776
    %v1841 = vadd.f32 %v1692, %v1777
    %v1842 = vadd.f32 %v1693, %v1778
    %v1843 = vadd.f32 %v1694, %v1779
    %v1844 = vadd.f32 %v1695, %v1780
    %v1845 = vadd.f32 %v1696, %v1781
    %v1846 = vadd.f32 %v1697, %v1782
    %v1847 = vadd.f32 %v1698, %v1783
    %v1848 = vadd.f32 %v1699, %v1784
    %v1849 = vadd.f32 %v1700, %v1785
    %v1850 = vadd.f32 %v1701, %v1786
    %v1851 = vadd.f32 %v1702, %v1787
    %v1852 = vadd.f32 %v1703, %v1788
    %v1853 = vadd.f32 %v1704, %v1789
    %v1854 = vadd.f32 %v1705, %v1790
    %v1855 = vadd.f32 %v1706, %v1791
    %v1856 = vadd.f32 %v1707, %v1792
    %v1857 = vadd.f32 %v1708, %v1793
    %v1858 = vadd.f32 %v1709, %v1794
    %v1859 = vadd.f32 %v1710, %v1795
    %v1860 = vadd.f32 %v1711, %v1796
    %v1861 = vadd.f32 %v1712, %v1797
    %v1862 = vadd.f32 %v1713, %v1798
    %v1863 = vadd.f32 %v1714, %v1799
    %v1864 = vadd.f32 %v1715, %v1800
    %v1865 = vadd.f32 %v1716, %v1801
    %v1866 = vadd.f32 %v1717, %v1802
    %v1867 = vadd.f32 %v1718, %v1803
    %v1868 = vadd.f32 %v1719, %v1804
    %v1869 = vadd.f32 %v1720, %v1805
    %v1870 = vadd.f32 %v1721, %v1806
    %v1871 = vadd.f32 %v1722, %v1807
    %v1872 = vadd.f32 %v1723, %v1808
    %v1873 = vadd.f32 %v1724, %v1809
    %v1874 = vadd.f32 %v1725, %v1810
    %v1875 = vadd.f32 %v1726, %v1811
    %v1876 = vadd.f32 %v1727, %v1812
    %v1877 = vadd.f32 %v1728, %v1813
    %v1878 = vadd.f32 %v1729, %v1814
    %v1879 = vadd.f32 %v1730, %v1815
    %v1880 = vadd.f32 %v1731, %v1816
    %v1881 = vadd.f32 %v1732, %v1817
    %v1882 = vadd.f32 %v1733, %v1818
    %v1883 = vadd.f32 %v1734, %v1819
    %v1884 = vadd.f32 %v1735, %v1820
    %v1885 = vadd.f32 %v1736, %v1821
    %v1886 = vadd.f32 %v1737, %v1822
    %v1887 = vadd.f32 %v1738, %v1823
    %v1888 = vadd.f32 %v1739, %v1824
    %v1889 = vadd.f32 %v1740, %v1825
    %v1890 = vadd.f32 %v1741, %v1826
    %v1891 = vadd.f32 %v1742, %v1827
    %v1892 = vadd.f32 %v1743, %v1828
    %v1893 = vadd.f32 %v1744, %v1829
    %v1894 = vadd.f32 %v1745, %v1830
    %v1895 = vadd.f32 %v1746, %v1831
    %v1896 = vadd.f32 %v1747, %v1832
    %v1897 = vadd.f32 %v1748, %v1833
    %v1898 = vadd.f32 %v1749, %v1834
    %v1899 = vadd.f32 %v1750, %v1835
    %v1900 = vadd.f32 %v1751, %v1836
    %v1901 = vadd.f32 %v1752, %v1837
    %v1902 = vadd.f32 %v1838, %v710
    %v1903 = vadd.f32 %v1839, %v710
    %v1904 = vadd.f32 %v1840, %v710
    %v1905 = vadd.f32 %v1841, %v710
    %v1906 = vadd.f32 %v1842, %v715
    %v1907 = vadd.f32 %v1843, %v715
    %v1908 = vadd.f32 %v1844, %v715
    %v1909 = vadd.f32 %v1845, %v715
    %v1910 = vadd.f32 %v1846, %v720
    %v1911 = vadd.f32 %v1847, %v720
    %v1912 = vadd.f32 %v1848, %v720
    %v1913 = vadd.f32 %v1849, %v720
    %v1914 = vadd.f32 %v1850, %v725
    %v1915 = vadd.f32 %v1851, %v725
    %v1916 = vadd.f32 %v1852, %v725
    %v1917 = vadd.f32 %v1853, %v725
    %v1918 = vadd.f32 %v1854, %v730
    %v1919 = vadd.f32 %v1855, %v730
    %v1920 = vadd.f32 %v1856, %v730
    %v1921 = vadd.f32 %v1857, %v730
    %v1922 = vadd.f32 %v1858, %v735
    %v1923 = vadd.f32 %v1859, %v735
    %v1924 = vadd.f32 %v1860, %v735
    %v1925 = vadd.f32 %v1861, %v735
    %v1926 = vadd.f32 %v1862, %v740
    %v1927 = vadd.f32 %v1863, %v740
    %v1928 = vadd.f32 %v1864, %v740
    %v1929 = vadd.f32 %v1865, %v740
    %v1930 = vadd.f32 %v1866, %v745
    %v1931 = vadd.f32 %v1867, %v745
    %v1932 = vadd.f32 %v1868, %v745
    %v1933 = vadd.f32 %v1869, %v745
    %v1934 = vadd.f32 %v1870, %v750
    %v1935 = vadd.f32 %v1871, %v750
    %v1936 = vadd.f32 %v1872, %v750
    %v1937 = vadd.f32 %v1873, %v750
    %v1938 = vadd.f32 %v1874, %v755
    %v1939 = vadd.f32 %v1875, %v755
    %v1940 = vadd.f32 %v1876, %v755
    %v1941 = vadd.f32 %v1877, %v755
    %v1942 = vadd.f32 %v1878, %v760
    %v1943 = vadd.f32 %v1879, %v760
    %v1944 = vadd.f32 %v1880, %v760
    %v1945 = vadd.f32 %v1881, %v760
    %v1946 = vadd.f32 %v1882, %v765
    %v1947 = vadd.f32 %v1883, %v765
    %v1948 = vadd.f32 %v1884, %v765
    %v1949 = vadd.f32 %v1885, %v765
    %v1950 = vadd.f32 %v1886, %v770
    %v1951 = vadd.f32 %v1887, %v770
    %v1952 = vadd.f32 %v1888, %v770
    %v1953 = vadd.f32 %v1889, %v770
    %v1954 = vadd.f32 %v1890, %v775
    %v1955 = vadd.f32 %v1891, %v775
    %v1956 = vadd.f32 %v1892, %v775
    %v1957 = vadd.f32 %v1893, %v775
    %v1958 = vadd.f32 %v1894, %v780
    %v1959 = vadd.f32 %v1895, %v780
    %v1960 = vadd.f32 %v1896, %v780
    %v1961 = vadd.f32 %v1897, %v780
    %v1962 = vadd.f32 %v1898, %v785
    %v1963 = vadd.f32 %v1899, %v785
    %v1964 = vadd.f32 %v1900, %v785
    %v1965 = vadd.f32 %v1901, %v785
    %v1966 = vmax.f32 %v1902, 0.0
    %v1967 = vmax.f32 %v1903, 0.0
    %v1968 = vmax.f32 %v1904, 0.0
    %v1969 = vmax.f32 %v1905, 0.0
    %v1970 = vmax.f32 %v1906, 0.0
    %v1971 = vmax.f32 %v1907, 0.0
    %v1972 = vmax.f32 %v1908, 0.0
    %v1973 = vmax.f32 %v1909, 0.0
    %v1974 = vmax.f32 %v1910, 0.0
    %v1975 = vmax.f32 %v1911, 0.0
    %v1976 = vmax.f32 %v1912, 0.0
    %v1977 = vmax.f32 %v1913, 0.0
    %v1978 = vmax.f32 %v1914, 0.0
    %v1979 = vmax.f32 %v1915, 0.0
    %v1980 = vmax.f32 %v1916, 0.0
    %v1981 = vmax.f32 %v1917, 0.0
    %v1982 = vmax.f32 %v1918, 0.0
    %v1983 = vmax.f32 %v1919, 0.0
    %v1984 = vmax.f32 %v1920, 0.0
    %v1985 = vmax.f32 %v1921, 0.0
    %v1986 = vmax.f32 %v1922, 0.0
    %v1987 = vmax.f32 %v1923, 0.0
    %v1988 = vmax.f32 %v1924, 0.0
    %v1989 = vmax.f32 %v1925, 0.0
    %v1990 = vmax.f32 %v1926, 0.0
    %v1991 = vmax.f32 %v1927, 0.0
    %v1992 = vmax.f32 %v1928, 0.0
    %v1993 = vmax.f32 %v1929, 0.0
    %v1994 = vmax.f32 %v1930, 0.0
    %v1995 = vmax.f32 %v1931, 0.0
    %v1996 = vmax.f32 %v1932, 0.0
    %v1997 = vmax.f32 %v1933, 0.0
    %v1998 = vmax.f32 %v1934, 0.0
    %v1999 = vmax.f32 %v1935, 0.0
    %v2000 = vmax.f32 %v1936, 0.0
    %v2001 = vmax.f32 %v1937, 0.0
    %v2002 = vmax.f32 %v1938, 0.0
    %v2003 = vmax.f32 %v1939, 0.0
    %v2004 = vmax.f32 %v1940, 0.0
    %v2005 = vmax.f32 %v1941, 0.0
    %v2006 = vmax.f32 %v1942, 0.0
    %v2007 = vmax.f32 %v1943, 0.0
    %v2008 = vmax.f32 %v1944, 0.0
    %v2009 = vmax.f32 %v1945, 0.0
    %v2010 = vmax.f32 %v1946, 0.0
    %v2011 = vmax.f32 %v1947, 0.0
    %v2012 = vmax.f32 %v1948, 0.0
    %v2013 = vmax.f32 %v1949, 0.0
    %v2014 = vmax.f32 %v1950, 0.0
    %v2015 = vmax.f32 %v1951, 0.0
    %v2016 = vmax.f32 %v1952, 0.0
    %v2017 = vmax.f32 %v1953, 0.0
    %v2018 = vmax.f32 %v1954, 0.0
    %v2019 = vmax.f32 %v1955, 0.0
    %v2020 = vmax.f32 %v1956, 0.0
    %v2021 = vmax.f32 %v1957, 0.0
    %v2022 = vmax.f32 %v1958, 0.0
    %v2023 = vmax.f32 %v1959, 0.0
    %v2024 = vmax.f32 %v1960, 0.0
    %v2025 = vmax.f32 %v1961, 0.0
    %v2026 = vmax.f32 %v1962, 0.0
    %v2027 = vmax.f32 %v1963, 0.0
    %v2028 = vmax.f32 %v1964, 0.0
    %v2029 = vmax.f32 %v1965, 0.0
    %v2030 = vpack.c.bf16 %v1970, %v1966
    %v2031 = vpack.c.bf16 %v1971, %v1967
    %v2032 = vpack.c.bf16 %v1972, %v1968
    %v2033 = vpack.c.bf16 %v1973, %v1969
    %v2034 = vpack.c.bf16 %v1978, %v1974
    %v2035 = vpack.c.bf16 %v1979, %v1975
    %v2036 = vpack.c.bf16 %v1980, %v1976
    %v2037 = vpack.c.bf16 %v1981, %v1977
    %v2038 = vpack.c.bf16 %v1986, %v1982
    %v2039 = vpack.c.bf16 %v1987, %v1983
    %v2040 = vpack.c.bf16 %v1988, %v1984
    %v2041 = vpack.c.bf16 %v1989, %v1985
    %v2042 = vpack.c.bf16 %v1994, %v1990
    %v2043 = vpack.c.bf16 %v1995, %v1991
    %v2044 = vpack.c.bf16 %v1996, %v1992
    %v2045 = vpack.c.bf16 %v1997, %v1993
    %v2046 = vpack.c.bf16 %v2002, %v1998
    %v2047 = vpack.c.bf16 %v2003, %v1999
    %v2048 = vpack.c.bf16 %v2004, %v2000
    %v2049 = vpack.c.bf16 %v2005, %v2001
    %v2050 = vpack.c.bf16 %v2010, %v2006
    %v2051 = vpack.c.bf16 %v2011, %v2007
    %v2052 = vpack.c.bf16 %v2012, %v2008
    %v2053 = vpack.c.bf16 %v2013, %v2009
    %v2054 = vpack.c.bf16 %v2018, %v2014
    %v2055 = vpack.c.bf16 %v2019, %v2015
    %v2056 = vpack.c.bf16 %v2020, %v2016
    %v2057 = vpack.c.bf16 %v2021, %v2017
    %v2058 = vpack.c.bf16 %v2026, %v2022
    %v2059 = vpack.c.bf16 %v2027, %v2023
    %v2060 = vpack.c.bf16 %v2028, %v2024
    %v2061 = vpack.c.bf16 %v2029, %v2025
    %2062 = vmatprep.subr.bf16.mxu0 %v2031
    %2063 = vmatpush1.bf16.msra.mxu0 %v2030
    %2064 = vmatprep.subr.bf16.mxu0 %v2035
    %2065 = vmatpush1.bf16.msra.mxu0 %v2034
    %2066 = vmatprep.subr.bf16.mxu0 %v2039
    %2067 = vmatpush1.bf16.msra.mxu0 %v2038
    %2068 = vmatprep.subr.bf16.mxu0 %v2043
    %2069 = vmatpush1.bf16.msra.mxu0 %v2042
    %2070 = vmatprep.subr.bf16.mxu0 %v2047
    %2071 = vmatpush1.bf16.msra.mxu0 %v2046
    %2072 = vmatprep.subr.bf16.mxu0 %v2051
    %2073 = vmatpush1.bf16.msra.mxu0 %v2050
    %2074 = vmatprep.subr.bf16.mxu0 %v2055
    %2075 = vmatpush1.bf16.msra.mxu0 %v2054
    %2076 = vmatprep.subr.bf16.mxu0 %v2059
    %2077 = vmatpush1.bf16.msra.mxu0 %v2058
    %2078 = vmatprep.subr.bf16.mxu0 0
    %2079 = vmatpush1.bf16.msra.mxu0 0
    %2080 = vmatprep.subr.bf16.mxu0 0
    %2081 = vmatpush1.bf16.msra.mxu0 0
    %2082 = vmatprep.subr.bf16.mxu0 0
    %2083 = vmatpush1.bf16.msra.mxu0 0
    %2084 = vmatprep.subr.bf16.mxu0 0
    %2085 = vmatpush1.bf16.msra.mxu0 0
    %2086 = vmatprep.subr.bf16.mxu0 0
    %2087 = vmatpush1.bf16.msra.mxu0 0
    %2088 = vmatprep.subr.bf16.mxu0 0
    %2089 = vmatpush1.bf16.msra.mxu0 0
    %2090 = vmatprep.subr.bf16.mxu0 0
    %2091 = vmatpush1.bf16.msra.mxu0 0
    %2092 = vmatprep.subr.bf16.mxu0 0
    %2093 = vmatpush1.bf16.msra.mxu0 0
    %2094 = vmatprep.mubr.bf16.mxu0 0
    %2095 = vmatmul.mubr.bf16.gmra.mrb[0].mxu0 %v1003
    %v2096 = vpop.f32.mrb[0].mxu0
    %v2097 = vadd.f32 %v950, %v2096
    %v2098 = vpop.f32.mrb[0].mxu0
    %v2099 = vadd.f32 %v950, %v2098
    %v2100 = vpop.f32.mrb[0].mxu0
    %v2101 = vadd.f32 %v955, %v2100
    %v2102 = vpop.f32.mrb[0].mxu0
    %v2103 = vadd.f32 %v955, %v2102
    %2104 = vmatprep.mubr.bf16.mxu0 0
    %2105 = vmatmul.mubr.bf16.gmra.mrb[0].mxu0 %v1004
    %v2106 = vpop.f32.mrb[0].mxu0
    %v2107 = vadd.f32 %v960, %v2106
    %v2108 = vpop.f32.mrb[0].mxu0
    %v2109 = vadd.f32 %v960, %v2108
    %v2110 = vpop.f32.mrb[0].mxu0
    %v2111 = vadd.f32 %v965, %v2110
    %v2112 = vpop.f32.mrb[0].mxu0
    %v2113 = vadd.f32 %v965, %v2112
    %2114 = vmatprep.mubr.bf16.mxu0 0
    %2115 = vmatmul.mubr.bf16.gmra.mrb[0].mxu0 %v1005
    %v2116 = vpop.f32.mrb[0].mxu0
    %v2117 = vadd.f32 %v970, %v2116
    %v2118 = vpop.f32.mrb[0].mxu0
    %v2119 = vadd.f32 %v970, %v2118
    %v2120 = vpop.f32.mrb[0].mxu0
    %v2121 = vadd.f32 %v975, %v2120
    %v2122 = vpop.f32.mrb[0].mxu0
    %v2123 = vadd.f32 %v975, %v2122
    %2124 = vmatprep.mubr.bf16.mxu0 0
    %2125 = vmatmul.mubr.bf16.gmra.mrb[0].mxu0 %v1006
    %v2126 = vpop.f32.mrb[0].mxu0
    %v2127 = vadd.f32 %v980, %v2126
    %v2128 = vpop.f32.mrb[0].mxu0
    %v2129 = vadd.f32 %v980, %v2128
    %v2130 = vpop.f32.mrb[0].mxu0
    %v2131 = vadd.f32 %v985, %v2130
    %v2132 = vpop.f32.mrb[0].mxu0
    %v2133 = vadd.f32 %v985, %v2132
    %2134 = vdwg.mxu0
    %2135 = vmatprep.subr.bf16.mxu0 %v2033
    %2136 = vmatpush1.bf16.msra.mxu0 %v2032
    %2137 = vmatprep.subr.bf16.mxu0 %v2037
    %2138 = vmatpush1.bf16.msra.mxu0 %v2036
    %2139 = vmatprep.subr.bf16.mxu0 %v2041
    %2140 = vmatpush1.bf16.msra.mxu0 %v2040
    %2141 = vmatprep.subr.bf16.mxu0 %v2045
    %2142 = vmatpush1.bf16.msra.mxu0 %v2044
    %2143 = vmatprep.subr.bf16.mxu0 %v2049
    %2144 = vmatpush1.bf16.msra.mxu0 %v2048
    %2145 = vmatprep.subr.bf16.mxu0 %v2053
    %2146 = vmatpush1.bf16.msra.mxu0 %v2052
    %2147 = vmatprep.subr.bf16.mxu0 %v2057
    %2148 = vmatpush1.bf16.msra.mxu0 %v2056
    %2149 = vmatprep.subr.bf16.mxu0 %v2061
    %2150 = vmatpush1.bf16.msra.mxu0 %v2060
    %2151 = vmatprep.subr.bf16.mxu0 0
    %2152 = vmatpush1.bf16.msra.mxu0 0
    %2153 = vmatprep.subr.bf16.mxu0 0
    %2154 = vmatpush1.bf16.msra.mxu0 0
    %2155 = vmatprep.subr.bf16.mxu0 0
    %2156 = vmatpush1.bf16.msra.mxu0 0
    %2157 = vmatprep.subr.bf16.mxu0 0
    %2158 = vmatpush1.bf16.msra.mxu0 0
    %2159 = vmatprep.subr.bf16.mxu0 0
    %2160 = vmatpush1.bf16.msra.mxu0 0
    %2161 = vmatprep.subr.bf16.mxu0 0
    %2162 = vmatpush1.bf16.msra.mxu0 0
    %2163 = vmatprep.subr.bf16.mxu0 0
    %2164 = vmatpush1.bf16.msra.mxu0 0
    %2165 = vmatprep.subr.bf16.mxu0 0
    %2166 = vmatpush1.bf16.msra.mxu0 0
    %2167 = vmatprep.mubr.bf16.mxu0 0
    %2168 = vmatmul.mubr.bf16.gmra.mrb[0].mxu0 %v1003
    %v2169 = vpop.f32.mrb[0].mxu0
    %v2170 = vadd.f32 %v950, %v2169
    %v2171 = vpop.f32.mrb[0].mxu0
    %v2172 = vadd.f32 %v950, %v2171
    %v2173 = vpop.f32.mrb[0].mxu0
    %v2174 = vadd.f32 %v955, %v2173
    %v2175 = vpop.f32.mrb[0].mxu0
    %v2176 = vadd.f32 %v955, %v2175
    %2177 = vmatprep.mubr.bf16.mxu0 0
    %2178 = vmatmul.mubr.bf16.gmra.mrb[0].mxu0 %v1004
    %v2179 = vpop.f32.mrb[0].mxu0
    %v2180 = vadd.f32 %v960, %v2179
    %v2181 = vpop.f32.mrb[0].mxu0
    %v2182 = vadd.f32 %v960, %v2181
    %v2183 = vpop.f32.mrb[0].mxu0
    %v2184 = vadd.f32 %v965, %v2183
    %v2185 = vpop.f32.mrb[0].mxu0
    %v2186 = vadd.f32 %v965, %v2185
    %2187 = vmatprep.mubr.bf16.mxu0 0
    %2188 = vmatmul.mubr.bf16.gmra.mrb[0].mxu0 %v1005
    %v2189 = vpop.f32.mrb[0].mxu0
    %v2190 = vadd.f32 %v970, %v2189
    %v2191 = vpop.f32.mrb[0].mxu0
    %v2192 = vadd.f32 %v970, %v2191
    %v2193 = vpop.f32.mrb[0].mxu0
    %v2194 = vadd.f32 %v975, %v2193
    %v2195 = vpop.f32.mrb[0].mxu0
    %v2196 = vadd.f32 %v975, %v2195
    %2197 = vmatprep.mubr.bf16.mxu0 0
    %2198 = vmatmul.mubr.bf16.gmra.mrb[0].mxu0 %v1006
    %v2199 = vpop.f32.mrb[0].mxu0
    %v2200 = vadd.f32 %v980, %v2199
    %v2201 = vpop.f32.mrb[0].mxu0
    %v2202 = vadd.f32 %v980, %v2201
    %v2203 = vpop.f32.mrb[0].mxu0
    %v2204 = vadd.f32 %v985, %v2203
    %v2205 = vpop.f32.mrb[0].mxu0
    %v2206 = vadd.f32 %v985, %v2205
    %2207 = vdwg.mxu0
    %v2208 = vmax.f32 %v2097, 0.0
    %v2209 = vmax.f32 %v2099, 0.0
    %v2210 = vmax.f32 %v2170, 0.0
    %v2211 = vmax.f32 %v2172, 0.0
    %v2212 = vmax.f32 %v2101, 0.0
    %v2213 = vmax.f32 %v2103, 0.0
    %v2214 = vmax.f32 %v2174, 0.0
    %v2215 = vmax.f32 %v2176, 0.0
    %v2216 = vmax.f32 %v2107, 0.0
    %v2217 = vmax.f32 %v2109, 0.0
    %v2218 = vmax.f32 %v2180, 0.0
    %v2219 = vmax.f32 %v2182, 0.0
    %v2220 = vmax.f32 %v2111, 0.0
    %v2221 = vmax.f32 %v2113, 0.0
    %v2222 = vmax.f32 %v2184, 0.0
    %v2223 = vmax.f32 %v2186, 0.0
    %v2224 = vmax.f32 %v2117, 0.0
    %v2225 = vmax.f32 %v2119, 0.0
    %v2226 = vmax.f32 %v2190, 0.0
    %v2227 = vmax.f32 %v2192, 0.0
    %v2228 = vmax.f32 %v2121, 0.0
    %v2229 = vmax.f32 %v2123, 0.0
    %v2230 = vmax.f32 %v2194, 0.0
    %v2231 = vmax.f32 %v2196, 0.0
    %v2232 = vmax.f32 %v2127, 0.0
    %v2233 = vmax.f32 %v2129, 0.0
    %v2234 = vmax.f32 %v2200, 0.0
    %v2235 = vmax.f32 %v2202, 0.0
    %v2236 = vmax.f32 %v2131, 0.0
    %v2237 = vmax.f32 %v2133, 0.0
    %v2238 = vmax.f32 %v2204, 0.0
    %v2239 = vmax.f32 %v2206, 0.0
    %v2240 = vpack.c.bf16 %v2212, %v2208
    %v2241 = vpack.c.bf16 %v2213, %v2209
    %v2242 = vpack.c.bf16 %v2214, %v2210
    %v2243 = vpack.c.bf16 %v2215, %v2211
    %v2244 = vpack.c.bf16 %v2220, %v2216
    %v2245 = vpack.c.bf16 %v2221, %v2217
    %v2246 = vpack.c.bf16 %v2222, %v2218
    %v2247 = vpack.c.bf16 %v2223, %v2219
    %v2248 = vpack.c.bf16 %v2228, %v2224
    %v2249 = vpack.c.bf16 %v2229, %v2225
    %v2250 = vpack.c.bf16 %v2230, %v2226
    %v2251 = vpack.c.bf16 %v2231, %v2227
    %v2252 = vpack.c.bf16 %v2236, %v2232
    %v2253 = vpack.c.bf16 %v2237, %v2233
    %v2254 = vpack.c.bf16 %v2238, %v2234
    %v2255 = vpack.c.bf16 %v2239, %v2235
    %2256 = vmatprep.subr.bf16.mxu0 %v2241
    %2257 = vmatpush1.bf16.msra.mxu0 %v2240
    %2258 = vmatprep.subr.bf16.mxu0 %v2245
    %2259 = vmatpush1.bf16.msra.mxu0 %v2244
    %2260 = vmatprep.subr.bf16.mxu0 %v2249
    %2261 = vmatpush1.bf16.msra.mxu0 %v2248
    %2262 = vmatprep.subr.bf16.mxu0 %v2253
    %2263 = vmatpush1.bf16.msra.mxu0 %v2252
    %2264 = vmatprep.subr.bf16.mxu0 0
    %2265 = vmatpush1.bf16.msra.mxu0 0
    %2266 = vmatprep.subr.bf16.mxu0 0
    %2267 = vmatpush1.bf16.msra.mxu0 0
    %2268 = vmatprep.subr.bf16.mxu0 0
    %2269 = vmatpush1.bf16.msra.mxu0 0
    %2270 = vmatprep.subr.bf16.mxu0 0
    %2271 = vmatpush1.bf16.msra.mxu0 0
    %2272 = vmatprep.subr.bf16.mxu0 0
    %2273 = vmatpush1.bf16.msra.mxu0 0
    %2274 = vmatprep.subr.bf16.mxu0 0
    %2275 = vmatpush1.bf16.msra.mxu0 0
    %2276 = vmatprep.subr.bf16.mxu0 0
    %2277 = vmatpush1.bf16.msra.mxu0 0
    %2278 = vmatprep.subr.bf16.mxu0 0
    %2279 = vmatpush1.bf16.msra.mxu0 0
    %2280 = vmatprep.subr.bf16.mxu0 0
    %2281 = vmatpush1.bf16.msra.mxu0 0
    %2282 = vmatprep.subr.bf16.mxu0 0
    %2283 = vmatpush1.bf16.msra.mxu0 0
    %2284 = vmatprep.subr.bf16.mxu0 0
    %2285 = vmatpush1.bf16.msra.mxu0 0
    %2286 = vmatprep.subr.bf16.mxu0 0
    %2287 = vmatpush1.bf16.msra.mxu0 0
    %2288 = vmatprep.mubr.bf16.mxu0 0
    %2289 = vmatmul.mubr.bf16.gmra.mrb[0].mxu0 %v1237
    %v2290 = vpop.f32.mrb[0].mxu0
    %v2291 = vadd.f32 %v1208, %v2290
    %v2292 = vpop.f32.mrb[0].mxu0
    %v2293 = vadd.f32 %v1208, %v2292
    %v2294 = vpop.f32.mrb[0].mxu0
    %v2295 = vadd.f32 %v1213, %v2294
    %v2296 = vpop.f32.mrb[0].mxu0
    %v2297 = vadd.f32 %v1213, %v2296
    %2298 = vmatprep.mubr.bf16.mxu0 0
    %2299 = vmatmul.mubr.bf16.gmra.mrb[0].mxu0 %v1240
    %v2300 = vpop.f32.mrb[0].mxu0
    %v2301 = vadd.f32 %v1218, %v2300
    %v2302 = vpop.f32.mrb[0].mxu0
    %v2303 = vadd.f32 %v1218, %v2302
    %v2304 = vpop.f32.mrb[0].mxu0
    %v2305 = vadd.f32 %v1223, %v2304
    %v2306 = vpop.f32.mrb[0].mxu0
    %v2307 = vadd.f32 %v1223, %v2306
    %2308 = vdwg.mxu0
    %2309 = vmatprep.subr.bf16.mxu0 %v2243
    %2310 = vmatpush1.bf16.msra.mxu0 %v2242
    %2311 = vmatprep.subr.bf16.mxu0 %v2247
    %2312 = vmatpush1.bf16.msra.mxu0 %v2246
    %2313 = vmatprep.subr.bf16.mxu0 %v2251
    %2314 = vmatpush1.bf16.msra.mxu0 %v2250
    %2315 = vmatprep.subr.bf16.mxu0 %v2255
    %2316 = vmatpush1.bf16.msra.mxu0 %v2254
    %2317 = vmatprep.subr.bf16.mxu0 0
    %2318 = vmatpush1.bf16.msra.mxu0 0
    %2319 = vmatprep.subr.bf16.mxu0 0
    %2320 = vmatpush1.bf16.msra.mxu0 0
    %2321 = vmatprep.subr.bf16.mxu0 0
    %2322 = vmatpush1.bf16.msra.mxu0 0
    %2323 = vmatprep.subr.bf16.mxu0 0
    %2324 = vmatpush1.bf16.msra.mxu0 0
    %2325 = vmatprep.subr.bf16.mxu0 0
    %2326 = vmatpush1.bf16.msra.mxu0 0
    %2327 = vmatprep.subr.bf16.mxu0 0
    %2328 = vmatpush1.bf16.msra.mxu0 0
    %2329 = vmatprep.subr.bf16.mxu0 0
    %2330 = vmatpush1.bf16.msra.mxu0 0
    %2331 = vmatprep.subr.bf16.mxu0 0
    %2332 = vmatpush1.bf16.msra.mxu0 0
    %2333 = vmatprep.subr.bf16.mxu0 0
    %2334 = vmatpush1.bf16.msra.mxu0 0
    %2335 = vmatprep.subr.bf16.mxu0 0
    %2336 = vmatpush1.bf16.msra.mxu0 0
    %2337 = vmatprep.subr.bf16.mxu0 0
    %2338 = vmatpush1.bf16.msra.mxu0 0
    %2339 = vmatprep.subr.bf16.mxu0 0
    %2340 = vmatpush1.bf16.msra.mxu0 0
    %2341 = vmatprep.mubr.bf16.mxu0 0
    %2342 = vmatmul.mubr.bf16.gmra.mrb[0].mxu0 %v1237
    %v2343 = vpop.f32.mrb[0].mxu0
    %v2344 = vadd.f32 %v1208, %v2343
    %v2345 = vpop.f32.mrb[0].mxu0
    %v2346 = vadd.f32 %v1208, %v2345
    %v2347 = vpop.f32.mrb[0].mxu0
    %v2348 = vadd.f32 %v1213, %v2347
    %v2349 = vpop.f32.mrb[0].mxu0
    %v2350 = vadd.f32 %v1213, %v2349
    %2351 = vmatprep.mubr.bf16.mxu0 0
    %2352 = vmatmul.mubr.bf16.gmra.mrb[0].mxu0 %v1240
    %v2353 = vpop.f32.mrb[0].mxu0
    %v2354 = vadd.f32 %v1218, %v2353
    %v2355 = vpop.f32.mrb[0].mxu0
    %v2356 = vadd.f32 %v1218, %v2355
    %v2357 = vpop.f32.mrb[0].mxu0
    %v2358 = vadd.f32 %v1223, %v2357
    %v2359 = vpop.f32.mrb[0].mxu0
    %v2360 = vadd.f32 %v1223, %v2359
    %2361 = vdwg.mxu0
    %v2362 = vmax.f32 %v2291, 0.0
    %v2363 = vmax.f32 %v2293, 0.0
    %v2364 = vmax.f32 %v2344, 0.0
    %v2365 = vmax.f32 %v2346, 0.0
    %v2366 = vmax.f32 %v2295, 0.0
    %v2367 = vmax.f32 %v2297, 0.0
    %v2368 = vmax.f32 %v2348, 0.0
    %v2369 = vmax.f32 %v2350, 0.0
    %v2370 = vmax.f32 %v2301, 0.0
    %v2371 = vmax.f32 %v2303, 0.0
    %v2372 = vmax.f32 %v2354, 0.0
    %v2373 = vmax.f32 %v2356, 0.0
    %v2374 = vmax.f32 %v2305, 0.0
    %v2375 = vmax.f32 %v2307, 0.0
    %v2376 = vmax.f32 %v2358, 0.0
    %v2377 = vmax.f32 %v2360, 0.0
    %v2378 = vmul.f32 %v2362, %v1367
    %v2379 = vmul.f32 %v2363, %v1367
    %v2380 = vmul.f32 %v2364, %v1367
    %v2381 = vmul.f32 %v2365, %v1367
    %v2382 = vmul.f32 %v2366, %v1372
    %v2383 = vmul.f32 %v2367, %v1372
    %v2384 = vmul.f32 %v2368, %v1372
    %v2385 = vmul.f32 %v2369, %v1372
    %v2386 = vmul.f32 %v2370, %v1377
    %v2387 = vmul.f32 %v2371, %v1377
    %v2388 = vmul.f32 %v2372, %v1377
    %v2389 = vmul.f32 %v2373, %v1377
    %v2390 = vmul.f32 %v2374, %v1382
    %v2391 = vmul.f32 %v2375, %v1382
    %v2392 = vmul.f32 %v2376, %v1382
    %v2393 = vmul.f32 %v2377, %v1382
    %v2394 = vadd.f32 %v2378, %v2382
    %v2395 = vadd.f32 %v2394, %v2386
    %v2396 = vadd.f32 %v2395, %v2390
    %v2397 = vrot.slane %v2396, 4
    %v2398 = vadd.f32 %v2396, %v2397
    %v2399 = vrot.slane %v2398, 2
    %v2400 = vadd.f32 %v2398, %v2399
    %v2401 = vrot.slane %v2400, 1
    %v2402 = vadd.f32 %v2400, %v2401
    %v2403 = vadd.f32 %v2379, %v2383
    %v2404 = vadd.f32 %v2403, %v2387
    %v2405 = vadd.f32 %v2404, %v2391
    %v2406 = vrot.slane %v2405, 4
    %v2407 = vadd.f32 %v2405, %v2406
    %v2408 = vrot.slane %v2407, 2
    %v2409 = vadd.f32 %v2407, %v2408
    %v2410 = vrot.slane %v2409, 1
    %v2411 = vadd.f32 %v2409, %v2410
    %v2412 = vadd.f32 %v2380, %v2384
    %v2413 = vadd.f32 %v2412, %v2388
    %v2414 = vadd.f32 %v2413, %v2392
    %v2415 = vrot.slane %v2414, 4
    %v2416 = vadd.f32 %v2414, %v2415
    %v2417 = vrot.slane %v2416, 2
    %v2418 = vadd.f32 %v2416, %v2417
    %v2419 = vrot.slane %v2418, 1
    %v2420 = vadd.f32 %v2418, %v2419
    %v2421 = vadd.f32 %v2381, %v2385
    %v2422 = vadd.f32 %v2421, %v2389
    %v2423 = vadd.f32 %v2422, %v2393
    %v2424 = vrot.slane %v2423, 4
    %v2425 = vadd.f32 %v2423, %v2424
    %v2426 = vrot.slane %v2425, 2
    %v2427 = vadd.f32 %v2425, %v2426
    %v2428 = vrot.slane %v2427, 1
    %v2429 = vadd.f32 %v2427, %v2428
    %v2430 = vadd.f32 %v2402, %v1444
    %v2431 = vadd.f32 %v2411, %v1444
    %v2432 = vadd.f32 %v2420, %v1444
    %v2433 = vadd.f32 %v2429, %v1444
    %v2434 = vsub.f32 0.0, %v2430
    %v2435 = vsub.f32 0.0, %v2431
    %v2436 = vsub.f32 0.0, %v2432
    %v2437 = vsub.f32 0.0, %v2433
    %v2438 = vmul.f32 %v2434, 1.442695
    %v2439 = vpow.pop %v2438
    %v2440 = vmul.f32 %v2435, 1.442695
    %v2441 = vpow.pop %v2440
    %v2442 = vmul.f32 %v2436, 1.442695
    %v2443 = vpow.pop %v2442
    %v2444 = vmul.f32 %v2437, 1.442695
    %v2445 = vpow.pop %v2444
    %v2446 = vadd.f32 %v2439, 1.0
    %v2447 = vadd.f32 %v2441, 1.0
    %v2448 = vadd.f32 %v2443, 1.0
    %v2449 = vadd.f32 %v2445, 1.0
    %v2450 = vrcp.pop %v2446
    %v2451 = vrcp.pop %v2447
    %v2452 = vrcp.pop %v2448
    %v2453 = vrcp.pop %v2449
    %v2458 = vcombine.low %v2450, %v2451
    %v2459 = vcombine.low %v2452, %v2453
    %v2461 = vunpack.c.l.s4 1966171168
    %v2462 = vunpack.c.0.s8 %v2461
    %v2463 = vlaneseq
    %v2464 = vshrl.u32 %v2463, 7
    %v2465 = vsub.s32 %v2462, %v2464
    %v2466 = vrot.slane %v2458, %v2465
    %v2468 = vunpack.c.l.s4 1966171168
    %v2469 = vunpack.c.0.s8 %v2468
    %v2470 = vlaneseq
    %v2471 = vshrl.u32 %v2470, 7
    %v2472 = vsub.s32 %v2469, %v2471
    %v2473 = vrot.slane %v2459, %v2472
    %v2474 = vcombine.low %v2466, %v2473
    %v2476 = vunpack.c.l.s4 1966171168
    %v2477 = vunpack.c.0.s8 %v2476
    %v2478 = vlaneseq
    %v2479 = vshrl.u32 %v2478, 7
    %v2480 = vsub.s32 %v2477, %v2479
    %v2481 = vrot.slane %v2474, %v2480
    %s2483 = scalar_lea.vmem [#allocation3], 4
    %2484 = vst.msk [vmem:[%s2483] sm:$0xf] %vm1501, %v2481
    %s2485 = scalar_lea.vmem %s0, 8
    %v2486 = vld [vmem:[%s2485] sm:$0xf]
    %v2487 = vcvt.s32.f32 %v2486
    %s2488 = scalar_lea.vmem %s1, 8
    %v2489 = vld [vmem:[%s2488] sm:$0xf]
    %v2490 = vcvt.s32.f32 %v2489
    %s2491 = scalar_lea.vmem %s2, 8
    %v2492 = vld [vmem:[%s2491] sm:$0xf]
    %v2493 = vcvt.s32.f32 %v2492
    %v2494 = vsub.f32 %v2493, 1.0
    %v2495 = vrcp.pop %v2494
    %v2496 = vmul.f32 1.0, %v2495
    %v2497 = vmul.f32 %v2487, %v2496
    %v2498 = vsub.f32 %v2490, 1.0
    %v2499 = vmul.f32 %v2498, %v2496
    %v2500 = vmul.f32 %v2493, 0.11111111
    %v2502 = vlaneseq
    %v2503 = vshrl.u32 %v2502, 7
    %v2504 = vsub.s32 0, %v2503
    %v2505 = vrot.slane %v2497, %v2504
    %v2506 = vlaneseq
    %v2507 = vshrl.u32 %v2506, 7
    %v2508 = vsub.s32 1, %v2507
    %v2509 = vrot.slane %v2497, %v2508
    %v2510 = vlaneseq
    %v2511 = vshrl.u32 %v2510, 7
    %v2512 = vsub.s32 2, %v2511
    %v2513 = vrot.slane %v2497, %v2512
    %v2514 = vlaneseq
    %v2515 = vshrl.u32 %v2514, 7
    %v2516 = vsub.s32 3, %v2515
    %v2517 = vrot.slane %v2497, %v2516
    %v2522 = vmul.f32 %v119, %v2505
    %v2523 = vmul.f32 %v119, %v2509
    %v2524 = vmul.f32 %v119, %v2513
    %v2525 = vmul.f32 %v119, %v2517
    %v2526 = vmul.f32 %v124, %v2505
    %v2527 = vmul.f32 %v124, %v2509
    %v2528 = vmul.f32 %v124, %v2513
    %v2529 = vmul.f32 %v124, %v2517
    %v2530 = vmul.f32 %v129, %v2505
    %v2531 = vmul.f32 %v129, %v2509
    %v2532 = vmul.f32 %v129, %v2513
    %v2533 = vmul.f32 %v129, %v2517
    %v2534 = vmul.f32 %v134, %v2505
    %v2535 = vmul.f32 %v134, %v2509
    %v2536 = vmul.f32 %v134, %v2513
    %v2537 = vmul.f32 %v134, %v2517
    %v2538 = vmul.f32 %v139, %v2505
    %v2539 = vmul.f32 %v139, %v2509
    %v2540 = vmul.f32 %v139, %v2513
    %v2541 = vmul.f32 %v139, %v2517
    %v2542 = vmul.f32 %v144, %v2505
    %v2543 = vmul.f32 %v144, %v2509
    %v2544 = vmul.f32 %v144, %v2513
    %v2545 = vmul.f32 %v144, %v2517
    %v2546 = vmul.f32 %v149, %v2505
    %v2547 = vmul.f32 %v149, %v2509
    %v2548 = vmul.f32 %v149, %v2513
    %v2549 = vmul.f32 %v149, %v2517
    %v2550 = vmul.f32 %v154, %v2505
    %v2551 = vmul.f32 %v154, %v2509
    %v2552 = vmul.f32 %v154, %v2513
    %v2553 = vmul.f32 %v154, %v2517
    %v2554 = vmul.f32 %v159, %v2505
    %v2555 = vmul.f32 %v159, %v2509
    %v2556 = vmul.f32 %v159, %v2513
    %v2557 = vmul.f32 %v159, %v2517
    %v2558 = vmul.f32 %v164, %v2505
    %v2559 = vmul.f32 %v164, %v2509
    %v2560 = vmul.f32 %v164, %v2513
    %v2561 = vmul.f32 %v164, %v2517
    %v2562 = vmul.f32 %v169, %v2505
    %v2563 = vmul.f32 %v169, %v2509
    %v2564 = vmul.f32 %v169, %v2513
    %v2565 = vmul.f32 %v169, %v2517
    %v2566 = vmul.f32 %v174, %v2505
    %v2567 = vmul.f32 %v174, %v2509
    %v2568 = vmul.f32 %v174, %v2513
    %v2569 = vmul.f32 %v174, %v2517
    %v2570 = vmul.f32 %v179, %v2505
    %v2571 = vmul.f32 %v179, %v2509
    %v2572 = vmul.f32 %v179, %v2513
    %v2573 = vmul.f32 %v179, %v2517
    %v2574 = vmul.f32 %v184, %v2505
    %v2575 = vmul.f32 %v184, %v2509
    %v2576 = vmul.f32 %v184, %v2513
    %v2577 = vmul.f32 %v184, %v2517
    %v2578 = vmul.f32 %v189, %v2505
    %v2579 = vmul.f32 %v189, %v2509
    %v2580 = vmul.f32 %v189, %v2513
    %v2581 = vmul.f32 %v189, %v2517
    %v2582 = vmul.f32 %v194, %v2505
    %v2583 = vmul.f32 %v194, %v2509
    %v2584 = vmul.f32 %v194, %v2513
    %v2585 = vmul.f32 %v194, %v2517
    %v2587 = vlaneseq
    %v2588 = vshrl.u32 %v2587, 7
    %v2589 = vsub.s32 0, %v2588
    %v2590 = vrot.slane %v2499, %v2589
    %v2591 = vlaneseq
    %v2592 = vshrl.u32 %v2591, 7
    %v2593 = vsub.s32 1, %v2592
    %v2594 = vrot.slane %v2499, %v2593
    %v2595 = vlaneseq
    %v2596 = vshrl.u32 %v2595, 7
    %v2597 = vsub.s32 2, %v2596
    %v2598 = vrot.slane %v2499, %v2597
    %v2599 = vlaneseq
    %v2600 = vshrl.u32 %v2599, 7
    %v2601 = vsub.s32 3, %v2600
    %v2602 = vrot.slane %v2499, %v2601
    %v2607 = vmul.f32 %v283, %v2590
    %v2608 = vmul.f32 %v283, %v2594
    %v2609 = vmul.f32 %v283, %v2598
    %v2610 = vmul.f32 %v283, %v2602
    %v2611 = vmul.f32 %v287, %v2590
    %v2612 = vmul.f32 %v287, %v2594
    %v2613 = vmul.f32 %v287, %v2598
    %v2614 = vmul.f32 %v287, %v2602
    %v2615 = vmul.f32 %v291, %v2590
    %v2616 = vmul.f32 %v291, %v2594
    %v2617 = vmul.f32 %v291, %v2598
    %v2618 = vmul.f32 %v291, %v2602
    %v2619 = vmul.f32 %v295, %v2590
    %v2620 = vmul.f32 %v295, %v2594
    %v2621 = vmul.f32 %v295, %v2598
    %v2622 = vmul.f32 %v295, %v2602
    %v2623 = vmul.f32 %v299, %v2590
    %v2624 = vmul.f32 %v299, %v2594
    %v2625 = vmul.f32 %v299, %v2598
    %v2626 = vmul.f32 %v299, %v2602
    %v2627 = vmul.f32 %v303, %v2590
    %v2628 = vmul.f32 %v303, %v2594
    %v2629 = vmul.f32 %v303, %v2598
    %v2630 = vmul.f32 %v303, %v2602
    %v2631 = vmul.f32 %v307, %v2590
    %v2632 = vmul.f32 %v307, %v2594
    %v2633 = vmul.f32 %v307, %v2598
    %v2634 = vmul.f32 %v307, %v2602
    %v2635 = vmul.f32 %v311, %v2590
    %v2636 = vmul.f32 %v311, %v2594
    %v2637 = vmul.f32 %v311, %v2598
    %v2638 = vmul.f32 %v311, %v2602
    %v2639 = vmul.f32 %v315, %v2590
    %v2640 = vmul.f32 %v315, %v2594
    %v2641 = vmul.f32 %v315, %v2598
    %v2642 = vmul.f32 %v315, %v2602
    %v2643 = vmul.f32 %v319, %v2590
    %v2644 = vmul.f32 %v319, %v2594
    %v2645 = vmul.f32 %v319, %v2598
    %v2646 = vmul.f32 %v319, %v2602
    %v2647 = vmul.f32 %v323, %v2590
    %v2648 = vmul.f32 %v323, %v2594
    %v2649 = vmul.f32 %v323, %v2598
    %v2650 = vmul.f32 %v323, %v2602
    %v2651 = vmul.f32 %v327, %v2590
    %v2652 = vmul.f32 %v327, %v2594
    %v2653 = vmul.f32 %v327, %v2598
    %v2654 = vmul.f32 %v327, %v2602
    %v2655 = vmul.f32 %v331, %v2590
    %v2656 = vmul.f32 %v331, %v2594
    %v2657 = vmul.f32 %v331, %v2598
    %v2658 = vmul.f32 %v331, %v2602
    %v2659 = vmul.f32 %v335, %v2590
    %v2660 = vmul.f32 %v335, %v2594
    %v2661 = vmul.f32 %v335, %v2598
    %v2662 = vmul.f32 %v335, %v2602
    %v2663 = vmul.f32 %v339, %v2590
    %v2664 = vmul.f32 %v339, %v2594
    %v2665 = vmul.f32 %v339, %v2598
    %v2666 = vmul.f32 %v339, %v2602
    %v2667 = vmul.f32 %v343, %v2590
    %v2668 = vmul.f32 %v343, %v2594
    %v2669 = vmul.f32 %v343, %v2598
    %v2670 = vmul.f32 %v343, %v2602
    %v2671 = vadd.f32 %v2522, %v2607
    %v2672 = vadd.f32 %v2523, %v2608
    %v2673 = vadd.f32 %v2524, %v2609
    %v2674 = vadd.f32 %v2525, %v2610
    %v2675 = vadd.f32 %v2526, %v2611
    %v2676 = vadd.f32 %v2527, %v2612
    %v2677 = vadd.f32 %v2528, %v2613
    %v2678 = vadd.f32 %v2529, %v2614
    %v2679 = vadd.f32 %v2530, %v2615
    %v2680 = vadd.f32 %v2531, %v2616
    %v2681 = vadd.f32 %v2532, %v2617
    %v2682 = vadd.f32 %v2533, %v2618
    %v2683 = vadd.f32 %v2534, %v2619
    %v2684 = vadd.f32 %v2535, %v2620
    %v2685 = vadd.f32 %v2536, %v2621
    %v2686 = vadd.f32 %v2537, %v2622
    %v2687 = vadd.f32 %v2538, %v2623
    %v2688 = vadd.f32 %v2539, %v2624
    %v2689 = vadd.f32 %v2540, %v2625
    %v2690 = vadd.f32 %v2541, %v2626
    %v2691 = vadd.f32 %v2542, %v2627
    %v2692 = vadd.f32 %v2543, %v2628
    %v2693 = vadd.f32 %v2544, %v2629
    %v2694 = vadd.f32 %v2545, %v2630
    %v2695 = vadd.f32 %v2546, %v2631
    %v2696 = vadd.f32 %v2547, %v2632
    %v2697 = vadd.f32 %v2548, %v2633
    %v2698 = vadd.f32 %v2549, %v2634
    %v2699 = vadd.f32 %v2550, %v2635
    %v2700 = vadd.f32 %v2551, %v2636
    %v2701 = vadd.f32 %v2552, %v2637
    %v2702 = vadd.f32 %v2553, %v2638
    %v2703 = vadd.f32 %v2554, %v2639
    %v2704 = vadd.f32 %v2555, %v2640
    %v2705 = vadd.f32 %v2556, %v2641
    %v2706 = vadd.f32 %v2557, %v2642
    %v2707 = vadd.f32 %v2558, %v2643
    %v2708 = vadd.f32 %v2559, %v2644
    %v2709 = vadd.f32 %v2560, %v2645
    %v2710 = vadd.f32 %v2561, %v2646
    %v2711 = vadd.f32 %v2562, %v2647
    %v2712 = vadd.f32 %v2563, %v2648
    %v2713 = vadd.f32 %v2564, %v2649
    %v2714 = vadd.f32 %v2565, %v2650
    %v2715 = vadd.f32 %v2566, %v2651
    %v2716 = vadd.f32 %v2567, %v2652
    %v2717 = vadd.f32 %v2568, %v2653
    %v2718 = vadd.f32 %v2569, %v2654
    %v2719 = vadd.f32 %v2570, %v2655
    %v2720 = vadd.f32 %v2571, %v2656
    %v2721 = vadd.f32 %v2572, %v2657
    %v2722 = vadd.f32 %v2573, %v2658
    %v2723 = vadd.f32 %v2574, %v2659
    %v2724 = vadd.f32 %v2575, %v2660
    %v2725 = vadd.f32 %v2576, %v2661
    %v2726 = vadd.f32 %v2577, %v2662
    %v2727 = vadd.f32 %v2578, %v2663
    %v2728 = vadd.f32 %v2579, %v2664
    %v2729 = vadd.f32 %v2580, %v2665
    %v2730 = vadd.f32 %v2581, %v2666
    %v2731 = vadd.f32 %v2582, %v2667
    %v2732 = vadd.f32 %v2583, %v2668
    %v2733 = vadd.f32 %v2584, %v2669
    %v2734 = vadd.f32 %v2585, %v2670
    %v2736 = vlaneseq
    %v2737 = vshrl.u32 %v2736, 7
    %v2738 = vsub.s32 0, %v2737
    %v2739 = vrot.slane %v2500, %v2738
    %v2740 = vlaneseq
    %v2741 = vshrl.u32 %v2740, 7
    %v2742 = vsub.s32 1, %v2741
    %v2743 = vrot.slane %v2500, %v2742
    %v2744 = vlaneseq
    %v2745 = vshrl.u32 %v2744, 7
    %v2746 = vsub.s32 2, %v2745
    %v2747 = vrot.slane %v2500, %v2746
    %v2748 = vlaneseq
    %v2749 = vshrl.u32 %v2748, 7
    %v2750 = vsub.s32 3, %v2749
    %v2751 = vrot.slane %v2500, %v2750
    %v2756 = vmul.f32 %v496, %v2739
    %v2757 = vmul.f32 %v496, %v2743
    %v2758 = vmul.f32 %v496, %v2747
    %v2759 = vmul.f32 %v496, %v2751
    %v2760 = vmul.f32 %v500, %v2739
    %v2761 = vmul.f32 %v500, %v2743
    %v2762 = vmul.f32 %v500, %v2747
    %v2763 = vmul.f32 %v500, %v2751
    %v2764 = vmul.f32 %v504, %v2739
    %v2765 = vmul.f32 %v504, %v2743
    %v2766 = vmul.f32 %v504, %v2747
    %v2767 = vmul.f32 %v504, %v2751
    %v2768 = vmul.f32 %v508, %v2739
    %v2769 = vmul.f32 %v508, %v2743
    %v2770 = vmul.f32 %v508, %v2747
    %v2771 = vmul.f32 %v508, %v2751
    %v2772 = vmul.f32 %v512, %v2739
    %v2773 = vmul.f32 %v512, %v2743
    %v2774 = vmul.f32 %v512, %v2747
    %v2775 = vmul.f32 %v512, %v2751
    %v2776 = vmul.f32 %v516, %v2739
    %v2777 = vmul.f32 %v516, %v2743
    %v2778 = vmul.f32 %v516, %v2747
    %v2779 = vmul.f32 %v516, %v2751
    %v2780 = vmul.f32 %v520, %v2739
    %v2781 = vmul.f32 %v520, %v2743
    %v2782 = vmul.f32 %v520, %v2747
    %v2783 = vmul.f32 %v520, %v2751
    %v2784 = vmul.f32 %v524, %v2739
    %v2785 = vmul.f32 %v524, %v2743
    %v2786 = vmul.f32 %v524, %v2747
    %v2787 = vmul.f32 %v524, %v2751
    %v2788 = vmul.f32 %v528, %v2739
    %v2789 = vmul.f32 %v528, %v2743
    %v2790 = vmul.f32 %v528, %v2747
    %v2791 = vmul.f32 %v528, %v2751
    %v2792 = vmul.f32 %v532, %v2739
    %v2793 = vmul.f32 %v532, %v2743
    %v2794 = vmul.f32 %v532, %v2747
    %v2795 = vmul.f32 %v532, %v2751
    %v2796 = vmul.f32 %v536, %v2739
    %v2797 = vmul.f32 %v536, %v2743
    %v2798 = vmul.f32 %v536, %v2747
    %v2799 = vmul.f32 %v536, %v2751
    %v2800 = vmul.f32 %v540, %v2739
    %v2801 = vmul.f32 %v540, %v2743
    %v2802 = vmul.f32 %v540, %v2747
    %v2803 = vmul.f32 %v540, %v2751
    %v2804 = vmul.f32 %v544, %v2739
    %v2805 = vmul.f32 %v544, %v2743
    %v2806 = vmul.f32 %v544, %v2747
    %v2807 = vmul.f32 %v544, %v2751
    %v2808 = vmul.f32 %v548, %v2739
    %v2809 = vmul.f32 %v548, %v2743
    %v2810 = vmul.f32 %v548, %v2747
    %v2811 = vmul.f32 %v548, %v2751
    %v2812 = vmul.f32 %v552, %v2739
    %v2813 = vmul.f32 %v552, %v2743
    %v2814 = vmul.f32 %v552, %v2747
    %v2815 = vmul.f32 %v552, %v2751
    %v2816 = vmul.f32 %v556, %v2739
    %v2817 = vmul.f32 %v556, %v2743
    %v2818 = vmul.f32 %v556, %v2747
    %v2819 = vmul.f32 %v556, %v2751
    %v2820 = vadd.f32 %v2671, %v2756
    %v2821 = vadd.f32 %v2672, %v2757
    %v2822 = vadd.f32 %v2673, %v2758
    %v2823 = vadd.f32 %v2674, %v2759
    %v2824 = vadd.f32 %v2675, %v2760
    %v2825 = vadd.f32 %v2676, %v2761
    %v2826 = vadd.f32 %v2677, %v2762
    %v2827 = vadd.f32 %v2678, %v2763
    %v2828 = vadd.f32 %v2679, %v2764
    %v2829 = vadd.f32 %v2680, %v2765
    %v2830 = vadd.f32 %v2681, %v2766
    %v2831 = vadd.f32 %v2682, %v2767
    %v2832 = vadd.f32 %v2683, %v2768
    %v2833 = vadd.f32 %v2684, %v2769
    %v2834 = vadd.f32 %v2685, %v2770
    %v2835 = vadd.f32 %v2686, %v2771
    %v2836 = vadd.f32 %v2687, %v2772
    %v2837 = vadd.f32 %v2688, %v2773
    %v2838 = vadd.f32 %v2689, %v2774
    %v2839 = vadd.f32 %v2690, %v2775
    %v2840 = vadd.f32 %v2691, %v2776
    %v2841 = vadd.f32 %v2692, %v2777
    %v2842 = vadd.f32 %v2693, %v2778
    %v2843 = vadd.f32 %v2694, %v2779
    %v2844 = vadd.f32 %v2695, %v2780
    %v2845 = vadd.f32 %v2696, %v2781
    %v2846 = vadd.f32 %v2697, %v2782
    %v2847 = vadd.f32 %v2698, %v2783
    %v2848 = vadd.f32 %v2699, %v2784
    %v2849 = vadd.f32 %v2700, %v2785
    %v2850 = vadd.f32 %v2701, %v2786
    %v2851 = vadd.f32 %v2702, %v2787
    %v2852 = vadd.f32 %v2703, %v2788
    %v2853 = vadd.f32 %v2704, %v2789
    %v2854 = vadd.f32 %v2705, %v2790
    %v2855 = vadd.f32 %v2706, %v2791
    %v2856 = vadd.f32 %v2707, %v2792
    %v2857 = vadd.f32 %v2708, %v2793
    %v2858 = vadd.f32 %v2709, %v2794
    %v2859 = vadd.f32 %v2710, %v2795
    %v2860 = vadd.f32 %v2711, %v2796
    %v2861 = vadd.f32 %v2712, %v2797
    %v2862 = vadd.f32 %v2713, %v2798
    %v2863 = vadd.f32 %v2714, %v2799
    %v2864 = vadd.f32 %v2715, %v2800
    %v2865 = vadd.f32 %v2716, %v2801
    %v2866 = vadd.f32 %v2717, %v2802
    %v2867 = vadd.f32 %v2718, %v2803
    %v2868 = vadd.f32 %v2719, %v2804
    %v2869 = vadd.f32 %v2720, %v2805
    %v2870 = vadd.f32 %v2721, %v2806
    %v2871 = vadd.f32 %v2722, %v2807
    %v2872 = vadd.f32 %v2723, %v2808
    %v2873 = vadd.f32 %v2724, %v2809
    %v2874 = vadd.f32 %v2725, %v2810
    %v2875 = vadd.f32 %v2726, %v2811
    %v2876 = vadd.f32 %v2727, %v2812
    %v2877 = vadd.f32 %v2728, %v2813
    %v2878 = vadd.f32 %v2729, %v2814
    %v2879 = vadd.f32 %v2730, %v2815
    %v2880 = vadd.f32 %v2731, %v2816
    %v2881 = vadd.f32 %v2732, %v2817
    %v2882 = vadd.f32 %v2733, %v2818
    %v2883 = vadd.f32 %v2734, %v2819
    %v2884 = vadd.f32 %v2820, %v710
    %v2885 = vadd.f32 %v2821, %v710
    %v2886 = vadd.f32 %v2822, %v710
    %v2887 = vadd.f32 %v2823, %v710
    %v2888 = vadd.f32 %v2824, %v715
    %v2889 = vadd.f32 %v2825, %v715
    %v2890 = vadd.f32 %v2826, %v715
    %v2891 = vadd.f32 %v2827, %v715
    %v2892 = vadd.f32 %v2828, %v720
    %v2893 = vadd.f32 %v2829, %v720
    %v2894 = vadd.f32 %v2830, %v720
    %v2895 = vadd.f32 %v2831, %v720
    %v2896 = vadd.f32 %v2832, %v725
    %v2897 = vadd.f32 %v2833, %v725
    %v2898 = vadd.f32 %v2834, %v725
    %v2899 = vadd.f32 %v2835, %v725
    %v2900 = vadd.f32 %v2836, %v730
    %v2901 = vadd.f32 %v2837, %v730
    %v2902 = vadd.f32 %v2838, %v730
    %v2903 = vadd.f32 %v2839, %v730
    %v2904 = vadd.f32 %v2840, %v735
    %v2905 = vadd.f32 %v2841, %v735
    %v2906 = vadd.f32 %v2842, %v735
    %v2907 = vadd.f32 %v2843, %v735
    %v2908 = vadd.f32 %v2844, %v740
    %v2909 = vadd.f32 %v2845, %v740
    %v2910 = vadd.f32 %v2846, %v740
    %v2911 = vadd.f32 %v2847, %v740
    %v2912 = vadd.f32 %v2848, %v745
    %v2913 = vadd.f32 %v2849, %v745
    %v2914 = vadd.f32 %v2850, %v745
    %v2915 = vadd.f32 %v2851, %v745
    %v2916 = vadd.f32 %v2852, %v750
    %v2917 = vadd.f32 %v2853, %v750
    %v2918 = vadd.f32 %v2854, %v750
    %v2919 = vadd.f32 %v2855, %v750
    %v2920 = vadd.f32 %v2856, %v755
    %v2921 = vadd.f32 %v2857, %v755
    %v2922 = vadd.f32 %v2858, %v755
    %v2923 = vadd.f32 %v2859, %v755
    %v2924 = vadd.f32 %v2860, %v760
    %v2925 = vadd.f32 %v2861, %v760
    %v2926 = vadd.f32 %v2862, %v760
    %v2927 = vadd.f32 %v2863, %v760
    %v2928 = vadd.f32 %v2864, %v765
    %v2929 = vadd.f32 %v2865, %v765
    %v2930 = vadd.f32 %v2866, %v765
    %v2931 = vadd.f32 %v2867, %v765
    %v2932 = vadd.f32 %v2868, %v770
    %v2933 = vadd.f32 %v2869, %v770
    %v2934 = vadd.f32 %v2870, %v770
    %v2935 = vadd.f32 %v2871, %v770
    %v2936 = vadd.f32 %v2872, %v775
    %v2937 = vadd.f32 %v2873, %v775
    %v2938 = vadd.f32 %v2874, %v775
    %v2939 = vadd.f32 %v2875, %v775
    %v2940 = vadd.f32 %v2876, %v780
    %v2941 = vadd.f32 %v2877, %v780
    %v2942 = vadd.f32 %v2878, %v780
    %v2943 = vadd.f32 %v2879, %v780
    %v2944 = vadd.f32 %v2880, %v785
    %v2945 = vadd.f32 %v2881, %v785
    %v2946 = vadd.f32 %v2882, %v785
    %v2947 = vadd.f32 %v2883, %v785
    %v2948 = vmax.f32 %v2884, 0.0
    %v2949 = vmax.f32 %v2885, 0.0
    %v2950 = vmax.f32 %v2886, 0.0
    %v2951 = vmax.f32 %v2887, 0.0
    %v2952 = vmax.f32 %v2888, 0.0
    %v2953 = vmax.f32 %v2889, 0.0
    %v2954 = vmax.f32 %v2890, 0.0
    %v2955 = vmax.f32 %v2891, 0.0
    %v2956 = vmax.f32 %v2892, 0.0
    %v2957 = vmax.f32 %v2893, 0.0
    %v2958 = vmax.f32 %v2894, 0.0
    %v2959 = vmax.f32 %v2895, 0.0
    %v2960 = vmax.f32 %v2896, 0.0
    %v2961 = vmax.f32 %v2897, 0.0
    %v2962 = vmax.f32 %v2898, 0.0
    %v2963 = vmax.f32 %v2899, 0.0
    %v2964 = vmax.f32 %v2900, 0.0
    %v2965 = vmax.f32 %v2901, 0.0
    %v2966 = vmax.f32 %v2902, 0.0
    %v2967 = vmax.f32 %v2903, 0.0
    %v2968 = vmax.f32 %v2904, 0.0
    %v2969 = vmax.f32 %v2905, 0.0
    %v2970 = vmax.f32 %v2906, 0.0
    %v2971 = vmax.f32 %v2907, 0.0
    %v2972 = vmax.f32 %v2908, 0.0
    %v2973 = vmax.f32 %v2909, 0.0
    %v2974 = vmax.f32 %v2910, 0.0
    %v2975 = vmax.f32 %v2911, 0.0
    %v2976 = vmax.f32 %v2912, 0.0
    %v2977 = vmax.f32 %v2913, 0.0
    %v2978 = vmax.f32 %v2914, 0.0
    %v2979 = vmax.f32 %v2915, 0.0
    %v2980 = vmax.f32 %v2916, 0.0
    %v2981 = vmax.f32 %v2917, 0.0
    %v2982 = vmax.f32 %v2918, 0.0
    %v2983 = vmax.f32 %v2919, 0.0
    %v2984 = vmax.f32 %v2920, 0.0
    %v2985 = vmax.f32 %v2921, 0.0
    %v2986 = vmax.f32 %v2922, 0.0
    %v2987 = vmax.f32 %v2923, 0.0
    %v2988 = vmax.f32 %v2924, 0.0
    %v2989 = vmax.f32 %v2925, 0.0
    %v2990 = vmax.f32 %v2926, 0.0
    %v2991 = vmax.f32 %v2927, 0.0
    %v2992 = vmax.f32 %v2928, 0.0
    %v2993 = vmax.f32 %v2929, 0.0
    %v2994 = vmax.f32 %v2930, 0.0
    %v2995 = vmax.f32 %v2931, 0.0
    %v2996 = vmax.f32 %v2932, 0.0
    %v2997 = vmax.f32 %v2933, 0.0
    %v2998 = vmax.f32 %v2934, 0.0
    %v2999 = vmax.f32 %v2935, 0.0
    %v3000 = vmax.f32 %v2936, 0.0
    %v3001 = vmax.f32 %v2937, 0.0
    %v3002 = vmax.f32 %v2938, 0.0
    %v3003 = vmax.f32 %v2939, 0.0
    %v3004 = vmax.f32 %v2940, 0.0
    %v3005 = vmax.f32 %v2941, 0.0
    %v3006 = vmax.f32 %v2942, 0.0
    %v3007 = vmax.f32 %v2943, 0.0
    %v3008 = vmax.f32 %v2944, 0.0
    %v3009 = vmax.f32 %v2945, 0.0
    %v3010 = vmax.f32 %v2946, 0.0
    %v3011 = vmax.f32 %v2947, 0.0
    %v3012 = vpack.c.bf16 %v2952, %v2948
    %v3013 = vpack.c.bf16 %v2953, %v2949
    %v3014 = vpack.c.bf16 %v2954, %v2950
    %v3015 = vpack.c.bf16 %v2955, %v2951
    %v3016 = vpack.c.bf16 %v2960, %v2956
    %v3017 = vpack.c.bf16 %v2961, %v2957
    %v3018 = vpack.c.bf16 %v2962, %v2958
    %v3019 = vpack.c.bf16 %v2963, %v2959
    %v3020 = vpack.c.bf16 %v2968, %v2964
    %v3021 = vpack.c.bf16 %v2969, %v2965
    %v3022 = vpack.c.bf16 %v2970, %v2966
    %v3023 = vpack.c.bf16 %v2971, %v2967
    %v3024 = vpack.c.bf16 %v2976, %v2972
    %v3025 = vpack.c.bf16 %v2977, %v2973
    %v3026 = vpack.c.bf16 %v2978, %v2974
    %v3027 = vpack.c.bf16 %v2979, %v2975
    %v3028 = vpack.c.bf16 %v2984, %v2980
    %v3029 = vpack.c.bf16 %v2985, %v2981
    %v3030 = vpack.c.bf16 %v2986, %v2982
    %v3031 = vpack.c.bf16 %v2987, %v2983
    %v3032 = vpack.c.bf16 %v2992, %v2988
    %v3033 = vpack.c.bf16 %v2993, %v2989
    %v3034 = vpack.c.bf16 %v2994, %v2990
    %v3035 = vpack.c.bf16 %v2995, %v2991
    %v3036 = vpack.c.bf16 %v3000, %v2996
    %v3037 = vpack.c.bf16 %v3001, %v2997
    %v3038 = vpack.c.bf16 %v3002, %v2998
    %v3039 = vpack.c.bf16 %v3003, %v2999
    %v3040 = vpack.c.bf16 %v3008, %v3004
    %v3041 = vpack.c.bf16 %v3009, %v3005
    %v3042 = vpack.c.bf16 %v3010, %v3006
    %v3043 = vpack.c.bf16 %v3011, %v3007
    %3044 = vmatprep.subr.bf16.mxu0 %v3013
    %3045 = vmatpush1.bf16.msra.mxu0 %v3012
    %3046 = vmatprep.subr.bf16.mxu0 %v3017
    %3047 = vmatpush1.bf16.msra.mxu0 %v3016
    %3048 = vmatprep.subr.bf16.mxu0 %v3021
    %3049 = vmatpush1.bf16.msra.mxu0 %v3020
    %3050 = vmatprep.subr.bf16.mxu0 %v3025
    %3051 = vmatpush1.bf16.msra.mxu0 %v3024
    %3052 = vmatprep.subr.bf16.mxu0 %v3029
    %3053 = vmatpush1.bf16.msra.mxu0 %v3028
    %3054 = vmatprep.subr.bf16.mxu0 %v3033
    %3055 = vmatpush1.bf16.msra.mxu0 %v3032
    %3056 = vmatprep.subr.bf16.mxu0 %v3037
    %3057 = vmatpush1.bf16.msra.mxu0 %v3036
    %3058 = vmatprep.subr.bf16.mxu0 %v3041
    %3059 = vmatpush1.bf16.msra.mxu0 %v3040
    %3060 = vmatprep.subr.bf16.mxu0 0
    %3061 = vmatpush1.bf16.msra.mxu0 0
    %3062 = vmatprep.subr.bf16.mxu0 0
    %3063 = vmatpush1.bf16.msra.mxu0 0
    %3064 = vmatprep.subr.bf16.mxu0 0
    %3065 = vmatpush1.bf16.msra.mxu0 0
    %3066 = vmatprep.subr.bf16.mxu0 0
    %3067 = vmatpush1.bf16.msra.mxu0 0
    %3068 = vmatprep.subr.bf16.mxu0 0
    %3069 = vmatpush1.bf16.msra.mxu0 0
    %3070 = vmatprep.subr.bf16.mxu0 0
    %3071 = vmatpush1.bf16.msra.mxu0 0
    %3072 = vmatprep.subr.bf16.mxu0 0
    %3073 = vmatpush1.bf16.msra.mxu0 0
    %3074 = vmatprep.subr.bf16.mxu0 0
    %3075 = vmatpush1.bf16.msra.mxu0 0
    %3076 = vmatprep.mubr.bf16.mxu0 0
    %3077 = vmatmul.mubr.bf16.gmra.mrb[0].mxu0 %v1003
    %v3078 = vpop.f32.mrb[0].mxu0
    %v3079 = vadd.f32 %v950, %v3078
    %v3080 = vpop.f32.mrb[0].mxu0
    %v3081 = vadd.f32 %v950, %v3080
    %v3082 = vpop.f32.mrb[0].mxu0
    %v3083 = vadd.f32 %v955, %v3082
    %v3084 = vpop.f32.mrb[0].mxu0
    %v3085 = vadd.f32 %v955, %v3084
    %3086 = vmatprep.mubr.bf16.mxu0 0
    %3087 = vmatmul.mubr.bf16.gmra.mrb[0].mxu0 %v1004
    %v3088 = vpop.f32.mrb[0].mxu0
    %v3089 = vadd.f32 %v960, %v3088
    %v3090 = vpop.f32.mrb[0].mxu0
    %v3091 = vadd.f32 %v960, %v3090
    %v3092 = vpop.f32.mrb[0].mxu0
    %v3093 = vadd.f32 %v965, %v3092
    %v3094 = vpop.f32.mrb[0].mxu0
    %v3095 = vadd.f32 %v965, %v3094
    %3096 = vmatprep.mubr.bf16.mxu0 0
    %3097 = vmatmul.mubr.bf16.gmra.mrb[0].mxu0 %v1005
    %v3098 = vpop.f32.mrb[0].mxu0
    %v3099 = vadd.f32 %v970, %v3098
    %v3100 = vpop.f32.mrb[0].mxu0
    %v3101 = vadd.f32 %v970, %v3100
    %v3102 = vpop.f32.mrb[0].mxu0
    %v3103 = vadd.f32 %v975, %v3102
    %v3104 = vpop.f32.mrb[0].mxu0
    %v3105 = vadd.f32 %v975, %v3104
    %3106 = vmatprep.mubr.bf16.mxu0 0
    %3107 = vmatmul.mubr.bf16.gmra.mrb[0].mxu0 %v1006
    %v3108 = vpop.f32.mrb[0].mxu0
    %v3109 = vadd.f32 %v980, %v3108
    %v3110 = vpop.f32.mrb[0].mxu0
    %v3111 = vadd.f32 %v980, %v3110
    %v3112 = vpop.f32.mrb[0].mxu0
    %v3113 = vadd.f32 %v985, %v3112
    %v3114 = vpop.f32.mrb[0].mxu0
    %v3115 = vadd.f32 %v985, %v3114
    %3116 = vdwg.mxu0
    %3117 = vmatprep.subr.bf16.mxu0 %v3015
    %3118 = vmatpush1.bf16.msra.mxu0 %v3014
    %3119 = vmatprep.subr.bf16.mxu0 %v3019
    %3120 = vmatpush1.bf16.msra.mxu0 %v3018
    %3121 = vmatprep.subr.bf16.mxu0 %v3023
    %3122 = vmatpush1.bf16.msra.mxu0 %v3022
    %3123 = vmatprep.subr.bf16.mxu0 %v3027
    %3124 = vmatpush1.bf16.msra.mxu0 %v3026
    %3125 = vmatprep.subr.bf16.mxu0 %v3031
    %3126 = vmatpush1.bf16.msra.mxu0 %v3030
    %3127 = vmatprep.subr.bf16.mxu0 %v3035
    %3128 = vmatpush1.bf16.msra.mxu0 %v3034
    %3129 = vmatprep.subr.bf16.mxu0 %v3039
    %3130 = vmatpush1.bf16.msra.mxu0 %v3038
    %3131 = vmatprep.subr.bf16.mxu0 %v3043
    %3132 = vmatpush1.bf16.msra.mxu0 %v3042
    %3133 = vmatprep.subr.bf16.mxu0 0
    %3134 = vmatpush1.bf16.msra.mxu0 0
    %3135 = vmatprep.subr.bf16.mxu0 0
    %3136 = vmatpush1.bf16.msra.mxu0 0
    %3137 = vmatprep.subr.bf16.mxu0 0
    %3138 = vmatpush1.bf16.msra.mxu0 0
    %3139 = vmatprep.subr.bf16.mxu0 0
    %3140 = vmatpush1.bf16.msra.mxu0 0
    %3141 = vmatprep.subr.bf16.mxu0 0
    %3142 = vmatpush1.bf16.msra.mxu0 0
    %3143 = vmatprep.subr.bf16.mxu0 0
    %3144 = vmatpush1.bf16.msra.mxu0 0
    %3145 = vmatprep.subr.bf16.mxu0 0
    %3146 = vmatpush1.bf16.msra.mxu0 0
    %3147 = vmatprep.subr.bf16.mxu0 0
    %3148 = vmatpush1.bf16.msra.mxu0 0
    %3149 = vmatprep.mubr.bf16.mxu0 0
    %3150 = vmatmul.mubr.bf16.gmra.mrb[0].mxu0 %v1003
    %v3151 = vpop.f32.mrb[0].mxu0
    %v3152 = vadd.f32 %v950, %v3151
    %v3153 = vpop.f32.mrb[0].mxu0
    %v3154 = vadd.f32 %v950, %v3153
    %v3155 = vpop.f32.mrb[0].mxu0
    %v3156 = vadd.f32 %v955, %v3155
    %v3157 = vpop.f32.mrb[0].mxu0
    %v3158 = vadd.f32 %v955, %v3157
    %3159 = vmatprep.mubr.bf16.mxu0 0
    %3160 = vmatmul.mubr.bf16.gmra.mrb[0].mxu0 %v1004
    %v3161 = vpop.f32.mrb[0].mxu0
    %v3162 = vadd.f32 %v960, %v3161
    %v3163 = vpop.f32.mrb[0].mxu0
    %v3164 = vadd.f32 %v960, %v3163
    %v3165 = vpop.f32.mrb[0].mxu0
    %v3166 = vadd.f32 %v965, %v3165
    %v3167 = vpop.f32.mrb[0].mxu0
    %v3168 = vadd.f32 %v965, %v3167
    %3169 = vmatprep.mubr.bf16.mxu0 0
    %3170 = vmatmul.mubr.bf16.gmra.mrb[0].mxu0 %v1005
    %v3171 = vpop.f32.mrb[0].mxu0
    %v3172 = vadd.f32 %v970, %v3171
    %v3173 = vpop.f32.mrb[0].mxu0
    %v3174 = vadd.f32 %v970, %v3173
    %v3175 = vpop.f32.mrb[0].mxu0
    %v3176 = vadd.f32 %v975, %v3175
    %v3177 = vpop.f32.mrb[0].mxu0
    %v3178 = vadd.f32 %v975, %v3177
    %3179 = vmatprep.mubr.bf16.mxu0 0
    %3180 = vmatmul.mubr.bf16.gmra.mrb[0].mxu0 %v1006
    %v3181 = vpop.f32.mrb[0].mxu0
    %v3182 = vadd.f32 %v980, %v3181
    %v3183 = vpop.f32.mrb[0].mxu0
    %v3184 = vadd.f32 %v980, %v3183
    %v3185 = vpop.f32.mrb[0].mxu0
    %v3186 = vadd.f32 %v985, %v3185
    %v3187 = vpop.f32.mrb[0].mxu0
    %v3188 = vadd.f32 %v985, %v3187
    %3189 = vdwg.mxu0
    %v3190 = vmax.f32 %v3079, 0.0
    %v3191 = vmax.f32 %v3081, 0.0
    %v3192 = vmax.f32 %v3152, 0.0
    %v3193 = vmax.f32 %v3154, 0.0
    %v3194 = vmax.f32 %v3083, 0.0
    %v3195 = vmax.f32 %v3085, 0.0
    %v3196 = vmax.f32 %v3156, 0.0
    %v3197 = vmax.f32 %v3158, 0.0
    %v3198 = vmax.f32 %v3089, 0.0
    %v3199 = vmax.f32 %v3091, 0.0
    %v3200 = vmax.f32 %v3162, 0.0
    %v3201 = vmax.f32 %v3164, 0.0
    %v3202 = vmax.f32 %v3093, 0.0
    %v3203 = vmax.f32 %v3095, 0.0
    %v3204 = vmax.f32 %v3166, 0.0
    %v3205 = vmax.f32 %v3168, 0.0
    %v3206 = vmax.f32 %v3099, 0.0
    %v3207 = vmax.f32 %v3101, 0.0
    %v3208 = vmax.f32 %v3172, 0.0
    %v3209 = vmax.f32 %v3174, 0.0
    %v3210 = vmax.f32 %v3103, 0.0
    %v3211 = vmax.f32 %v3105, 0.0
    %v3212 = vmax.f32 %v3176, 0.0
    %v3213 = vmax.f32 %v3178, 0.0
    %v3214 = vmax.f32 %v3109, 0.0
    %v3215 = vmax.f32 %v3111, 0.0
    %v3216 = vmax.f32 %v3182, 0.0
    %v3217 = vmax.f32 %v3184, 0.0
    %v3218 = vmax.f32 %v3113, 0.0
    %v3219 = vmax.f32 %v3115, 0.0
    %v3220 = vmax.f32 %v3186, 0.0
    %v3221 = vmax.f32 %v3188, 0.0
    %v3222 = vpack.c.bf16 %v3194, %v3190
    %v3223 = vpack.c.bf16 %v3195, %v3191
    %v3224 = vpack.c.bf16 %v3196, %v3192
    %v3225 = vpack.c.bf16 %v3197, %v3193
    %v3226 = vpack.c.bf16 %v3202, %v3198
    %v3227 = vpack.c.bf16 %v3203, %v3199
    %v3228 = vpack.c.bf16 %v3204, %v3200
    %v3229 = vpack.c.bf16 %v3205, %v3201
    %v3230 = vpack.c.bf16 %v3210, %v3206
    %v3231 = vpack.c.bf16 %v3211, %v3207
    %v3232 = vpack.c.bf16 %v3212, %v3208
    %v3233 = vpack.c.bf16 %v3213, %v3209
    %v3234 = vpack.c.bf16 %v3218, %v3214
    %v3235 = vpack.c.bf16 %v3219, %v3215
    %v3236 = vpack.c.bf16 %v3220, %v3216
    %v3237 = vpack.c.bf16 %v3221, %v3217
    %3238 = vmatprep.subr.bf16.mxu0 %v3223
    %3239 = vmatpush1.bf16.msra.mxu0 %v3222
    %3240 = vmatprep.subr.bf16.mxu0 %v3227
    %3241 = vmatpush1.bf16.msra.mxu0 %v3226
    %3242 = vmatprep.subr.bf16.mxu0 %v3231
    %3243 = vmatpush1.bf16.msra.mxu0 %v3230
    %3244 = vmatprep.subr.bf16.mxu0 %v3235
    %3245 = vmatpush1.bf16.msra.mxu0 %v3234
    %3246 = vmatprep.subr.bf16.mxu0 0
    %3247 = vmatpush1.bf16.msra.mxu0 0
    %3248 = vmatprep.subr.bf16.mxu0 0
    %3249 = vmatpush1.bf16.msra.mxu0 0
    %3250 = vmatprep.subr.bf16.mxu0 0
    %3251 = vmatpush1.bf16.msra.mxu0 0
    %3252 = vmatprep.subr.bf16.mxu0 0
    %3253 = vmatpush1.bf16.msra.mxu0 0
    %3254 = vmatprep.subr.bf16.mxu0 0
    %3255 = vmatpush1.bf16.msra.mxu0 0
    %3256 = vmatprep.subr.bf16.mxu0 0
    %3257 = vmatpush1.bf16.msra.mxu0 0
    %3258 = vmatprep.subr.bf16.mxu0 0
    %3259 = vmatpush1.bf16.msra.mxu0 0
    %3260 = vmatprep.subr.bf16.mxu0 0
    %3261 = vmatpush1.bf16.msra.mxu0 0
    %3262 = vmatprep.subr.bf16.mxu0 0
    %3263 = vmatpush1.bf16.msra.mxu0 0
    %3264 = vmatprep.subr.bf16.mxu0 0
    %3265 = vmatpush1.bf16.msra.mxu0 0
    %3266 = vmatprep.subr.bf16.mxu0 0
    %3267 = vmatpush1.bf16.msra.mxu0 0
    %3268 = vmatprep.subr.bf16.mxu0 0
    %3269 = vmatpush1.bf16.msra.mxu0 0
    %3270 = vmatprep.mubr.bf16.mxu0 0
    %3271 = vmatmul.mubr.bf16.gmra.mrb[0].mxu0 %v1237
    %v3272 = vpop.f32.mrb[0].mxu0
    %v3273 = vadd.f32 %v1208, %v3272
    %v3274 = vpop.f32.mrb[0].mxu0
    %v3275 = vadd.f32 %v1208, %v3274
    %v3276 = vpop.f32.mrb[0].mxu0
    %v3277 = vadd.f32 %v1213, %v3276
    %v3278 = vpop.f32.mrb[0].mxu0
    %v3279 = vadd.f32 %v1213, %v3278
    %3280 = vmatprep.mubr.bf16.mxu0 0
    %3281 = vmatmul.mubr.bf16.gmra.mrb[0].mxu0 %v1240
    %v3282 = vpop.f32.mrb[0].mxu0
    %v3283 = vadd.f32 %v1218, %v3282
    %v3284 = vpop.f32.mrb[0].mxu0
    %v3285 = vadd.f32 %v1218, %v3284
    %v3286 = vpop.f32.mrb[0].mxu0
    %v3287 = vadd.f32 %v1223, %v3286
    %v3288 = vpop.f32.mrb[0].mxu0
    %v3289 = vadd.f32 %v1223, %v3288
    %3290 = vdwg.mxu0
    %3291 = vmatprep.subr.bf16.mxu0 %v3225
    %3292 = vmatpush1.bf16.msra.mxu0 %v3224
    %3293 = vmatprep.subr.bf16.mxu0 %v3229
    %3294 = vmatpush1.bf16.msra.mxu0 %v3228
    %3295 = vmatprep.subr.bf16.mxu0 %v3233
    %3296 = vmatpush1.bf16.msra.mxu0 %v3232
    %3297 = vmatprep.subr.bf16.mxu0 %v3237
    %3298 = vmatpush1.bf16.msra.mxu0 %v3236
    %3299 = vmatprep.subr.bf16.mxu0 0
    %3300 = vmatpush1.bf16.msra.mxu0 0
    %3301 = vmatprep.subr.bf16.mxu0 0
    %3302 = vmatpush1.bf16.msra.mxu0 0
    %3303 = vmatprep.subr.bf16.mxu0 0
    %3304 = vmatpush1.bf16.msra.mxu0 0
    %3305 = vmatprep.subr.bf16.mxu0 0
    %3306 = vmatpush1.bf16.msra.mxu0 0
    %3307 = vmatprep.subr.bf16.mxu0 0
    %3308 = vmatpush1.bf16.msra.mxu0 0
    %3309 = vmatprep.subr.bf16.mxu0 0
    %3310 = vmatpush1.bf16.msra.mxu0 0
    %3311 = vmatprep.subr.bf16.mxu0 0
    %3312 = vmatpush1.bf16.msra.mxu0 0
    %3313 = vmatprep.subr.bf16.mxu0 0
    %3314 = vmatpush1.bf16.msra.mxu0 0
    %3315 = vmatprep.subr.bf16.mxu0 0
    %3316 = vmatpush1.bf16.msra.mxu0 0
    %3317 = vmatprep.subr.bf16.mxu0 0
    %3318 = vmatpush1.bf16.msra.mxu0 0
    %3319 = vmatprep.subr.bf16.mxu0 0
    %3320 = vmatpush1.bf16.msra.mxu0 0
    %3321 = vmatprep.subr.bf16.mxu0 0
    %3322 = vmatpush1.bf16.msra.mxu0 0
    %3323 = vmatprep.mubr.bf16.mxu0 0
    %3324 = vmatmul.mubr.bf16.gmra.mrb[0].mxu0 %v1237
    %v3325 = vpop.f32.mrb[0].mxu0
    %v3326 = vadd.f32 %v1208, %v3325
    %v3327 = vpop.f32.mrb[0].mxu0
    %v3328 = vadd.f32 %v1208, %v3327
    %v3329 = vpop.f32.mrb[0].mxu0
    %v3330 = vadd.f32 %v1213, %v3329
    %v3331 = vpop.f32.mrb[0].mxu0
    %v3332 = vadd.f32 %v1213, %v3331
    %3333 = vmatprep.mubr.bf16.mxu0 0
    %3334 = vmatmul.mubr.bf16.gmra.mrb[0].mxu0 %v1240
    %v3335 = vpop.f32.mrb[0].mxu0
    %v3336 = vadd.f32 %v1218, %v3335
    %v3337 = vpop.f32.mrb[0].mxu0
    %v3338 = vadd.f32 %v1218, %v3337
    %v3339 = vpop.f32.mrb[0].mxu0
    %v3340 = vadd.f32 %v1223, %v3339
    %v3341 = vpop.f32.mrb[0].mxu0
    %v3342 = vadd.f32 %v1223, %v3341
    %3343 = vdwg.mxu0
    %v3344 = vmax.f32 %v3273, 0.0
    %v3345 = vmax.f32 %v3275, 0.0
    %v3346 = vmax.f32 %v3326, 0.0
    %v3347 = vmax.f32 %v3328, 0.0
    %v3348 = vmax.f32 %v3277, 0.0
    %v3349 = vmax.f32 %v3279, 0.0
    %v3350 = vmax.f32 %v3330, 0.0
    %v3351 = vmax.f32 %v3332, 0.0
    %v3352 = vmax.f32 %v3283, 0.0
    %v3353 = vmax.f32 %v3285, 0.0
    %v3354 = vmax.f32 %v3336, 0.0
    %v3355 = vmax.f32 %v3338, 0.0
    %v3356 = vmax.f32 %v3287, 0.0
    %v3357 = vmax.f32 %v3289, 0.0
    %v3358 = vmax.f32 %v3340, 0.0
    %v3359 = vmax.f32 %v3342, 0.0
    %v3360 = vmul.f32 %v3344, %v1367
    %v3361 = vmul.f32 %v3345, %v1367
    %v3362 = vmul.f32 %v3346, %v1367
    %v3363 = vmul.f32 %v3347, %v1367
    %v3364 = vmul.f32 %v3348, %v1372
    %v3365 = vmul.f32 %v3349, %v1372
    %v3366 = vmul.f32 %v3350, %v1372
    %v3367 = vmul.f32 %v3351, %v1372
    %v3368 = vmul.f32 %v3352, %v1377
    %v3369 = vmul.f32 %v3353, %v1377
    %v3370 = vmul.f32 %v3354, %v1377
    %v3371 = vmul.f32 %v3355, %v1377
    %v3372 = vmul.f32 %v3356, %v1382
    %v3373 = vmul.f32 %v3357, %v1382
    %v3374 = vmul.f32 %v3358, %v1382
    %v3375 = vmul.f32 %v3359, %v1382
    %v3376 = vadd.f32 %v3360, %v3364
    %v3377 = vadd.f32 %v3376, %v3368
    %v3378 = vadd.f32 %v3377, %v3372
    %v3379 = vrot.slane %v3378, 4
    %v3380 = vadd.f32 %v3378, %v3379
    %v3381 = vrot.slane %v3380, 2
    %v3382 = vadd.f32 %v3380, %v3381
    %v3383 = vrot.slane %v3382, 1
    %v3384 = vadd.f32 %v3382, %v3383
    %v3385 = vadd.f32 %v3361, %v3365
    %v3386 = vadd.f32 %v3385, %v3369
    %v3387 = vadd.f32 %v3386, %v3373
    %v3388 = vrot.slane %v3387, 4
    %v3389 = vadd.f32 %v3387, %v3388
    %v3390 = vrot.slane %v3389, 2
    %v3391 = vadd.f32 %v3389, %v3390
    %v3392 = vrot.slane %v3391, 1
    %v3393 = vadd.f32 %v3391, %v3392
    %v3394 = vadd.f32 %v3362, %v3366
    %v3395 = vadd.f32 %v3394, %v3370
    %v3396 = vadd.f32 %v3395, %v3374
    %v3397 = vrot.slane %v3396, 4
    %v3398 = vadd.f32 %v3396, %v3397
    %v3399 = vrot.slane %v3398, 2
    %v3400 = vadd.f32 %v3398, %v3399
    %v3401 = vrot.slane %v3400, 1
    %v3402 = vadd.f32 %v3400, %v3401
    %v3403 = vadd.f32 %v3363, %v3367
    %v3404 = vadd.f32 %v3403, %v3371
    %v3405 = vadd.f32 %v3404, %v3375
    %v3406 = vrot.slane %v3405, 4
    %v3407 = vadd.f32 %v3405, %v3406
    %v3408 = vrot.slane %v3407, 2
    %v3409 = vadd.f32 %v3407, %v3408
    %v3410 = vrot.slane %v3409, 1
    %v3411 = vadd.f32 %v3409, %v3410
    %v3412 = vadd.f32 %v3384, %v1444
    %v3413 = vadd.f32 %v3393, %v1444
    %v3414 = vadd.f32 %v3402, %v1444
    %v3415 = vadd.f32 %v3411, %v1444
    %v3416 = vsub.f32 0.0, %v3412
    %v3417 = vsub.f32 0.0, %v3413
    %v3418 = vsub.f32 0.0, %v3414
    %v3419 = vsub.f32 0.0, %v3415
    %v3420 = vmul.f32 %v3416, 1.442695
    %v3421 = vpow.pop %v3420
    %v3422 = vmul.f32 %v3417, 1.442695
    %v3423 = vpow.pop %v3422
    %v3424 = vmul.f32 %v3418, 1.442695
    %v3425 = vpow.pop %v3424
    %v3426 = vmul.f32 %v3419, 1.442695
    %v3427 = vpow.pop %v3426
    %v3428 = vadd.f32 %v3421, 1.0
    %v3429 = vadd.f32 %v3423, 1.0
    %v3430 = vadd.f32 %v3425, 1.0
    %v3431 = vadd.f32 %v3427, 1.0
    %v3432 = vrcp.pop %v3428
    %v3433 = vrcp.pop %v3429
    %v3434 = vrcp.pop %v3430
    %v3435 = vrcp.pop %v3431
    %v3440 = vcombine.low %v3432, %v3433
    %v3441 = vcombine.low %v3434, %v3435
    %v3443 = vunpack.c.l.s4 1966171168
    %v3444 = vunpack.c.0.s8 %v3443
    %v3445 = vlaneseq
    %v3446 = vshrl.u32 %v3445, 7
    %v3447 = vsub.s32 %v3444, %v3446
    %v3448 = vrot.slane %v3440, %v3447
    %v3450 = vunpack.c.l.s4 1966171168
    %v3451 = vunpack.c.0.s8 %v3450
    %v3452 = vlaneseq
    %v3453 = vshrl.u32 %v3452, 7
    %v3454 = vsub.s32 %v3451, %v3453
    %v3455 = vrot.slane %v3441, %v3454
    %v3456 = vcombine.low %v3448, %v3455
    %v3458 = vunpack.c.l.s4 1966171168
    %v3459 = vunpack.c.0.s8 %v3458
    %v3460 = vlaneseq
    %v3461 = vshrl.u32 %v3460, 7
    %v3462 = vsub.s32 %v3459, %v3461
    %v3463 = vrot.slane %v3456, %v3462
    %s3465 = scalar_lea.vmem [#allocation3], 8
    %3466 = vst.msk [vmem:[%s3465] sm:$0xf] %vm1501, %v3463
    %s3467 = scalar_lea.vmem %s0, 12
    %v3468 = vld [vmem:[%s3467] sm:$0xf]
    %v3469 = vcvt.s32.f32 %v3468
    %s3470 = scalar_lea.vmem %s1, 12
    %v3471 = vld [vmem:[%s3470] sm:$0xf]
    %v3472 = vcvt.s32.f32 %v3471
    %s3473 = scalar_lea.vmem %s2, 12
    %v3474 = vld [vmem:[%s3473] sm:$0xf]
    %v3475 = vcvt.s32.f32 %v3474
    %v3476 = vsub.f32 %v3475, 1.0
    %v3477 = vrcp.pop %v3476
    %v3478 = vmul.f32 1.0, %v3477
    %v3479 = vmul.f32 %v3469, %v3478
    %v3480 = vsub.f32 %v3472, 1.0
    %v3481 = vmul.f32 %v3480, %v3478
    %v3482 = vmul.f32 %v3475, 0.11111111
    %v3484 = vlaneseq
    %v3485 = vshrl.u32 %v3484, 7
    %v3486 = vsub.s32 0, %v3485
    %v3487 = vrot.slane %v3479, %v3486
    %v3488 = vlaneseq
    %v3489 = vshrl.u32 %v3488, 7
    %v3490 = vsub.s32 1, %v3489
    %v3491 = vrot.slane %v3479, %v3490
    %v3492 = vlaneseq
    %v3493 = vshrl.u32 %v3492, 7
    %v3494 = vsub.s32 2, %v3493
    %v3495 = vrot.slane %v3479, %v3494
    %v3496 = vlaneseq
    %v3497 = vshrl.u32 %v3496, 7
    %v3498 = vsub.s32 3, %v3497
    %v3499 = vrot.slane %v3479, %v3498
    %v3504 = vmul.f32 %v119, %v3487
    %v3505 = vmul.f32 %v119, %v3491
    %v3506 = vmul.f32 %v119, %v3495
    %v3507 = vmul.f32 %v119, %v3499
    %v3508 = vmul.f32 %v124, %v3487
    %v3509 = vmul.f32 %v124, %v3491
    %v3510 = vmul.f32 %v124, %v3495
    %v3511 = vmul.f32 %v124, %v3499
    %v3512 = vmul.f32 %v129, %v3487
    %v3513 = vmul.f32 %v129, %v3491
    %v3514 = vmul.f32 %v129, %v3495
    %v3515 = vmul.f32 %v129, %v3499
    %v3516 = vmul.f32 %v134, %v3487
    %v3517 = vmul.f32 %v134, %v3491
    %v3518 = vmul.f32 %v134, %v3495
    %v3519 = vmul.f32 %v134, %v3499
    %v3520 = vmul.f32 %v139, %v3487
    %v3521 = vmul.f32 %v139, %v3491
    %v3522 = vmul.f32 %v139, %v3495
    %v3523 = vmul.f32 %v139, %v3499
    %v3524 = vmul.f32 %v144, %v3487
    %v3525 = vmul.f32 %v144, %v3491
    %v3526 = vmul.f32 %v144, %v3495
    %v3527 = vmul.f32 %v144, %v3499
    %v3528 = vmul.f32 %v149, %v3487
    %v3529 = vmul.f32 %v149, %v3491
    %v3530 = vmul.f32 %v149, %v3495
    %v3531 = vmul.f32 %v149, %v3499
    %v3532 = vmul.f32 %v154, %v3487
    %v3533 = vmul.f32 %v154, %v3491
    %v3534 = vmul.f32 %v154, %v3495
    %v3535 = vmul.f32 %v154, %v3499
    %v3536 = vmul.f32 %v159, %v3487
    %v3537 = vmul.f32 %v159, %v3491
    %v3538 = vmul.f32 %v159, %v3495
    %v3539 = vmul.f32 %v159, %v3499
    %v3540 = vmul.f32 %v164, %v3487
    %v3541 = vmul.f32 %v164, %v3491
    %v3542 = vmul.f32 %v164, %v3495
    %v3543 = vmul.f32 %v164, %v3499
    %v3544 = vmul.f32 %v169, %v3487
    %v3545 = vmul.f32 %v169, %v3491
    %v3546 = vmul.f32 %v169, %v3495
    %v3547 = vmul.f32 %v169, %v3499
    %v3548 = vmul.f32 %v174, %v3487
    %v3549 = vmul.f32 %v174, %v3491
    %v3550 = vmul.f32 %v174, %v3495
    %v3551 = vmul.f32 %v174, %v3499
    %v3552 = vmul.f32 %v179, %v3487
    %v3553 = vmul.f32 %v179, %v3491
    %v3554 = vmul.f32 %v179, %v3495
    %v3555 = vmul.f32 %v179, %v3499
    %v3556 = vmul.f32 %v184, %v3487
    %v3557 = vmul.f32 %v184, %v3491
    %v3558 = vmul.f32 %v184, %v3495
    %v3559 = vmul.f32 %v184, %v3499
    %v3560 = vmul.f32 %v189, %v3487
    %v3561 = vmul.f32 %v189, %v3491
    %v3562 = vmul.f32 %v189, %v3495
    %v3563 = vmul.f32 %v189, %v3499
    %v3564 = vmul.f32 %v194, %v3487
    %v3565 = vmul.f32 %v194, %v3491
    %v3566 = vmul.f32 %v194, %v3495
    %v3567 = vmul.f32 %v194, %v3499
    %v3569 = vlaneseq
    %v3570 = vshrl.u32 %v3569, 7
    %v3571 = vsub.s32 0, %v3570
    %v3572 = vrot.slane %v3481, %v3571
    %v3573 = vlaneseq
    %v3574 = vshrl.u32 %v3573, 7
    %v3575 = vsub.s32 1, %v3574
    %v3576 = vrot.slane %v3481, %v3575
    %v3577 = vlaneseq
    %v3578 = vshrl.u32 %v3577, 7
    %v3579 = vsub.s32 2, %v3578
    %v3580 = vrot.slane %v3481, %v3579
    %v3581 = vlaneseq
    %v3582 = vshrl.u32 %v3581, 7
    %v3583 = vsub.s32 3, %v3582
    %v3584 = vrot.slane %v3481, %v3583
    %v3589 = vmul.f32 %v283, %v3572
    %v3590 = vmul.f32 %v283, %v3576
    %v3591 = vmul.f32 %v283, %v3580
    %v3592 = vmul.f32 %v283, %v3584
    %v3593 = vmul.f32 %v287, %v3572
    %v3594 = vmul.f32 %v287, %v3576
    %v3595 = vmul.f32 %v287, %v3580
    %v3596 = vmul.f32 %v287, %v3584
    %v3597 = vmul.f32 %v291, %v3572
    %v3598 = vmul.f32 %v291, %v3576
    %v3599 = vmul.f32 %v291, %v3580
    %v3600 = vmul.f32 %v291, %v3584
    %v3601 = vmul.f32 %v295, %v3572
    %v3602 = vmul.f32 %v295, %v3576
    %v3603 = vmul.f32 %v295, %v3580
    %v3604 = vmul.f32 %v295, %v3584
    %v3605 = vmul.f32 %v299, %v3572
    %v3606 = vmul.f32 %v299, %v3576
    %v3607 = vmul.f32 %v299, %v3580
    %v3608 = vmul.f32 %v299, %v3584
    %v3609 = vmul.f32 %v303, %v3572
    %v3610 = vmul.f32 %v303, %v3576
    %v3611 = vmul.f32 %v303, %v3580
    %v3612 = vmul.f32 %v303, %v3584
    %v3613 = vmul.f32 %v307, %v3572
    %v3614 = vmul.f32 %v307, %v3576
    %v3615 = vmul.f32 %v307, %v3580
    %v3616 = vmul.f32 %v307, %v3584
    %v3617 = vmul.f32 %v311, %v3572
    %v3618 = vmul.f32 %v311, %v3576
    %v3619 = vmul.f32 %v311, %v3580
    %v3620 = vmul.f32 %v311, %v3584
    %v3621 = vmul.f32 %v315, %v3572
    %v3622 = vmul.f32 %v315, %v3576
    %v3623 = vmul.f32 %v315, %v3580
    %v3624 = vmul.f32 %v315, %v3584
    %v3625 = vmul.f32 %v319, %v3572
    %v3626 = vmul.f32 %v319, %v3576
    %v3627 = vmul.f32 %v319, %v3580
    %v3628 = vmul.f32 %v319, %v3584
    %v3629 = vmul.f32 %v323, %v3572
    %v3630 = vmul.f32 %v323, %v3576
    %v3631 = vmul.f32 %v323, %v3580
    %v3632 = vmul.f32 %v323, %v3584
    %v3633 = vmul.f32 %v327, %v3572
    %v3634 = vmul.f32 %v327, %v3576
    %v3635 = vmul.f32 %v327, %v3580
    %v3636 = vmul.f32 %v327, %v3584
    %v3637 = vmul.f32 %v331, %v3572
    %v3638 = vmul.f32 %v331, %v3576
    %v3639 = vmul.f32 %v331, %v3580
    %v3640 = vmul.f32 %v331, %v3584
    %v3641 = vmul.f32 %v335, %v3572
    %v3642 = vmul.f32 %v335, %v3576
    %v3643 = vmul.f32 %v335, %v3580
    %v3644 = vmul.f32 %v335, %v3584
    %v3645 = vmul.f32 %v339, %v3572
    %v3646 = vmul.f32 %v339, %v3576
    %v3647 = vmul.f32 %v339, %v3580
    %v3648 = vmul.f32 %v339, %v3584
    %v3649 = vmul.f32 %v343, %v3572
    %v3650 = vmul.f32 %v343, %v3576
    %v3651 = vmul.f32 %v343, %v3580
    %v3652 = vmul.f32 %v343, %v3584
    %v3653 = vadd.f32 %v3504, %v3589
    %v3654 = vadd.f32 %v3505, %v3590
    %v3655 = vadd.f32 %v3506, %v3591
    %v3656 = vadd.f32 %v3507, %v3592
    %v3657 = vadd.f32 %v3508, %v3593
    %v3658 = vadd.f32 %v3509, %v3594
    %v3659 = vadd.f32 %v3510, %v3595
    %v3660 = vadd.f32 %v3511, %v3596
    %v3661 = vadd.f32 %v3512, %v3597
    %v3662 = vadd.f32 %v3513, %v3598
    %v3663 = vadd.f32 %v3514, %v3599
    %v3664 = vadd.f32 %v3515, %v3600
    %v3665 = vadd.f32 %v3516, %v3601
    %v3666 = vadd.f32 %v3517, %v3602
    %v3667 = vadd.f32 %v3518, %v3603
    %v3668 = vadd.f32 %v3519, %v3604
    %v3669 = vadd.f32 %v3520, %v3605
    %v3670 = vadd.f32 %v3521, %v3606
    %v3671 = vadd.f32 %v3522, %v3607
    %v3672 = vadd.f32 %v3523, %v3608
    %v3673 = vadd.f32 %v3524, %v3609
    %v3674 = vadd.f32 %v3525, %v3610
    %v3675 = vadd.f32 %v3526, %v3611
    %v3676 = vadd.f32 %v3527, %v3612
    %v3677 = vadd.f32 %v3528, %v3613
    %v3678 = vadd.f32 %v3529, %v3614
    %v3679 = vadd.f32 %v3530, %v3615
    %v3680 = vadd.f32 %v3531, %v3616
    %v3681 = vadd.f32 %v3532, %v3617
    %v3682 = vadd.f32 %v3533, %v3618
    %v3683 = vadd.f32 %v3534, %v3619
    %v3684 = vadd.f32 %v3535, %v3620
    %v3685 = vadd.f32 %v3536, %v3621
    %v3686 = vadd.f32 %v3537, %v3622
    %v3687 = vadd.f32 %v3538, %v3623
    %v3688 = vadd.f32 %v3539, %v3624
    %v3689 = vadd.f32 %v3540, %v3625
    %v3690 = vadd.f32 %v3541, %v3626
    %v3691 = vadd.f32 %v3542, %v3627
    %v3692 = vadd.f32 %v3543, %v3628
    %v3693 = vadd.f32 %v3544, %v3629
    %v3694 = vadd.f32 %v3545, %v3630
    %v3695 = vadd.f32 %v3546, %v3631
    %v3696 = vadd.f32 %v3547, %v3632
    %v3697 = vadd.f32 %v3548, %v3633
    %v3698 = vadd.f32 %v3549, %v3634
    %v3699 = vadd.f32 %v3550, %v3635
    %v3700 = vadd.f32 %v3551, %v3636
    %v3701 = vadd.f32 %v3552, %v3637
    %v3702 = vadd.f32 %v3553, %v3638
    %v3703 = vadd.f32 %v3554, %v3639
    %v3704 = vadd.f32 %v3555, %v3640
    %v3705 = vadd.f32 %v3556, %v3641
    %v3706 = vadd.f32 %v3557, %v3642
    %v3707 = vadd.f32 %v3558, %v3643
    %v3708 = vadd.f32 %v3559, %v3644
    %v3709 = vadd.f32 %v3560, %v3645
    %v3710 = vadd.f32 %v3561, %v3646
    %v3711 = vadd.f32 %v3562, %v3647
    %v3712 = vadd.f32 %v3563, %v3648
    %v3713 = vadd.f32 %v3564, %v3649
    %v3714 = vadd.f32 %v3565, %v3650
    %v3715 = vadd.f32 %v3566, %v3651
    %v3716 = vadd.f32 %v3567, %v3652
    %v3718 = vlaneseq
    %v3719 = vshrl.u32 %v3718, 7
    %v3720 = vsub.s32 0, %v3719
    %v3721 = vrot.slane %v3482, %v3720
    %v3722 = vlaneseq
    %v3723 = vshrl.u32 %v3722, 7
    %v3724 = vsub.s32 1, %v3723
    %v3725 = vrot.slane %v3482, %v3724
    %v3726 = vlaneseq
    %v3727 = vshrl.u32 %v3726, 7
    %v3728 = vsub.s32 2, %v3727
    %v3729 = vrot.slane %v3482, %v3728
    %v3730 = vlaneseq
    %v3731 = vshrl.u32 %v3730, 7
    %v3732 = vsub.s32 3, %v3731
    %v3733 = vrot.slane %v3482, %v3732
    %v3738 = vmul.f32 %v496, %v3721
    %v3739 = vmul.f32 %v496, %v3725
    %v3740 = vmul.f32 %v496, %v3729
    %v3741 = vmul.f32 %v496, %v3733
    %v3742 = vmul.f32 %v500, %v3721
    %v3743 = vmul.f32 %v500, %v3725
    %v3744 = vmul.f32 %v500, %v3729
    %v3745 = vmul.f32 %v500, %v3733
    %v3746 = vmul.f32 %v504, %v3721
    %v3747 = vmul.f32 %v504, %v3725
    %v3748 = vmul.f32 %v504, %v3729
    %v3749 = vmul.f32 %v504, %v3733
    %v3750 = vmul.f32 %v508, %v3721
    %v3751 = vmul.f32 %v508, %v3725
    %v3752 = vmul.f32 %v508, %v3729
    %v3753 = vmul.f32 %v508, %v3733
    %v3754 = vmul.f32 %v512, %v3721
    %v3755 = vmul.f32 %v512, %v3725
    %v3756 = vmul.f32 %v512, %v3729
    %v3757 = vmul.f32 %v512, %v3733
    %v3758 = vmul.f32 %v516, %v3721
    %v3759 = vmul.f32 %v516, %v3725
    %v3760 = vmul.f32 %v516, %v3729
    %v3761 = vmul.f32 %v516, %v3733
    %v3762 = vmul.f32 %v520, %v3721
    %v3763 = vmul.f32 %v520, %v3725
    %v3764 = vmul.f32 %v520, %v3729
    %v3765 = vmul.f32 %v520, %v3733
    %v3766 = vmul.f32 %v524, %v3721
    %v3767 = vmul.f32 %v524, %v3725
    %v3768 = vmul.f32 %v524, %v3729
    %v3769 = vmul.f32 %v524, %v3733
    %v3770 = vmul.f32 %v528, %v3721
    %v3771 = vmul.f32 %v528, %v3725
    %v3772 = vmul.f32 %v528, %v3729
    %v3773 = vmul.f32 %v528, %v3733
    %v3774 = vmul.f32 %v532, %v3721
    %v3775 = vmul.f32 %v532, %v3725
    %v3776 = vmul.f32 %v532, %v3729
    %v3777 = vmul.f32 %v532, %v3733
    %v3778 = vmul.f32 %v536, %v3721
    %v3779 = vmul.f32 %v536, %v3725
    %v3780 = vmul.f32 %v536, %v3729
    %v3781 = vmul.f32 %v536, %v3733
    %v3782 = vmul.f32 %v540, %v3721
    %v3783 = vmul.f32 %v540, %v3725
    %v3784 = vmul.f32 %v540, %v3729
    %v3785 = vmul.f32 %v540, %v3733
    %v3786 = vmul.f32 %v544, %v3721
    %v3787 = vmul.f32 %v544, %v3725
    %v3788 = vmul.f32 %v544, %v3729
    %v3789 = vmul.f32 %v544, %v3733
    %v3790 = vmul.f32 %v548, %v3721
    %v3791 = vmul.f32 %v548, %v3725
    %v3792 = vmul.f32 %v548, %v3729
    %v3793 = vmul.f32 %v548, %v3733
    %v3794 = vmul.f32 %v552, %v3721
    %v3795 = vmul.f32 %v552, %v3725
    %v3796 = vmul.f32 %v552, %v3729
    %v3797 = vmul.f32 %v552, %v3733
    %v3798 = vmul.f32 %v556, %v3721
    %v3799 = vmul.f32 %v556, %v3725
    %v3800 = vmul.f32 %v556, %v3729
    %v3801 = vmul.f32 %v556, %v3733
    %v3802 = vadd.f32 %v3653, %v3738
    %v3803 = vadd.f32 %v3654, %v3739
    %v3804 = vadd.f32 %v3655, %v3740
    %v3805 = vadd.f32 %v3656, %v3741
    %v3806 = vadd.f32 %v3657, %v3742
    %v3807 = vadd.f32 %v3658, %v3743
    %v3808 = vadd.f32 %v3659, %v3744
    %v3809 = vadd.f32 %v3660, %v3745
    %v3810 = vadd.f32 %v3661, %v3746
    %v3811 = vadd.f32 %v3662, %v3747
    %v3812 = vadd.f32 %v3663, %v3748
    %v3813 = vadd.f32 %v3664, %v3749
    %v3814 = vadd.f32 %v3665, %v3750
    %v3815 = vadd.f32 %v3666, %v3751
    %v3816 = vadd.f32 %v3667, %v3752
    %v3817 = vadd.f32 %v3668, %v3753
    %v3818 = vadd.f32 %v3669, %v3754
    %v3819 = vadd.f32 %v3670, %v3755
    %v3820 = vadd.f32 %v3671, %v3756
    %v3821 = vadd.f32 %v3672, %v3757
    %v3822 = vadd.f32 %v3673, %v3758
    %v3823 = vadd.f32 %v3674, %v3759
    %v3824 = vadd.f32 %v3675, %v3760
    %v3825 = vadd.f32 %v3676, %v3761
    %v3826 = vadd.f32 %v3677, %v3762
    %v3827 = vadd.f32 %v3678, %v3763
    %v3828 = vadd.f32 %v3679, %v3764
    %v3829 = vadd.f32 %v3680, %v3765
    %v3830 = vadd.f32 %v3681, %v3766
    %v3831 = vadd.f32 %v3682, %v3767
    %v3832 = vadd.f32 %v3683, %v3768
    %v3833 = vadd.f32 %v3684, %v3769
    %v3834 = vadd.f32 %v3685, %v3770
    %v3835 = vadd.f32 %v3686, %v3771
    %v3836 = vadd.f32 %v3687, %v3772
    %v3837 = vadd.f32 %v3688, %v3773
    %v3838 = vadd.f32 %v3689, %v3774
    %v3839 = vadd.f32 %v3690, %v3775
    %v3840 = vadd.f32 %v3691, %v3776
    %v3841 = vadd.f32 %v3692, %v3777
    %v3842 = vadd.f32 %v3693, %v3778
    %v3843 = vadd.f32 %v3694, %v3779
    %v3844 = vadd.f32 %v3695, %v3780
    %v3845 = vadd.f32 %v3696, %v3781
    %v3846 = vadd.f32 %v3697, %v3782
    %v3847 = vadd.f32 %v3698, %v3783
    %v3848 = vadd.f32 %v3699, %v3784
    %v3849 = vadd.f32 %v3700, %v3785
    %v3850 = vadd.f32 %v3701, %v3786
    %v3851 = vadd.f32 %v3702, %v3787
    %v3852 = vadd.f32 %v3703, %v3788
    %v3853 = vadd.f32 %v3704, %v3789
    %v3854 = vadd.f32 %v3705, %v3790
    %v3855 = vadd.f32 %v3706, %v3791
    %v3856 = vadd.f32 %v3707, %v3792
    %v3857 = vadd.f32 %v3708, %v3793
    %v3858 = vadd.f32 %v3709, %v3794
    %v3859 = vadd.f32 %v3710, %v3795
    %v3860 = vadd.f32 %v3711, %v3796
    %v3861 = vadd.f32 %v3712, %v3797
    %v3862 = vadd.f32 %v3713, %v3798
    %v3863 = vadd.f32 %v3714, %v3799
    %v3864 = vadd.f32 %v3715, %v3800
    %v3865 = vadd.f32 %v3716, %v3801
    %v3866 = vadd.f32 %v3802, %v710
    %v3867 = vadd.f32 %v3803, %v710
    %v3868 = vadd.f32 %v3804, %v710
    %v3869 = vadd.f32 %v3805, %v710
    %v3870 = vadd.f32 %v3806, %v715
    %v3871 = vadd.f32 %v3807, %v715
    %v3872 = vadd.f32 %v3808, %v715
    %v3873 = vadd.f32 %v3809, %v715
    %v3874 = vadd.f32 %v3810, %v720
    %v3875 = vadd.f32 %v3811, %v720
    %v3876 = vadd.f32 %v3812, %v720
    %v3877 = vadd.f32 %v3813, %v720
    %v3878 = vadd.f32 %v3814, %v725
    %v3879 = vadd.f32 %v3815, %v725
    %v3880 = vadd.f32 %v3816, %v725
    %v3881 = vadd.f32 %v3817, %v725
    %v3882 = vadd.f32 %v3818, %v730
    %v3883 = vadd.f32 %v3819, %v730
    %v3884 = vadd.f32 %v3820, %v730
    %v3885 = vadd.f32 %v3821, %v730
    %v3886 = vadd.f32 %v3822, %v735
    %v3887 = vadd.f32 %v3823, %v735
    %v3888 = vadd.f32 %v3824, %v735
    %v3889 = vadd.f32 %v3825, %v735
    %v3890 = vadd.f32 %v3826, %v740
    %v3891 = vadd.f32 %v3827, %v740
    %v3892 = vadd.f32 %v3828, %v740
    %v3893 = vadd.f32 %v3829, %v740
    %v3894 = vadd.f32 %v3830, %v745
    %v3895 = vadd.f32 %v3831, %v745
    %v3896 = vadd.f32 %v3832, %v745
    %v3897 = vadd.f32 %v3833, %v745
    %v3898 = vadd.f32 %v3834, %v750
    %v3899 = vadd.f32 %v3835, %v750
    %v3900 = vadd.f32 %v3836, %v750
    %v3901 = vadd.f32 %v3837, %v750
    %v3902 = vadd.f32 %v3838, %v755
    %v3903 = vadd.f32 %v3839, %v755
    %v3904 = vadd.f32 %v3840, %v755
    %v3905 = vadd.f32 %v3841, %v755
    %v3906 = vadd.f32 %v3842, %v760
    %v3907 = vadd.f32 %v3843, %v760
    %v3908 = vadd.f32 %v3844, %v760
    %v3909 = vadd.f32 %v3845, %v760
    %v3910 = vadd.f32 %v3846, %v765
    %v3911 = vadd.f32 %v3847, %v765
    %v3912 = vadd.f32 %v3848, %v765
    %v3913 = vadd.f32 %v3849, %v765
    %v3914 = vadd.f32 %v3850, %v770
    %v3915 = vadd.f32 %v3851, %v770
    %v3916 = vadd.f32 %v3852, %v770
    %v3917 = vadd.f32 %v3853, %v770
    %v3918 = vadd.f32 %v3854, %v775
    %v3919 = vadd.f32 %v3855, %v775
    %v3920 = vadd.f32 %v3856, %v775
    %v3921 = vadd.f32 %v3857, %v775
    %v3922 = vadd.f32 %v3858, %v780
    %v3923 = vadd.f32 %v3859, %v780
    %v3924 = vadd.f32 %v3860, %v780
    %v3925 = vadd.f32 %v3861, %v780
    %v3926 = vadd.f32 %v3862, %v785
    %v3927 = vadd.f32 %v3863, %v785
    %v3928 = vadd.f32 %v3864, %v785
    %v3929 = vadd.f32 %v3865, %v785
    %v3930 = vmax.f32 %v3866, 0.0
    %v3931 = vmax.f32 %v3867, 0.0
    %v3932 = vmax.f32 %v3868, 0.0
    %v3933 = vmax.f32 %v3869, 0.0
    %v3934 = vmax.f32 %v3870, 0.0
    %v3935 = vmax.f32 %v3871, 0.0
    %v3936 = vmax.f32 %v3872, 0.0
    %v3937 = vmax.f32 %v3873, 0.0
    %v3938 = vmax.f32 %v3874, 0.0
    %v3939 = vmax.f32 %v3875, 0.0
    %v3940 = vmax.f32 %v3876, 0.0
    %v3941 = vmax.f32 %v3877, 0.0
    %v3942 = vmax.f32 %v3878, 0.0
    %v3943 = vmax.f32 %v3879, 0.0
    %v3944 = vmax.f32 %v3880, 0.0
    %v3945 = vmax.f32 %v3881, 0.0
    %v3946 = vmax.f32 %v3882, 0.0
    %v3947 = vmax.f32 %v3883, 0.0
    %v3948 = vmax.f32 %v3884, 0.0
    %v3949 = vmax.f32 %v3885, 0.0
    %v3950 = vmax.f32 %v3886, 0.0
    %v3951 = vmax.f32 %v3887, 0.0
    %v3952 = vmax.f32 %v3888, 0.0
    %v3953 = vmax.f32 %v3889, 0.0
    %v3954 = vmax.f32 %v3890, 0.0
    %v3955 = vmax.f32 %v3891, 0.0
    %v3956 = vmax.f32 %v3892, 0.0
    %v3957 = vmax.f32 %v3893, 0.0
    %v3958 = vmax.f32 %v3894, 0.0
    %v3959 = vmax.f32 %v3895, 0.0
    %v3960 = vmax.f32 %v3896, 0.0
    %v3961 = vmax.f32 %v3897, 0.0
    %v3962 = vmax.f32 %v3898, 0.0
    %v3963 = vmax.f32 %v3899, 0.0
    %v3964 = vmax.f32 %v3900, 0.0
    %v3965 = vmax.f32 %v3901, 0.0
    %v3966 = vmax.f32 %v3902, 0.0
    %v3967 = vmax.f32 %v3903, 0.0
    %v3968 = vmax.f32 %v3904, 0.0
    %v3969 = vmax.f32 %v3905, 0.0
    %v3970 = vmax.f32 %v3906, 0.0
    %v3971 = vmax.f32 %v3907, 0.0
    %v3972 = vmax.f32 %v3908, 0.0
    %v3973 = vmax.f32 %v3909, 0.0
    %v3974 = vmax.f32 %v3910, 0.0
    %v3975 = vmax.f32 %v3911, 0.0
    %v3976 = vmax.f32 %v3912, 0.0
    %v3977 = vmax.f32 %v3913, 0.0
    %v3978 = vmax.f32 %v3914, 0.0
    %v3979 = vmax.f32 %v3915, 0.0
    %v3980 = vmax.f32 %v3916, 0.0
    %v3981 = vmax.f32 %v3917, 0.0
    %v3982 = vmax.f32 %v3918, 0.0
    %v3983 = vmax.f32 %v3919, 0.0
    %v3984 = vmax.f32 %v3920, 0.0
    %v3985 = vmax.f32 %v3921, 0.0
    %v3986 = vmax.f32 %v3922, 0.0
    %v3987 = vmax.f32 %v3923, 0.0
    %v3988 = vmax.f32 %v3924, 0.0
    %v3989 = vmax.f32 %v3925, 0.0
    %v3990 = vmax.f32 %v3926, 0.0
    %v3991 = vmax.f32 %v3927, 0.0
    %v3992 = vmax.f32 %v3928, 0.0
    %v3993 = vmax.f32 %v3929, 0.0
    %v3994 = vpack.c.bf16 %v3934, %v3930
    %v3995 = vpack.c.bf16 %v3935, %v3931
    %v3996 = vpack.c.bf16 %v3936, %v3932
    %v3997 = vpack.c.bf16 %v3937, %v3933
    %v3998 = vpack.c.bf16 %v3942, %v3938
    %v3999 = vpack.c.bf16 %v3943, %v3939
    %v4000 = vpack.c.bf16 %v3944, %v3940
    %v4001 = vpack.c.bf16 %v3945, %v3941
    %v4002 = vpack.c.bf16 %v3950, %v3946
    %v4003 = vpack.c.bf16 %v3951, %v3947
    %v4004 = vpack.c.bf16 %v3952, %v3948
    %v4005 = vpack.c.bf16 %v3953, %v3949
    %v4006 = vpack.c.bf16 %v3958, %v3954
    %v4007 = vpack.c.bf16 %v3959, %v3955
    %v4008 = vpack.c.bf16 %v3960, %v3956
    %v4009 = vpack.c.bf16 %v3961, %v3957
    %v4010 = vpack.c.bf16 %v3966, %v3962
    %v4011 = vpack.c.bf16 %v3967, %v3963
    %v4012 = vpack.c.bf16 %v3968, %v3964
    %v4013 = vpack.c.bf16 %v3969, %v3965
    %v4014 = vpack.c.bf16 %v3974, %v3970
    %v4015 = vpack.c.bf16 %v3975, %v3971
    %v4016 = vpack.c.bf16 %v3976, %v3972
    %v4017 = vpack.c.bf16 %v3977, %v3973
    %v4018 = vpack.c.bf16 %v3982, %v3978
    %v4019 = vpack.c.bf16 %v3983, %v3979
    %v4020 = vpack.c.bf16 %v3984, %v3980
    %v4021 = vpack.c.bf16 %v3985, %v3981
    %v4022 = vpack.c.bf16 %v3990, %v3986
    %v4023 = vpack.c.bf16 %v3991, %v3987
    %v4024 = vpack.c.bf16 %v3992, %v3988
    %v4025 = vpack.c.bf16 %v3993, %v3989
    %4026 = vmatprep.subr.bf16.mxu0 %v3995
    %4027 = vmatpush1.bf16.msra.mxu0 %v3994
    %4028 = vmatprep.subr.bf16.mxu0 %v3999
    %4029 = vmatpush1.bf16.msra.mxu0 %v3998
    %4030 = vmatprep.subr.bf16.mxu0 %v4003
    %4031 = vmatpush1.bf16.msra.mxu0 %v4002
    %4032 = vmatprep.subr.bf16.mxu0 %v4007
    %4033 = vmatpush1.bf16.msra.mxu0 %v4006
    %4034 = vmatprep.subr.bf16.mxu0 %v4011
    %4035 = vmatpush1.bf16.msra.mxu0 %v4010
    %4036 = vmatprep.subr.bf16.mxu0 %v4015
    %4037 = vmatpush1.bf16.msra.mxu0 %v4014
    %4038 = vmatprep.subr.bf16.mxu0 %v4019
    %4039 = vmatpush1.bf16.msra.mxu0 %v4018
    %4040 = vmatprep.subr.bf16.mxu0 %v4023
    %4041 = vmatpush1.bf16.msra.mxu0 %v4022
    %4042 = vmatprep.subr.bf16.mxu0 0
    %4043 = vmatpush1.bf16.msra.mxu0 0
    %4044 = vmatprep.subr.bf16.mxu0 0
    %4045 = vmatpush1.bf16.msra.mxu0 0
    %4046 = vmatprep.subr.bf16.mxu0 0
    %4047 = vmatpush1.bf16.msra.mxu0 0
    %4048 = vmatprep.subr.bf16.mxu0 0
    %4049 = vmatpush1.bf16.msra.mxu0 0
    %4050 = vmatprep.subr.bf16.mxu0 0
    %4051 = vmatpush1.bf16.msra.mxu0 0
    %4052 = vmatprep.subr.bf16.mxu0 0
    %4053 = vmatpush1.bf16.msra.mxu0 0
    %4054 = vmatprep.subr.bf16.mxu0 0
    %4055 = vmatpush1.bf16.msra.mxu0 0
    %4056 = vmatprep.subr.bf16.mxu0 0
    %4057 = vmatpush1.bf16.msra.mxu0 0
    %4058 = vmatprep.mubr.bf16.mxu0 0
    %4059 = vmatmul.mubr.bf16.gmra.mrb[0].mxu0 %v1003
    %v4060 = vpop.f32.mrb[0].mxu0
    %v4061 = vadd.f32 %v950, %v4060
    %v4062 = vpop.f32.mrb[0].mxu0
    %v4063 = vadd.f32 %v950, %v4062
    %v4064 = vpop.f32.mrb[0].mxu0
    %v4065 = vadd.f32 %v955, %v4064
    %v4066 = vpop.f32.mrb[0].mxu0
    %v4067 = vadd.f32 %v955, %v4066
    %4068 = vmatprep.mubr.bf16.mxu0 0
    %4069 = vmatmul.mubr.bf16.gmra.mrb[0].mxu0 %v1004
    %v4070 = vpop.f32.mrb[0].mxu0
    %v4071 = vadd.f32 %v960, %v4070
    %v4072 = vpop.f32.mrb[0].mxu0
    %v4073 = vadd.f32 %v960, %v4072
    %v4074 = vpop.f32.mrb[0].mxu0
    %v4075 = vadd.f32 %v965, %v4074
    %v4076 = vpop.f32.mrb[0].mxu0
    %v4077 = vadd.f32 %v965, %v4076
    %4078 = vmatprep.mubr.bf16.mxu0 0
    %4079 = vmatmul.mubr.bf16.gmra.mrb[0].mxu0 %v1005
    %v4080 = vpop.f32.mrb[0].mxu0
    %v4081 = vadd.f32 %v970, %v4080
    %v4082 = vpop.f32.mrb[0].mxu0
    %v4083 = vadd.f32 %v970, %v4082
    %v4084 = vpop.f32.mrb[0].mxu0
    %v4085 = vadd.f32 %v975, %v4084
    %v4086 = vpop.f32.mrb[0].mxu0
    %v4087 = vadd.f32 %v975, %v4086
    %4088 = vmatprep.mubr.bf16.mxu0 0
    %4089 = vmatmul.mubr.bf16.gmra.mrb[0].mxu0 %v1006
    %v4090 = vpop.f32.mrb[0].mxu0
    %v4091 = vadd.f32 %v980, %v4090
    %v4092 = vpop.f32.mrb[0].mxu0
    %v4093 = vadd.f32 %v980, %v4092
    %v4094 = vpop.f32.mrb[0].mxu0
    %v4095 = vadd.f32 %v985, %v4094
    %v4096 = vpop.f32.mrb[0].mxu0
    %v4097 = vadd.f32 %v985, %v4096
    %4098 = vdwg.mxu0
    %4099 = vmatprep.subr.bf16.mxu0 %v3997
    %4100 = vmatpush1.bf16.msra.mxu0 %v3996
    %4101 = vmatprep.subr.bf16.mxu0 %v4001
    %4102 = vmatpush1.bf16.msra.mxu0 %v4000
    %4103 = vmatprep.subr.bf16.mxu0 %v4005
    %4104 = vmatpush1.bf16.msra.mxu0 %v4004
    %4105 = vmatprep.subr.bf16.mxu0 %v4009
    %4106 = vmatpush1.bf16.msra.mxu0 %v4008
    %4107 = vmatprep.subr.bf16.mxu0 %v4013
    %4108 = vmatpush1.bf16.msra.mxu0 %v4012
    %4109 = vmatprep.subr.bf16.mxu0 %v4017
    %4110 = vmatpush1.bf16.msra.mxu0 %v4016
    %4111 = vmatprep.subr.bf16.mxu0 %v4021
    %4112 = vmatpush1.bf16.msra.mxu0 %v4020
    %4113 = vmatprep.subr.bf16.mxu0 %v4025
    %4114 = vmatpush1.bf16.msra.mxu0 %v4024
    %4115 = vmatprep.subr.bf16.mxu0 0
    %4116 = vmatpush1.bf16.msra.mxu0 0
    %4117 = vmatprep.subr.bf16.mxu0 0
    %4118 = vmatpush1.bf16.msra.mxu0 0
    %4119 = vmatprep.subr.bf16.mxu0 0
    %4120 = vmatpush1.bf16.msra.mxu0 0
    %4121 = vmatprep.subr.bf16.mxu0 0
    %4122 = vmatpush1.bf16.msra.mxu0 0
    %4123 = vmatprep.subr.bf16.mxu0 0
    %4124 = vmatpush1.bf16.msra.mxu0 0
    %4125 = vmatprep.subr.bf16.mxu0 0
    %4126 = vmatpush1.bf16.msra.mxu0 0
    %4127 = vmatprep.subr.bf16.mxu0 0
    %4128 = vmatpush1.bf16.msra.mxu0 0
    %4129 = vmatprep.subr.bf16.mxu0 0
    %4130 = vmatpush1.bf16.msra.mxu0 0
    %4131 = vmatprep.mubr.bf16.mxu0 0
    %4132 = vmatmul.mubr.bf16.gmra.mrb[0].mxu0 %v1003
    %v4133 = vpop.f32.mrb[0].mxu0
    %v4134 = vadd.f32 %v950, %v4133
    %v4135 = vpop.f32.mrb[0].mxu0
    %v4136 = vadd.f32 %v950, %v4135
    %v4137 = vpop.f32.mrb[0].mxu0
    %v4138 = vadd.f32 %v955, %v4137
    %v4139 = vpop.f32.mrb[0].mxu0
    %v4140 = vadd.f32 %v955, %v4139
    %4141 = vmatprep.mubr.bf16.mxu0 0
    %4142 = vmatmul.mubr.bf16.gmra.mrb[0].mxu0 %v1004
    %v4143 = vpop.f32.mrb[0].mxu0
    %v4144 = vadd.f32 %v960, %v4143
    %v4145 = vpop.f32.mrb[0].mxu0
    %v4146 = vadd.f32 %v960, %v4145
    %v4147 = vpop.f32.mrb[0].mxu0
    %v4148 = vadd.f32 %v965, %v4147
    %v4149 = vpop.f32.mrb[0].mxu0
    %v4150 = vadd.f32 %v965, %v4149
    %4151 = vmatprep.mubr.bf16.mxu0 0
    %4152 = vmatmul.mubr.bf16.gmra.mrb[0].mxu0 %v1005
    %v4153 = vpop.f32.mrb[0].mxu0
    %v4154 = vadd.f32 %v970, %v4153
    %v4155 = vpop.f32.mrb[0].mxu0
    %v4156 = vadd.f32 %v970, %v4155
    %v4157 = vpop.f32.mrb[0].mxu0
    %v4158 = vadd.f32 %v975, %v4157
    %v4159 = vpop.f32.mrb[0].mxu0
    %v4160 = vadd.f32 %v975, %v4159
    %4161 = vmatprep.mubr.bf16.mxu0 0
    %4162 = vmatmul.mubr.bf16.gmra.mrb[0].mxu0 %v1006
    %v4163 = vpop.f32.mrb[0].mxu0
    %v4164 = vadd.f32 %v980, %v4163
    %v4165 = vpop.f32.mrb[0].mxu0
    %v4166 = vadd.f32 %v980, %v4165
    %v4167 = vpop.f32.mrb[0].mxu0
    %v4168 = vadd.f32 %v985, %v4167
    %v4169 = vpop.f32.mrb[0].mxu0
    %v4170 = vadd.f32 %v985, %v4169
    %4171 = vdwg.mxu0
    %v4172 = vmax.f32 %v4061, 0.0
    %v4173 = vmax.f32 %v4063, 0.0
    %v4174 = vmax.f32 %v4134, 0.0
    %v4175 = vmax.f32 %v4136, 0.0
    %v4176 = vmax.f32 %v4065, 0.0
    %v4177 = vmax.f32 %v4067, 0.0
    %v4178 = vmax.f32 %v4138, 0.0
    %v4179 = vmax.f32 %v4140, 0.0
    %v4180 = vmax.f32 %v4071, 0.0
    %v4181 = vmax.f32 %v4073, 0.0
    %v4182 = vmax.f32 %v4144, 0.0
    %v4183 = vmax.f32 %v4146, 0.0
    %v4184 = vmax.f32 %v4075, 0.0
    %v4185 = vmax.f32 %v4077, 0.0
    %v4186 = vmax.f32 %v4148, 0.0
    %v4187 = vmax.f32 %v4150, 0.0
    %v4188 = vmax.f32 %v4081, 0.0
    %v4189 = vmax.f32 %v4083, 0.0
    %v4190 = vmax.f32 %v4154, 0.0
    %v4191 = vmax.f32 %v4156, 0.0
    %v4192 = vmax.f32 %v4085, 0.0
    %v4193 = vmax.f32 %v4087, 0.0
    %v4194 = vmax.f32 %v4158, 0.0
    %v4195 = vmax.f32 %v4160, 0.0
    %v4196 = vmax.f32 %v4091, 0.0
    %v4197 = vmax.f32 %v4093, 0.0
    %v4198 = vmax.f32 %v4164, 0.0
    %v4199 = vmax.f32 %v4166, 0.0
    %v4200 = vmax.f32 %v4095, 0.0
    %v4201 = vmax.f32 %v4097, 0.0
    %v4202 = vmax.f32 %v4168, 0.0
    %v4203 = vmax.f32 %v4170, 0.0
    %v4204 = vpack.c.bf16 %v4176, %v4172
    %v4205 = vpack.c.bf16 %v4177, %v4173
    %v4206 = vpack.c.bf16 %v4178, %v4174
    %v4207 = vpack.c.bf16 %v4179, %v4175
    %v4208 = vpack.c.bf16 %v4184, %v4180
    %v4209 = vpack.c.bf16 %v4185, %v4181
    %v4210 = vpack.c.bf16 %v4186, %v4182
    %v4211 = vpack.c.bf16 %v4187, %v4183
    %v4212 = vpack.c.bf16 %v4192, %v4188
    %v4213 = vpack.c.bf16 %v4193, %v4189
    %v4214 = vpack.c.bf16 %v4194, %v4190
    %v4215 = vpack.c.bf16 %v4195, %v4191
    %v4216 = vpack.c.bf16 %v4200, %v4196
    %v4217 = vpack.c.bf16 %v4201, %v4197
    %v4218 = vpack.c.bf16 %v4202, %v4198
    %v4219 = vpack.c.bf16 %v4203, %v4199
    %4220 = vmatprep.subr.bf16.mxu0 %v4205
    %4221 = vmatpush1.bf16.msra.mxu0 %v4204
    %4222 = vmatprep.subr.bf16.mxu0 %v4209
    %4223 = vmatpush1.bf16.msra.mxu0 %v4208
    %4224 = vmatprep.subr.bf16.mxu0 %v4213
    %4225 = vmatpush1.bf16.msra.mxu0 %v4212
    %4226 = vmatprep.subr.bf16.mxu0 %v4217
    %4227 = vmatpush1.bf16.msra.mxu0 %v4216
    %4228 = vmatprep.subr.bf16.mxu0 0
    %4229 = vmatpush1.bf16.msra.mxu0 0
    %4230 = vmatprep.subr.bf16.mxu0 0
    %4231 = vmatpush1.bf16.msra.mxu0 0
    %4232 = vmatprep.subr.bf16.mxu0 0
    %4233 = vmatpush1.bf16.msra.mxu0 0
    %4234 = vmatprep.subr.bf16.mxu0 0
    %4235 = vmatpush1.bf16.msra.mxu0 0
    %4236 = vmatprep.subr.bf16.mxu0 0
    %4237 = vmatpush1.bf16.msra.mxu0 0
    %4238 = vmatprep.subr.bf16.mxu0 0
    %4239 = vmatpush1.bf16.msra.mxu0 0
    %4240 = vmatprep.subr.bf16.mxu0 0
    %4241 = vmatpush1.bf16.msra.mxu0 0
    %4242 = vmatprep.subr.bf16.mxu0 0
    %4243 = vmatpush1.bf16.msra.mxu0 0
    %4244 = vmatprep.subr.bf16.mxu0 0
    %4245 = vmatpush1.bf16.msra.mxu0 0
    %4246 = vmatprep.subr.bf16.mxu0 0
    %4247 = vmatpush1.bf16.msra.mxu0 0
    %4248 = vmatprep.subr.bf16.mxu0 0
    %4249 = vmatpush1.bf16.msra.mxu0 0
    %4250 = vmatprep.subr.bf16.mxu0 0
    %4251 = vmatpush1.bf16.msra.mxu0 0
    %4252 = vmatprep.mubr.bf16.mxu0 0
    %4253 = vmatmul.mubr.bf16.gmra.mrb[0].mxu0 %v1237
    %v4254 = vpop.f32.mrb[0].mxu0
    %v4255 = vadd.f32 %v1208, %v4254
    %v4256 = vpop.f32.mrb[0].mxu0
    %v4257 = vadd.f32 %v1208, %v4256
    %v4258 = vpop.f32.mrb[0].mxu0
    %v4259 = vadd.f32 %v1213, %v4258
    %v4260 = vpop.f32.mrb[0].mxu0
    %v4261 = vadd.f32 %v1213, %v4260
    %4262 = vmatprep.mubr.bf16.mxu0 0
    %4263 = vmatmul.mubr.bf16.gmra.mrb[0].mxu0 %v1240
    %v4264 = vpop.f32.mrb[0].mxu0
    %v4265 = vadd.f32 %v1218, %v4264
    %v4266 = vpop.f32.mrb[0].mxu0
    %v4267 = vadd.f32 %v1218, %v4266
    %v4268 = vpop.f32.mrb[0].mxu0
    %v4269 = vadd.f32 %v1223, %v4268
    %v4270 = vpop.f32.mrb[0].mxu0
    %v4271 = vadd.f32 %v1223, %v4270
    %4272 = vdwg.mxu0
    %4273 = vmatprep.subr.bf16.mxu0 %v4207
    %4274 = vmatpush1.bf16.msra.mxu0 %v4206
    %4275 = vmatprep.subr.bf16.mxu0 %v4211
    %4276 = vmatpush1.bf16.msra.mxu0 %v4210
    %4277 = vmatprep.subr.bf16.mxu0 %v4215
    %4278 = vmatpush1.bf16.msra.mxu0 %v4214
    %4279 = vmatprep.subr.bf16.mxu0 %v4219
    %4280 = vmatpush1.bf16.msra.mxu0 %v4218
    %4281 = vmatprep.subr.bf16.mxu0 0
    %4282 = vmatpush1.bf16.msra.mxu0 0
    %4283 = vmatprep.subr.bf16.mxu0 0
    %4284 = vmatpush1.bf16.msra.mxu0 0
    %4285 = vmatprep.subr.bf16.mxu0 0
    %4286 = vmatpush1.bf16.msra.mxu0 0
    %4287 = vmatprep.subr.bf16.mxu0 0
    %4288 = vmatpush1.bf16.msra.mxu0 0
    %4289 = vmatprep.subr.bf16.mxu0 0
    %4290 = vmatpush1.bf16.msra.mxu0 0
    %4291 = vmatprep.subr.bf16.mxu0 0
    %4292 = vmatpush1.bf16.msra.mxu0 0
    %4293 = vmatprep.subr.bf16.mxu0 0
    %4294 = vmatpush1.bf16.msra.mxu0 0
    %4295 = vmatprep.subr.bf16.mxu0 0
    %4296 = vmatpush1.bf16.msra.mxu0 0
    %4297 = vmatprep.subr.bf16.mxu0 0
    %4298 = vmatpush1.bf16.msra.mxu0 0
    %4299 = vmatprep.subr.bf16.mxu0 0
    %4300 = vmatpush1.bf16.msra.mxu0 0
    %4301 = vmatprep.subr.bf16.mxu0 0
    %4302 = vmatpush1.bf16.msra.mxu0 0
    %4303 = vmatprep.subr.bf16.mxu0 0
    %4304 = vmatpush1.bf16.msra.mxu0 0
    %4305 = vmatprep.mubr.bf16.mxu0 0
    %4306 = vmatmul.mubr.bf16.gmra.mrb[0].mxu0 %v1237
    %v4307 = vpop.f32.mrb[0].mxu0
    %v4308 = vadd.f32 %v1208, %v4307
    %v4309 = vpop.f32.mrb[0].mxu0
    %v4310 = vadd.f32 %v1208, %v4309
    %v4311 = vpop.f32.mrb[0].mxu0
    %v4312 = vadd.f32 %v1213, %v4311
    %v4313 = vpop.f32.mrb[0].mxu0
    %v4314 = vadd.f32 %v1213, %v4313
    %4315 = vmatprep.mubr.bf16.mxu0 0
    %4316 = vmatmul.mubr.bf16.gmra.mrb[0].mxu0 %v1240
    %v4317 = vpop.f32.mrb[0].mxu0
    %v4318 = vadd.f32 %v1218, %v4317
    %v4319 = vpop.f32.mrb[0].mxu0
    %v4320 = vadd.f32 %v1218, %v4319
    %v4321 = vpop.f32.mrb[0].mxu0
    %v4322 = vadd.f32 %v1223, %v4321
    %v4323 = vpop.f32.mrb[0].mxu0
    %v4324 = vadd.f32 %v1223, %v4323
    %4325 = vdwg.mxu0
    %v4326 = vmax.f32 %v4255, 0.0
    %v4327 = vmax.f32 %v4257, 0.0
    %v4328 = vmax.f32 %v4308, 0.0
    %v4329 = vmax.f32 %v4310, 0.0
    %v4330 = vmax.f32 %v4259, 0.0
    %v4331 = vmax.f32 %v4261, 0.0
    %v4332 = vmax.f32 %v4312, 0.0
    %v4333 = vmax.f32 %v4314, 0.0
    %v4334 = vmax.f32 %v4265, 0.0
    %v4335 = vmax.f32 %v4267, 0.0
    %v4336 = vmax.f32 %v4318, 0.0
    %v4337 = vmax.f32 %v4320, 0.0
    %v4338 = vmax.f32 %v4269, 0.0
    %v4339 = vmax.f32 %v4271, 0.0
    %v4340 = vmax.f32 %v4322, 0.0
    %v4341 = vmax.f32 %v4324, 0.0
    %v4342 = vmul.f32 %v4326, %v1367
    %v4343 = vmul.f32 %v4327, %v1367
    %v4344 = vmul.f32 %v4328, %v1367
    %v4345 = vmul.f32 %v4329, %v1367
    %v4346 = vmul.f32 %v4330, %v1372
    %v4347 = vmul.f32 %v4331, %v1372
    %v4348 = vmul.f32 %v4332, %v1372
    %v4349 = vmul.f32 %v4333, %v1372
    %v4350 = vmul.f32 %v4334, %v1377
    %v4351 = vmul.f32 %v4335, %v1377
    %v4352 = vmul.f32 %v4336, %v1377
    %v4353 = vmul.f32 %v4337, %v1377
    %v4354 = vmul.f32 %v4338, %v1382
    %v4355 = vmul.f32 %v4339, %v1382
    %v4356 = vmul.f32 %v4340, %v1382
    %v4357 = vmul.f32 %v4341, %v1382
    %v4358 = vadd.f32 %v4342, %v4346
    %v4359 = vadd.f32 %v4358, %v4350
    %v4360 = vadd.f32 %v4359, %v4354
    %v4361 = vrot.slane %v4360, 4
    %v4362 = vadd.f32 %v4360, %v4361
    %v4363 = vrot.slane %v4362, 2
    %v4364 = vadd.f32 %v4362, %v4363
    %v4365 = vrot.slane %v4364, 1
    %v4366 = vadd.f32 %v4364, %v4365
    %v4367 = vadd.f32 %v4343, %v4347
    %v4368 = vadd.f32 %v4367, %v4351
    %v4369 = vadd.f32 %v4368, %v4355
    %v4370 = vrot.slane %v4369, 4
    %v4371 = vadd.f32 %v4369, %v4370
    %v4372 = vrot.slane %v4371, 2
    %v4373 = vadd.f32 %v4371, %v4372
    %v4374 = vrot.slane %v4373, 1
    %v4375 = vadd.f32 %v4373, %v4374
    %v4376 = vadd.f32 %v4344, %v4348
    %v4377 = vadd.f32 %v4376, %v4352
    %v4378 = vadd.f32 %v4377, %v4356
    %v4379 = vrot.slane %v4378, 4
    %v4380 = vadd.f32 %v4378, %v4379
    %v4381 = vrot.slane %v4380, 2
    %v4382 = vadd.f32 %v4380, %v4381
    %v4383 = vrot.slane %v4382, 1
    %v4384 = vadd.f32 %v4382, %v4383
    %v4385 = vadd.f32 %v4345, %v4349
    %v4386 = vadd.f32 %v4385, %v4353
    %v4387 = vadd.f32 %v4386, %v4357
    %v4388 = vrot.slane %v4387, 4
    %v4389 = vadd.f32 %v4387, %v4388
    %v4390 = vrot.slane %v4389, 2
    %v4391 = vadd.f32 %v4389, %v4390
    %v4392 = vrot.slane %v4391, 1
    %v4393 = vadd.f32 %v4391, %v4392
    %v4394 = vadd.f32 %v4366, %v1444
    %v4395 = vadd.f32 %v4375, %v1444
    %v4396 = vadd.f32 %v4384, %v1444
    %v4397 = vadd.f32 %v4393, %v1444
    %v4398 = vsub.f32 0.0, %v4394
    %v4399 = vsub.f32 0.0, %v4395
    %v4400 = vsub.f32 0.0, %v4396
    %v4401 = vsub.f32 0.0, %v4397
    %v4402 = vmul.f32 %v4398, 1.442695
    %v4403 = vpow.pop %v4402
    %v4404 = vmul.f32 %v4399, 1.442695
    %v4405 = vpow.pop %v4404
    %v4406 = vmul.f32 %v4400, 1.442695
    %v4407 = vpow.pop %v4406
    %v4408 = vmul.f32 %v4401, 1.442695
    %v4409 = vpow.pop %v4408
    %v4410 = vadd.f32 %v4403, 1.0
    %v4411 = vadd.f32 %v4405, 1.0
    %v4412 = vadd.f32 %v4407, 1.0
    %v4413 = vadd.f32 %v4409, 1.0
    %v4414 = vrcp.pop %v4410
    %v4415 = vrcp.pop %v4411
    %v4416 = vrcp.pop %v4412
    %v4417 = vrcp.pop %v4413
    %v4422 = vcombine.low %v4414, %v4415
    %v4423 = vcombine.low %v4416, %v4417
    %v4425 = vunpack.c.l.s4 1966171168
    %v4426 = vunpack.c.0.s8 %v4425
    %v4427 = vlaneseq
    %v4428 = vshrl.u32 %v4427, 7
    %v4429 = vsub.s32 %v4426, %v4428
    %v4430 = vrot.slane %v4422, %v4429
    %v4432 = vunpack.c.l.s4 1966171168
    %v4433 = vunpack.c.0.s8 %v4432
    %v4434 = vlaneseq
    %v4435 = vshrl.u32 %v4434, 7
    %v4436 = vsub.s32 %v4433, %v4435
    %v4437 = vrot.slane %v4423, %v4436
    %v4438 = vcombine.low %v4430, %v4437
    %v4440 = vunpack.c.l.s4 1966171168
    %v4441 = vunpack.c.0.s8 %v4440
    %v4442 = vlaneseq
    %v4443 = vshrl.u32 %v4442, 7
    %v4444 = vsub.s32 %v4441, %v4443
    %v4445 = vrot.slane %v4438, %v4444
    %s4447 = scalar_lea.vmem [#allocation3], 12
    %4448 = vst.msk [vmem:[%s4447] sm:$0xf] %vm1501, %v4445
    // Predicated region
    $region46: #{tpu_custom_call.1} parent=1 // pred_check
      _
    $region47: #{tpu_custom_call.1} parent=1 // pred_check_branch
      %4450 = sbr.rel (0) target = $region49
    $region48: #{tpu_custom_call.1} parent=1 // pred_region
      %s4452 = ssub.s32 256, 256
      %4453 = vsyncadd [#allocation4], %s4452
      %s4454 = sshll.u32 [#allocation3], 4
      %s4455 = int_to_ptr.vmem [resolvable:$true] %s4454
      %4460 = dma.vmem_to_hbm [thread:$0]  %s4455, 256, %s11, [#allocation4], 64, 64, 4
    $region49: #{tpu_custom_call.1} parent=1 // pred_fallthru
      _
    // Predicated region
    $region50: #{tpu_custom_call.1} parent=1 // pred_check
      _
    $region51: #{tpu_custom_call.1} parent=1 // pred_check_branch
      %4462 = sbr.rel (0) target = $region53
    $region52: #{tpu_custom_call.1} parent=1 // pred_region
      %4463 = dma.done [#allocation4], 256
    $region53: #{tpu_custom_call.1} parent=1 // pred_fallthru
      _
    %4464 = vsyncpa [#allocation4], 1

</llo_original>
